<compile_context>
chip_gen: v6e
topology: v6e:2x2x1
jax: 0.10.0
libtpu: 0.0.40
codegen_flags: <defaults>
</compile_context>

<pallas_src>
import functools

import jax
import jax.numpy as jnp
from jax.experimental import pallas as pl
from jax.experimental.pallas import tpu as pltpu


def _round_up(x, m):
    return ((x + m - 1) // m) * m


# ----------------------------- the Pallas kernel -------------------------------------


def _net_kernel(x_ref, w1m_ref, s1_ref, w2m_ref, s2_ref, wl_ref, lb_ref, b12_ref,
                out_ref):
    f32 = jnp.float32
    b1 = b12_ref[0]                     # conv1 bias (SMEM scalar, read once per step)
    b2 = b12_ref[1]                     # conv2 bias

    x = x_ref[...]                      # (TB, HWp) flattened images, lane-padded

    # conv1 (2x2, stride 1, pad 2) + ReLU: one MXU matmul, zero padding folded into w1m.
    a1 = jnp.maximum(jnp.dot(x, w1m_ref[...], preferred_element_type=f32) + b1, 0.0)

    # maxpool1 (2x2): four disjoint quadrant-selection matmuls (MXU) + elementwise max tree.
    g00 = jnp.dot(a1, s1_ref[0], preferred_element_type=f32)
    g01 = jnp.dot(a1, s1_ref[1], preferred_element_type=f32)
    g10 = jnp.dot(a1, s1_ref[2], preferred_element_type=f32)
    g11 = jnp.dot(a1, s1_ref[3], preferred_element_type=f32)
    p1 = jnp.maximum(jnp.maximum(g00, g01), jnp.maximum(g10, g11))    # (TB, NP1p)

    # conv2 (5x5, stride 1, pad 2, "same") + ReLU: one MXU matmul.
    a2 = jnp.maximum(jnp.dot(p1, w2m_ref[...], preferred_element_type=f32) + b2, 0.0)

    # maxpool2 (2x2): same scheme, output dim already lane-padded to 128.
    h00 = jnp.dot(a2, s2_ref[0], preferred_element_type=f32)
    h01 = jnp.dot(a2, s2_ref[1], preferred_element_type=f32)
    h10 = jnp.dot(a2, s2_ref[2], preferred_element_type=f32)
    h11 = jnp.dot(a2, s2_ref[3], preferred_element_type=f32)
    p2 = jnp.maximum(jnp.maximum(h00, h01), jnp.maximum(h10, h11))    # (TB, 128)

    # Linear(44, 2), lane-padded to 128: one MXU dot writes the lane-dense (TB, 128) block.
    out_ref[...] = jnp.dot(p2, wl_ref[...], preferred_element_type=f32) + lb_ref[...]


# ----------------------------- hoisted constant builders ------------------------------


def _conv_matrix(w, Hin, Win, Hout, Wout, K, pad):
    """Dense (Hin*Win, Hout*Wout) matrix for a stride-1 KxK conv with zero padding `pad`
    folded in: out.flat = in.flat @ M (+ bias)."""
    w = w.reshape(K, K).astype(jnp.float32)
    n_in = Hin * Win
    rows = jnp.arange(n_in)[:, None]                       # (n_in, 1)
    oi = jnp.arange(Hout)[:, None]                         # (Hout, 1)
    oj = jnp.arange(Wout)[None, :]                         # (1, Wout)
    M = jnp.zeros((n_in, Hout * Wout), jnp.float32)
    for ka in range(K):
        for kb in range(K):
            hi = oi + ka - pad
            wi = oj + kb - pad
            valid = (hi >= 0) & (hi < Hin) & (wi >= 0) & (wi < Win)
            src = jnp.where(valid, hi * Win + wi, -1).reshape(-1)    # (n_out,)
            M = M + w[ka, kb] * (rows == src[None, :]).astype(jnp.float32)
    return M


def _pool_selectors(Hin, Win):
    """Four (Hin*Win, (Hin//2)*(Win//2)) 0/1 matrices; selector k picks pool-window
    element (da, db) = (k // 2, k % 2) of every non-overlapping 2x2 window."""
    Ho, Wo = Hin // 2, Win // 2
    rows = jnp.arange(Hin * Win)[:, None]
    oi = jnp.arange(Ho)[:, None]
    oj = jnp.arange(Wo)[None, :]
    mats = []
    for da in range(2):
        for db in range(2):
            src = ((2 * oi + da) * Win + (2 * oj + db)).reshape(-1)
            mats.append((rows == src[None, :]).astype(jnp.float32))
    return jnp.stack(mats)                                  # (4, Hin*Win, Ho*Wo)


# ----------------------------------- wrapper ------------------------------------------


@functools.partial(jax.jit, static_argnames=("batch_tile",))
def net_forward(x, w1, b1, w2, b2, wlin, blin, *, batch_tile=128):
    """x: (B, H, W) or (H, W) float. Each image follows the PyTorch forward
    (unsqueeze -> NCHW with N=C=1). Returns (B, 2) logits."""
    x = x.astype(jnp.float32)
    if x.ndim == 2:
        x = x[None]
    B, H, W = x.shape
    H1, W1 = H + 3, W + 3                   # conv1 output (k=2, pad=2, stride 1)
    assert H1 % 4 == 0 and W1 % 4 == 0, "pool stages must divide evenly"
    Hp1, Wp1 = H1 // 2, W1 // 2             # pool1 output (== conv2 "same" output)
    Hp2, Wp2 = Hp1 // 2, Wp1 // 2           # pool2 output
    NFLAT = Hp2 * Wp2
    assert NFLAT == 44, "flattened features must equal 44 for Linear(44, 2)"

    HW = H * W
    N1 = H1 * W1
    NP1 = Hp1 * Wp1
    OUT = 128
    HWp = _round_up(HW, 128)
    N1p = _round_up(N1, 128)
    NP1p = _round_up(NP1, 128)

    # Batch tile: multiple of 8 sublanes, no bigger than the (rounded) batch.
    TB = max(8, min(_round_up(batch_tile, 8), _round_up(B, 8)))
    Bp = _round_up(B, TB)
    nb = Bp // TB

    # Single pad for batch rows + feature lanes (no separate spatial-pad pre-pass).
    xf = jnp.pad(x.reshape(B, HW), ((0, Bp - B), (0, HWp - HW)))

    # Hoisted constants (tiny XLA ops, built once per call; all padding regions are zero
    # so padded lanes / padded batch rows never influence the real outputs).
    w1m = jnp.pad(_conv_matrix(w1, H, W, H1, W1, 2, 2),
                  ((0, HWp - HW), (0, N1p - N1)))
    s1 = jnp.pad(_pool_selectors(H1, W1),
                 ((0, 0), (0, N1p - N1), (0, NP1p - NP1)))
    w2m = jnp.pad(_conv_matrix(w2, Hp1, Wp1, Hp1, Wp1, 5, 2),
                  ((0, NP1p - NP1), (0, NP1p - NP1)))
    s2 = jnp.pad(_pool_selectors(Hp1, Wp1),
                 ((0, 0), (0, NP1p - NP1), (0, OUT - NFLAT)))
    wl = jnp.zeros((OUT, OUT), jnp.float32).at[:NFLAT, :2].set(
        wlin.astype(jnp.float32).T)
    lb = jnp.zeros((1, OUT), jnp.float32).at[0, :2].set(blin.astype(jnp.float32))
    b12 = jnp.concatenate([jnp.ravel(b1), jnp.ravel(b2)]).astype(jnp.float32)   # (2,)

    flops = 2 * Bp * (HWp * N1p + 4 * N1p * NP1p + NP1p * NP1p + 4 * NP1p * OUT
                      + OUT * OUT)
    const_bytes = 4 * (w1m.size + s1.size + w2m.size + s2.size + wl.size + lb.size + 2)
    cost = pl.CostEstimate(flops=int(flops), transcendentals=0,
                           bytes_accessed=int(4 * Bp * (HWp + OUT) + const_bytes))

    out = pl.pallas_call(
        _net_kernel,
        out_shape=jax.ShapeDtypeStruct((Bp, OUT), jnp.float32),
        grid=(nb,),
        in_specs=[
            pl.BlockSpec((TB, HWp), lambda b: (b, 0)),                 # flattened images
            pl.BlockSpec(memory_space=pltpu.MemorySpace.VMEM),         # conv1 matrix
            pl.BlockSpec(memory_space=pltpu.MemorySpace.VMEM),         # pool1 selectors
            pl.BlockSpec(memory_space=pltpu.MemorySpace.VMEM),         # conv2 matrix
            pl.BlockSpec(memory_space=pltpu.MemorySpace.VMEM),         # pool2 selectors
            pl.BlockSpec(memory_space=pltpu.MemorySpace.VMEM),         # linear weights (lanes 0/1)
            pl.BlockSpec(memory_space=pltpu.MemorySpace.VMEM),         # linear bias row (1,128)
            pl.BlockSpec(memory_space=pltpu.MemorySpace.SMEM),         # conv biases (2,)
        ],
        out_specs=pl.BlockSpec((TB, OUT), lambda b: (b, 0)),
        compiler_params=pltpu.CompilerParams(dimension_semantics=("parallel",)),
        cost_estimate=cost,
    )(xf, w1m, s1, w2m, s2, wl, lb, b12)

    return out[:B, :2]


# ----------------------------- pure-JAX reference ------------------------------------


def ref_forward(xb, w1, b1, w2, b2, wlin, blin):
    def one(x2d):
        xp = jnp.pad(x2d, 2)
        H1, W1 = x2d.shape[0] + 3, x2d.shape[1] + 3
        a1 = jnp.zeros((H1, W1), jnp.float32)
        for ka in range(2):
            for kb in range(2):
                a1 = a1 + w1[ka, kb] * xp[ka:ka + H1, kb:kb + W1]
        a1 = jnp.maximum(a1 + b1[0], 0.0)
        p1 = a1.reshape(H1 // 2, 2, W1 // 2, 2).max(axis=(1, 3))
        p1p = jnp.pad(p1, 2)
        H2, W2 = p1.shape
        a2 = jnp.zeros((H2, W2), jnp.float32)
        for ka in range(5):
            for kb in range(5):
                a2 = a2 + w2[ka, kb] * p1p[ka:ka + H2, kb:kb + W2]
        a2 = jnp.maximum(a2 + b2[0], 0.0)
        p2 = a2.reshape(H2 // 2, 2, W2 // 2, 2).max(axis=(1, 3))
        return p2.reshape(-1) @ wlin.T + blin

    return jax.vmap(one)(xb.astype(jnp.float32))


# --------------------------------------- main ----------------------------------------

if __name__ == "__main__":
    # Batch of images, each (H=13, W=41): after conv/pool stages -> (4, 11) -> 44 features.
    B, H, W = 16, 13, 41
    key = jax.random.PRNGKey(0)
    kx, kp = jax.random.split(key)
    x = jax.random.normal(kx, (B, H, W), dtype=jnp.float32)

    k1, k2, k3, k4, k5, k6 = jax.random.split(kp, 6)
    w1 = jax.random.normal(k1, (2, 2), jnp.float32) * 0.5      # conv1.weight (1,1,2,2)
    b1 = jax.random.normal(k2, (1,), jnp.float32) * 0.1        # conv1.bias
    w2 = jax.random.normal(k3, (5, 5), jnp.float32) * 0.2      # conv2.weight (1,1,5,5)
    b2 = jax.random.normal(k4, (1,), jnp.float32) * 0.1        # conv2.bias
    wlin = jax.random.normal(k5, (2, 44), jnp.float32) * 0.1   # out.weight
    blin = jax.random.normal(k6, (2,), jnp.float32) * 0.1      # out.bias

    out = jax.block_until_ready(net_forward(x, w1, b1, w2, b2, wlin, blin))
    ref = ref_forward(x, w1, b1, w2, b2, wlin, blin)

    assert out.shape == (B, 2), out.shape
    assert jnp.allclose(out, ref, atol=1e-3, rtol=1e-3), (out, ref)

    print("KERNEL_OK")
</pallas_src>

<mosaic_0001>
module attributes {stable_mosaic.version = 11 : i64} {
  func.func @_net_kernel(%arg0: i32, %arg1: memref<16x640xf32, #tpu.memory_space<vmem>>, %arg2: memref<640x768xf32, #tpu.memory_space<vmem>>, %arg3: memref<4x768x256xf32, #tpu.memory_space<vmem>>, %arg4: memref<256x256xf32, #tpu.memory_space<vmem>>, %arg5: memref<4x256x128xf32, #tpu.memory_space<vmem>>, %arg6: memref<128x128xf32, #tpu.memory_space<vmem>>, %arg7: memref<1x128xf32, #tpu.memory_space<vmem>>, %arg8: memref<2xf32, #tpu.memory_space<smem>>, %arg9: memref<16x128xf32, #tpu.memory_space<vmem>>) attributes {dimension_semantics = [#tpu.dimension_semantics<parallel>], iteration_bounds = array<i64: 1>, scalar_prefetch = 0 : i64, scratch_operands = 0 : i64, tpu.core_type = #tpu.core_type<tc>, window_params = [{transform_indices = @transform_0, window_bounds = array<i64: 16, 640>}, {pipeline_mode = #tpu.pipeline_mode<synchronous>, transform_indices = @transform_1, window_bounds = array<i64: 640, 768>}, {pipeline_mode = #tpu.pipeline_mode<synchronous>, transform_indices = @transform_2, window_bounds = array<i64: 4, 768, 256>}, {pipeline_mode = #tpu.pipeline_mode<synchronous>, transform_indices = @transform_3, window_bounds = array<i64: 256, 256>}, {pipeline_mode = #tpu.pipeline_mode<synchronous>, transform_indices = @transform_4, window_bounds = array<i64: 4, 256, 128>}, {pipeline_mode = #tpu.pipeline_mode<synchronous>, transform_indices = @transform_5, window_bounds = array<i64: 128, 128>}, {pipeline_mode = #tpu.pipeline_mode<synchronous>, transform_indices = @transform_6, window_bounds = array<i64: 1, 128>}, {transform_indices = @transform_7, window_bounds = array<i64: 2>}, {transform_indices = @transform_8, window_bounds = array<i64: 16, 128>}]} {
    %c0 = arith.constant 0 : index
    %0 = memref.load %arg8[%c0] : memref<2xf32, #tpu.memory_space<smem>>
    %c1 = arith.constant 1 : index
    %1 = memref.load %arg8[%c1] : memref<2xf32, #tpu.memory_space<smem>>
    %c0_0 = arith.constant 0 : index
    %c0_1 = arith.constant 0 : index
    %2 = vector.load %arg1[%c0_0, %c0_1] : memref<16x640xf32, #tpu.memory_space<vmem>>, vector<16x640xf32>
    %c0_2 = arith.constant 0 : index
    %c0_3 = arith.constant 0 : index
    %3 = vector.load %arg2[%c0_2, %c0_3] : memref<640x768xf32, #tpu.memory_space<vmem>>, vector<640x768xf32>
    %cst = arith.constant dense<0.000000e+00> : vector<16x768xf32>
    %4 = tpu.matmul %2, %3, %cst {dimension_numbers = #tpu.dot_dimension_numbers<[1], [0], [0], [1], [0, 0, 1, 1], [], []>} : vector<16x640xf32>, vector<640x768xf32>, vector<16x768xf32> -> vector<16x768xf32>
    %5 = vector.broadcast %0 : f32 to vector<16x768xf32>
    %6 = arith.addf %4, %5 : vector<16x768xf32>
    %cst_4 = arith.constant 0.000000e+00 : f32
    %7 = vector.broadcast %cst_4 : f32 to vector<16x768xf32>
    %8 = arith.maximumf %6, %7 : vector<16x768xf32>
    %c0_5 = arith.constant 0 : index
    %c0_6 = arith.constant 0 : index
    %c0_7 = arith.constant 0 : index
    %9 = vector.load %arg3[%c0_5, %c0_6, %c0_7] : memref<4x768x256xf32, #tpu.memory_space<vmem>>, vector<1x768x256xf32>
    %10 = vector.shape_cast %9 : vector<1x768x256xf32> to vector<768x256xf32>
    %cst_8 = arith.constant dense<0.000000e+00> : vector<16x256xf32>
    %11 = tpu.matmul %8, %10, %cst_8 {dimension_numbers = #tpu.dot_dimension_numbers<[1], [0], [0], [1], [0, 0, 1, 1], [], []>} : vector<16x768xf32>, vector<768x256xf32>, vector<16x256xf32> -> vector<16x256xf32>
    %c1_9 = arith.constant 1 : index
    %c0_10 = arith.constant 0 : index
    %c0_11 = arith.constant 0 : index
    %12 = vector.load %arg3[%c1_9, %c0_10, %c0_11] : memref<4x768x256xf32, #tpu.memory_space<vmem>>, vector<1x768x256xf32>
    %13 = vector.shape_cast %12 : vector<1x768x256xf32> to vector<768x256xf32>
    %cst_12 = arith.constant dense<0.000000e+00> : vector<16x256xf32>
    %14 = tpu.matmul %8, %13, %cst_12 {dimension_numbers = #tpu.dot_dimension_numbers<[1], [0], [0], [1], [0, 0, 1, 1], [], []>} : vector<16x768xf32>, vector<768x256xf32>, vector<16x256xf32> -> vector<16x256xf32>
    %c2 = arith.constant 2 : index
    %c0_13 = arith.constant 0 : index
    %c0_14 = arith.constant 0 : index
    %15 = vector.load %arg3[%c2, %c0_13, %c0_14] : memref<4x768x256xf32, #tpu.memory_space<vmem>>, vector<1x768x256xf32>
    %16 = vector.shape_cast %15 : vector<1x768x256xf32> to vector<768x256xf32>
    %cst_15 = arith.constant dense<0.000000e+00> : vector<16x256xf32>
    %17 = tpu.matmul %8, %16, %cst_15 {dimension_numbers = #tpu.dot_dimension_numbers<[1], [0], [0], [1], [0, 0, 1, 1], [], []>} : vector<16x768xf32>, vector<768x256xf32>, vector<16x256xf32> -> vector<16x256xf32>
    %c3 = arith.constant 3 : index
    %c0_16 = arith.constant 0 : index
    %c0_17 = arith.constant 0 : index
    %18 = vector.load %arg3[%c3, %c0_16, %c0_17] : memref<4x768x256xf32, #tpu.memory_space<vmem>>, vector<1x768x256xf32>
    %19 = vector.shape_cast %18 : vector<1x768x256xf32> to vector<768x256xf32>
    %cst_18 = arith.constant dense<0.000000e+00> : vector<16x256xf32>
    %20 = tpu.matmul %8, %19, %cst_18 {dimension_numbers = #tpu.dot_dimension_numbers<[1], [0], [0], [1], [0, 0, 1, 1], [], []>} : vector<16x768xf32>, vector<768x256xf32>, vector<16x256xf32> -> vector<16x256xf32>
    %21 = arith.maximumf %11, %14 : vector<16x256xf32>
    %22 = arith.maximumf %17, %20 : vector<16x256xf32>
    %23 = arith.maximumf %21, %22 : vector<16x256xf32>
    %c0_19 = arith.constant 0 : index
    %c0_20 = arith.constant 0 : index
    %24 = vector.load %arg4[%c0_19, %c0_20] : memref<256x256xf32, #tpu.memory_space<vmem>>, vector<256x256xf32>
    %cst_21 = arith.constant dense<0.000000e+00> : vector<16x256xf32>
    %25 = tpu.matmul %23, %24, %cst_21 {dimension_numbers = #tpu.dot_dimension_numbers<[1], [0], [0], [1], [0, 0, 1, 1], [], []>} : vector<16x256xf32>, vector<256x256xf32>, vector<16x256xf32> -> vector<16x256xf32>
    %26 = vector.broadcast %1 : f32 to vector<16x256xf32>
    %27 = arith.addf %25, %26 : vector<16x256xf32>
    %cst_22 = arith.constant 0.000000e+00 : f32
    %28 = vector.broadcast %cst_22 : f32 to vector<16x256xf32>
    %29 = arith.maximumf %27, %28 : vector<16x256xf32>
    %c0_23 = arith.constant 0 : index
    %c0_24 = arith.constant 0 : index
    %c0_25 = arith.constant 0 : index
    %30 = vector.load %arg5[%c0_23, %c0_24, %c0_25] : memref<4x256x128xf32, #tpu.memory_space<vmem>>, vector<1x256x128xf32>
    %31 = vector.shape_cast %30 : vector<1x256x128xf32> to vector<256x128xf32>
    %cst_26 = arith.constant dense<0.000000e+00> : vector<16x128xf32>
    %32 = tpu.matmul %29, %31, %cst_26 {dimension_numbers = #tpu.dot_dimension_numbers<[1], [0], [0], [1], [0, 0, 1, 1], [], []>} : vector<16x256xf32>, vector<256x128xf32>, vector<16x128xf32> -> vector<16x128xf32>
    %c1_27 = arith.constant 1 : index
    %c0_28 = arith.constant 0 : index
    %c0_29 = arith.constant 0 : index
    %33 = vector.load %arg5[%c1_27, %c0_28, %c0_29] : memref<4x256x128xf32, #tpu.memory_space<vmem>>, vector<1x256x128xf32>
    %34 = vector.shape_cast %33 : vector<1x256x128xf32> to vector<256x128xf32>
    %cst_30 = arith.constant dense<0.000000e+00> : vector<16x128xf32>
    %35 = tpu.matmul %29, %34, %cst_30 {dimension_numbers = #tpu.dot_dimension_numbers<[1], [0], [0], [1], [0, 0, 1, 1], [], []>} : vector<16x256xf32>, vector<256x128xf32>, vector<16x128xf32> -> vector<16x128xf32>
    %c2_31 = arith.constant 2 : index
    %c0_32 = arith.constant 0 : index
    %c0_33 = arith.constant 0 : index
    %36 = vector.load %arg5[%c2_31, %c0_32, %c0_33] : memref<4x256x128xf32, #tpu.memory_space<vmem>>, vector<1x256x128xf32>
    %37 = vector.shape_cast %36 : vector<1x256x128xf32> to vector<256x128xf32>
    %cst_34 = arith.constant dense<0.000000e+00> : vector<16x128xf32>
    %38 = tpu.matmul %29, %37, %cst_34 {dimension_numbers = #tpu.dot_dimension_numbers<[1], [0], [0], [1], [0, 0, 1, 1], [], []>} : vector<16x256xf32>, vector<256x128xf32>, vector<16x128xf32> -> vector<16x128xf32>
    %c3_35 = arith.constant 3 : index
    %c0_36 = arith.constant 0 : index
    %c0_37 = arith.constant 0 : index
    %39 = vector.load %arg5[%c3_35, %c0_36, %c0_37] : memref<4x256x128xf32, #tpu.memory_space<vmem>>, vector<1x256x128xf32>
    %40 = vector.shape_cast %39 : vector<1x256x128xf32> to vector<256x128xf32>
    %cst_38 = arith.constant dense<0.000000e+00> : vector<16x128xf32>
    %41 = tpu.matmul %29, %40, %cst_38 {dimension_numbers = #tpu.dot_dimension_numbers<[1], [0], [0], [1], [0, 0, 1, 1], [], []>} : vector<16x256xf32>, vector<256x128xf32>, vector<16x128xf32> -> vector<16x128xf32>
    %42 = arith.maximumf %32, %35 : vector<16x128xf32>
    %43 = arith.maximumf %38, %41 : vector<16x128xf32>
    %44 = arith.maximumf %42, %43 : vector<16x128xf32>
    %c0_39 = arith.constant 0 : index
    %c0_40 = arith.constant 0 : index
    %45 = vector.load %arg6[%c0_39, %c0_40] : memref<128x128xf32, #tpu.memory_space<vmem>>, vector<128x128xf32>
    %cst_41 = arith.constant dense<0.000000e+00> : vector<16x128xf32>
    %46 = tpu.matmul %44, %45, %cst_41 {dimension_numbers = #tpu.dot_dimension_numbers<[1], [0], [0], [1], [0, 0, 1, 1], [], []>} : vector<16x128xf32>, vector<128x128xf32>, vector<16x128xf32> -> vector<16x128xf32>
    %c0_42 = arith.constant 0 : index
    %c0_43 = arith.constant 0 : index
    %47 = vector.load %arg7[%c0_42, %c0_43] : memref<1x128xf32, #tpu.memory_space<vmem>>, vector<1x128xf32>
    %48 = vector.broadcast %47 : vector<1x128xf32> to vector<16x128xf32>
    %49 = arith.addf %46, %48 : vector<16x128xf32>
    %c0_44 = arith.constant 0 : index
    %c0_45 = arith.constant 0 : index
    %50 = vector.load %arg9[%c0_44, %c0_45] : memref<16x128xf32, #tpu.memory_space<vmem>>, vector<16x128xf32>
    tpu.vector_store %arg9[%c0_44, %c0_45], %49 {strides = array<i32>} : memref<16x128xf32, #tpu.memory_space<vmem>>, vector<16x128xf32>,
    return
  }
  func.func @transform_0(%arg0: i32) -> (i32, i32) {
    %c0_i32 = arith.constant 0 : i32
    %c0_i32_0 = arith.constant 0 : i32
    return %arg0, %c0_i32 : i32, i32
  }
  func.func @transform_1(%arg0: i32) -> (i32, i32) {
    %c0_i32 = arith.constant 0 : i32
    %c0_i32_0 = arith.constant 0 : i32
    %c0_i32_1 = arith.constant 0 : i32
    return %c0_i32, %c0_i32_0 : i32, i32
  }
  func.func @transform_2(%arg0: i32) -> (i32, i32, i32) {
    %c0_i32 = arith.constant 0 : i32
    %c0_i32_0 = arith.constant 0 : i32
    %c0_i32_1 = arith.constant 0 : i32
    %c0_i32_2 = arith.constant 0 : i32
    return %c0_i32, %c0_i32_0, %c0_i32_1 : i32, i32, i32
  }
  func.func @transform_3(%arg0: i32) -> (i32, i32) {
    %c0_i32 = arith.constant 0 : i32
    %c0_i32_0 = arith.constant 0 : i32
    %c0_i32_1 = arith.constant 0 : i32
    return %c0_i32, %c0_i32_0 : i32, i32
  }
  func.func @transform_4(%arg0: i32) -> (i32, i32, i32) {
    %c0_i32 = arith.constant 0 : i32
    %c0_i32_0 = arith.constant 0 : i32
    %c0_i32_1 = arith.constant 0 : i32
    %c0_i32_2 = arith.constant 0 : i32
    return %c0_i32, %c0_i32_0, %c0_i32_1 : i32, i32, i32
  }
  func.func @transform_5(%arg0: i32) -> (i32, i32) {
    %c0_i32 = arith.constant 0 : i32
    %c0_i32_0 = arith.constant 0 : i32
    %c0_i32_1 = arith.constant 0 : i32
    return %c0_i32, %c0_i32_0 : i32, i32
  }
  func.func @transform_6(%arg0: i32) -> (i32, i32) {
    %c0_i32 = arith.constant 0 : i32
    %c0_i32_0 = arith.constant 0 : i32
    %c0_i32_1 = arith.constant 0 : i32
    return %c0_i32, %c0_i32_0 : i32, i32
  }
  func.func @transform_7(%arg0: i32) -> i32 {
    %c0_i32 = arith.constant 0 : i32
    %c0_i32_0 = arith.constant 0 : i32
    return %c0_i32 : i32
  }
  func.func @transform_8(%arg0: i32) -> (i32, i32) {
    %c0_i32 = arith.constant 0 : i32
    %c0_i32_0 = arith.constant 0 : i32
    return %arg0, %c0_i32 : i32, i32
  }
}

</mosaic_0001>

<llo_original>
// kernel: net_forward.1
$region0: #{net_forward.1}
  #allocation0 [shape = 'u32[]', space=smem, size = 0x4, offset = 0x4, fixed_abs, tag = 'smem constant byte address 0x4 - core index']
  #allocation1 [shape = 'u32[144,128]{1,0:T(1,128)}', space=vmem, size = 0x12000, scoped, tag = 'internal scratch']
  %s0 = inlined_call_operand.vmem [shape: f32[16,640], index: 0, kind: input, shape index: {}]
  %s1 = inlined_call_operand.vmem [shape: f32[640,768], index: 1, kind: input, shape index: {}]
  %s2 = inlined_call_operand.vmem [shape: f32[4,768,256], index: 2, kind: input, shape index: {}]
  %s3 = inlined_call_operand.vmem [shape: f32[256,256], index: 3, kind: input, shape index: {}]
  %s4 = inlined_call_operand.vmem [shape: f32[4,256,128], index: 4, kind: input, shape index: {}]
  %s5 = inlined_call_operand.vmem [shape: f32[128,128], index: 5, kind: input, shape index: {}]
  %s6 = inlined_call_operand.vmem [shape: f32[1,128], index: 6, kind: input, shape index: {}]
  %s7 = inlined_call_operand.vmem [shape: f32[2], index: 7, kind: input, shape index: {}]
  %s8 = inlined_call_operand.vmem [shape: f32[16,128], index: 8, kind: output, shape index: {}]
  %s9 = sld [smem:[#allocation0]]
  $region46: #{net_forward.1} parent=0
    _
  %s11 = ssub.s32 1, %s9
  %s12 = scalar_select 0, %s11, %s9
  $region1: #{net_forward.1} parent=0
    #allocation2 [shape = 'u8[512]{0}', space=smem, size = 0x200, scoped, tag = 'input window, operand 7, single buffered']
    #allocation3 [shape = 's32[1]{0}', space=sflag, size = 0x4, scoped, tag = 'scoped memory for net_forward.1']
    %13 = vsyncpa [#allocation3], 0
    // Predicated region
    $region2: #{net_forward.1} parent=1 // pred_check
      _
    $region3: #{net_forward.1} parent=1 // pred_check_branch
      %15 = sbr.rel (0) target = $region5
    $region4: #{net_forward.1} parent=1 // pred_region
      _
    $region5: #{net_forward.1} parent=1 // pred_fallthru
      _
    // Predicated region
    $region6: #{net_forward.1} parent=1 // pred_check
      _
    $region7: #{net_forward.1} parent=1 // pred_check_branch
      %17 = sbr.rel (0) target = $region9
    $region8: #{net_forward.1} parent=1 // pred_region
      _
    $region9: #{net_forward.1} parent=1 // pred_fallthru
      _
    // Predicated region
    $region10: #{net_forward.1} parent=1 // pred_check
      _
    $region11: #{net_forward.1} parent=1 // pred_check_branch
      %19 = sbr.rel (0) target = $region13
    $region12: #{net_forward.1} parent=1 // pred_region
      _
    $region13: #{net_forward.1} parent=1 // pred_fallthru
      _
    // Predicated region
    $region14: #{net_forward.1} parent=1 // pred_check
      _
    $region15: #{net_forward.1} parent=1 // pred_check_branch
      %21 = sbr.rel (0) target = $region17
    $region16: #{net_forward.1} parent=1 // pred_region
      _
    $region17: #{net_forward.1} parent=1 // pred_fallthru
      _
    // Predicated region
    $region18: #{net_forward.1} parent=1 // pred_check
      _
    $region19: #{net_forward.1} parent=1 // pred_check_branch
      %23 = sbr.rel (0) target = $region21
    $region20: #{net_forward.1} parent=1 // pred_region
      _
    $region21: #{net_forward.1} parent=1 // pred_fallthru
      _
    // Predicated region
    $region22: #{net_forward.1} parent=1 // pred_check
      _
    $region23: #{net_forward.1} parent=1 // pred_check_branch
      %25 = sbr.rel (0) target = $region25
    $region24: #{net_forward.1} parent=1 // pred_region
      _
    $region25: #{net_forward.1} parent=1 // pred_fallthru
      _
    // Predicated region
    $region26: #{net_forward.1} parent=1 // pred_check
      _
    $region27: #{net_forward.1} parent=1 // pred_check_branch
      %27 = sbr.rel (0) target = $region29
    $region28: #{net_forward.1} parent=1 // pred_region
      _
    $region29: #{net_forward.1} parent=1 // pred_fallthru
      _
    // Predicated region
    $region30: #{net_forward.1} parent=1 // pred_check
      _
    $region31: #{net_forward.1} parent=1 // pred_check_branch
      %29 = sbr.rel (0) target = $region33
    $region32: #{net_forward.1} parent=1 // pred_region
      %s31 = ssub.s32 16, 16
      %32 = vsyncadd [#allocation3], %s31
      %s34 = sshll.u32 %s7, 4
      %s35 = int_to_ptr.vmem [resolvable:$true] %s34
      %37 = dma.vmem_to_smem %s35, 16, [#allocation2], [#allocation3]
    $region33: #{net_forward.1} parent=1 // pred_fallthru
      _
    // Predicated region
    $region34: #{net_forward.1} parent=1 // pred_check
      _
    $region35: #{net_forward.1} parent=1 // pred_check_branch
      %39 = sbr.rel (0) target = $region37
    $region36: #{net_forward.1} parent=1 // pred_region
      %40 = dma.done [#allocation3], 16
    $region37: #{net_forward.1} parent=1 // pred_fallthru
      _
    %41 = sfence
    %s42 = sld [smem:[#allocation2]]
    %s43 = sld [smem:[#allocation2 + $0x1]]
    %v44 = vld [vmem:[%s0] sm:$0xff]
    %v45 = vld [vmem:[%s0 + $0x8] sm:$0xff]
    %v46 = vld [vmem:[%s0 + $0x10] sm:$0xff]
    %v47 = vld [vmem:[%s0 + $0x18] sm:$0xff]
    %v48 = vld [vmem:[%s0 + $0x20] sm:$0xff]
    %v49 = vld [vmem:[%s0 + $0x28] sm:$0xff]
    %v50 = vld [vmem:[%s0 + $0x30] sm:$0xff]
    %v51 = vld [vmem:[%s0 + $0x38] sm:$0xff]
    %v52 = vld [vmem:[%s0 + $0x40] sm:$0xff]
    %v53 = vld [vmem:[%s0 + $0x48] sm:$0xff]
    %v54 = vld [vmem:[%s1] sm:$0xff]
    %v55 = vld [vmem:[%s1 + $0x8] sm:$0xff]
    %v56 = vld [vmem:[%s1 + $0x10] sm:$0xff]
    %v57 = vld [vmem:[%s1 + $0x18] sm:$0xff]
    %v58 = vld [vmem:[%s1 + $0x20] sm:$0xff]
    %v59 = vld [vmem:[%s1 + $0x28] sm:$0xff]
    %v60 = vld [vmem:[%s1 + $0x30] sm:$0xff]
    %v61 = vld [vmem:[%s1 + $0x38] sm:$0xff]
    %v62 = vld [vmem:[%s1 + $0x40] sm:$0xff]
    %v63 = vld [vmem:[%s1 + $0x48] sm:$0xff]
    %v64 = vld [vmem:[%s1 + $0x50] sm:$0xff]
    %v65 = vld [vmem:[%s1 + $0x58] sm:$0xff]
    %v66 = vld [vmem:[%s1 + $0x60] sm:$0xff]
    %v67 = vld [vmem:[%s1 + $0x68] sm:$0xff]
    %v68 = vld [vmem:[%s1 + $0x70] sm:$0xff]
    %v69 = vld [vmem:[%s1 + $0x78] sm:$0xff]
    %v70 = vld [vmem:[%s1 + $0x80] sm:$0xff]
    %v71 = vld [vmem:[%s1 + $0x88] sm:$0xff]
    %v72 = vld [vmem:[%s1 + $0x90] sm:$0xff]
    %v73 = vld [vmem:[%s1 + $0x98] sm:$0xff]
    %v74 = vld [vmem:[%s1 + $0xa0] sm:$0xff]
    %v75 = vld [vmem:[%s1 + $0xa8] sm:$0xff]
    %v76 = vld [vmem:[%s1 + $0xb0] sm:$0xff]
    %v77 = vld [vmem:[%s1 + $0xb8] sm:$0xff]
    %v78 = vld [vmem:[%s1 + $0xc0] sm:$0xff]
    %v79 = vld [vmem:[%s1 + $0xc8] sm:$0xff]
    %v80 = vld [vmem:[%s1 + $0xd0] sm:$0xff]
    %v81 = vld [vmem:[%s1 + $0xd8] sm:$0xff]
    %v82 = vld [vmem:[%s1 + $0xe0] sm:$0xff]
    %v83 = vld [vmem:[%s1 + $0xe8] sm:$0xff]
    %v84 = vld [vmem:[%s1 + $0xf0] sm:$0xff]
    %v85 = vld [vmem:[%s1 + $0xf8] sm:$0xff]
    %v86 = vld [vmem:[%s1 + $0x100] sm:$0xff]
    %v87 = vld [vmem:[%s1 + $0x108] sm:$0xff]
    %v88 = vld [vmem:[%s1 + $0x110] sm:$0xff]
    %v89 = vld [vmem:[%s1 + $0x118] sm:$0xff]
    %v90 = vld [vmem:[%s1 + $0x120] sm:$0xff]
    %v91 = vld [vmem:[%s1 + $0x128] sm:$0xff]
    %v92 = vld [vmem:[%s1 + $0x130] sm:$0xff]
    %v93 = vld [vmem:[%s1 + $0x138] sm:$0xff]
    %v94 = vld [vmem:[%s1 + $0x140] sm:$0xff]
    %v95 = vld [vmem:[%s1 + $0x148] sm:$0xff]
    %v96 = vld [vmem:[%s1 + $0x150] sm:$0xff]
    %v97 = vld [vmem:[%s1 + $0x158] sm:$0xff]
    %v98 = vld [vmem:[%s1 + $0x160] sm:$0xff]
    %v99 = vld [vmem:[%s1 + $0x168] sm:$0xff]
    %v100 = vld [vmem:[%s1 + $0x170] sm:$0xff]
    %v101 = vld [vmem:[%s1 + $0x178] sm:$0xff]
    %v102 = vld [vmem:[%s1 + $0x180] sm:$0xff]
    %v103 = vld [vmem:[%s1 + $0x188] sm:$0xff]
    %v104 = vld [vmem:[%s1 + $0x190] sm:$0xff]
    %v105 = vld [vmem:[%s1 + $0x198] sm:$0xff]
    %v106 = vld [vmem:[%s1 + $0x1a0] sm:$0xff]
    %v107 = vld [vmem:[%s1 + $0x1a8] sm:$0xff]
    %v108 = vld [vmem:[%s1 + $0x1b0] sm:$0xff]
    %v109 = vld [vmem:[%s1 + $0x1b8] sm:$0xff]
    %v110 = vld [vmem:[%s1 + $0x1c0] sm:$0xff]
    %v111 = vld [vmem:[%s1 + $0x1c8] sm:$0xff]
    %v112 = vld [vmem:[%s1 + $0x1d0] sm:$0xff]
    %v113 = vld [vmem:[%s1 + $0x1d8] sm:$0xff]
    %v114 = vld [vmem:[%s1 + $0x1e0] sm:$0xff]
    %v115 = vld [vmem:[%s1 + $0x1e8] sm:$0xff]
    %v116 = vld [vmem:[%s1 + $0x1f0] sm:$0xff]
    %v117 = vld [vmem:[%s1 + $0x1f8] sm:$0xff]
    %v118 = vld [vmem:[%s1 + $0x200] sm:$0xff]
    %v119 = vld [vmem:[%s1 + $0x208] sm:$0xff]
    %v120 = vld [vmem:[%s1 + $0x210] sm:$0xff]
    %v121 = vld [vmem:[%s1 + $0x218] sm:$0xff]
    %v122 = vld [vmem:[%s1 + $0x220] sm:$0xff]
    %v123 = vld [vmem:[%s1 + $0x228] sm:$0xff]
    %v124 = vld [vmem:[%s1 + $0x230] sm:$0xff]
    %v125 = vld [vmem:[%s1 + $0x238] sm:$0xff]
    %v126 = vld [vmem:[%s1 + $0x240] sm:$0xff]
    %v127 = vld [vmem:[%s1 + $0x248] sm:$0xff]
    %v128 = vld [vmem:[%s1 + $0x250] sm:$0xff]
    %v129 = vld [vmem:[%s1 + $0x258] sm:$0xff]
    %v130 = vld [vmem:[%s1 + $0x260] sm:$0xff]
    %v131 = vld [vmem:[%s1 + $0x268] sm:$0xff]
    %v132 = vld [vmem:[%s1 + $0x270] sm:$0xff]
    %v133 = vld [vmem:[%s1 + $0x278] sm:$0xff]
    %v134 = vld [vmem:[%s1 + $0x280] sm:$0xff]
    %v135 = vld [vmem:[%s1 + $0x288] sm:$0xff]
    %v136 = vld [vmem:[%s1 + $0x290] sm:$0xff]
    %v137 = vld [vmem:[%s1 + $0x298] sm:$0xff]
    %v138 = vld [vmem:[%s1 + $0x2a0] sm:$0xff]
    %v139 = vld [vmem:[%s1 + $0x2a8] sm:$0xff]
    %v140 = vld [vmem:[%s1 + $0x2b0] sm:$0xff]
    %v141 = vld [vmem:[%s1 + $0x2b8] sm:$0xff]
    %v142 = vld [vmem:[%s1 + $0x2c0] sm:$0xff]
    %v143 = vld [vmem:[%s1 + $0x2c8] sm:$0xff]
    %v144 = vld [vmem:[%s1 + $0x2d0] sm:$0xff]
    %v145 = vld [vmem:[%s1 + $0x2d8] sm:$0xff]
    %v146 = vld [vmem:[%s1 + $0x2e0] sm:$0xff]
    %v147 = vld [vmem:[%s1 + $0x2e8] sm:$0xff]
    %v148 = vld [vmem:[%s1 + $0x2f0] sm:$0xff]
    %v149 = vld [vmem:[%s1 + $0x2f8] sm:$0xff]
    %v150 = vld [vmem:[%s1 + $0x300] sm:$0xff]
    %v151 = vld [vmem:[%s1 + $0x308] sm:$0xff]
    %v152 = vld [vmem:[%s1 + $0x310] sm:$0xff]
    %v153 = vld [vmem:[%s1 + $0x318] sm:$0xff]
    %v154 = vld [vmem:[%s1 + $0x320] sm:$0xff]
    %v155 = vld [vmem:[%s1 + $0x328] sm:$0xff]
    %v156 = vld [vmem:[%s1 + $0x330] sm:$0xff]
    %v157 = vld [vmem:[%s1 + $0x338] sm:$0xff]
    %v158 = vld [vmem:[%s1 + $0x340] sm:$0xff]
    %v159 = vld [vmem:[%s1 + $0x348] sm:$0xff]
    %v160 = vld [vmem:[%s1 + $0x350] sm:$0xff]
    %v161 = vld [vmem:[%s1 + $0x358] sm:$0xff]
    %v162 = vld [vmem:[%s1 + $0x360] sm:$0xff]
    %v163 = vld [vmem:[%s1 + $0x368] sm:$0xff]
    %v164 = vld [vmem:[%s1 + $0x370] sm:$0xff]
    %v165 = vld [vmem:[%s1 + $0x378] sm:$0xff]
    %v166 = vld [vmem:[%s1 + $0x380] sm:$0xff]
    %v167 = vld [vmem:[%s1 + $0x388] sm:$0xff]
    %v168 = vld [vmem:[%s1 + $0x390] sm:$0xff]
    %v169 = vld [vmem:[%s1 + $0x398] sm:$0xff]
    %v170 = vld [vmem:[%s1 + $0x3a0] sm:$0xff]
    %v171 = vld [vmem:[%s1 + $0x3a8] sm:$0xff]
    %v172 = vld [vmem:[%s1 + $0x3b0] sm:$0xff]
    %v173 = vld [vmem:[%s1 + $0x3b8] sm:$0xff]
    %v174 = vld [vmem:[%s1 + $0x3c0] sm:$0xff]
    %v175 = vld [vmem:[%s1 + $0x3c8] sm:$0xff]
    %v176 = vld [vmem:[%s1 + $0x3d0] sm:$0xff]
    %v177 = vld [vmem:[%s1 + $0x3d8] sm:$0xff]
    %v178 = vld [vmem:[%s1 + $0x3e0] sm:$0xff]
    %v179 = vld [vmem:[%s1 + $0x3e8] sm:$0xff]
    %v180 = vld [vmem:[%s1 + $0x3f0] sm:$0xff]
    %v181 = vld [vmem:[%s1 + $0x3f8] sm:$0xff]
    %v182 = vld [vmem:[%s1 + $0x400] sm:$0xff]
    %v183 = vld [vmem:[%s1 + $0x408] sm:$0xff]
    %v184 = vld [vmem:[%s1 + $0x410] sm:$0xff]
    %v185 = vld [vmem:[%s1 + $0x418] sm:$0xff]
    %v186 = vld [vmem:[%s1 + $0x420] sm:$0xff]
    %v187 = vld [vmem:[%s1 + $0x428] sm:$0xff]
    %v188 = vld [vmem:[%s1 + $0x430] sm:$0xff]
    %v189 = vld [vmem:[%s1 + $0x438] sm:$0xff]
    %v190 = vld [vmem:[%s1 + $0x440] sm:$0xff]
    %v191 = vld [vmem:[%s1 + $0x448] sm:$0xff]
    %v192 = vld [vmem:[%s1 + $0x450] sm:$0xff]
    %v193 = vld [vmem:[%s1 + $0x458] sm:$0xff]
    %v194 = vld [vmem:[%s1 + $0x460] sm:$0xff]
    %v195 = vld [vmem:[%s1 + $0x468] sm:$0xff]
    %v196 = vld [vmem:[%s1 + $0x470] sm:$0xff]
    %v197 = vld [vmem:[%s1 + $0x478] sm:$0xff]
    %v198 = vld [vmem:[%s1 + $0x480] sm:$0xff]
    %v199 = vld [vmem:[%s1 + $0x488] sm:$0xff]
    %v200 = vld [vmem:[%s1 + $0x490] sm:$0xff]
    %v201 = vld [vmem:[%s1 + $0x498] sm:$0xff]
    %v202 = vld [vmem:[%s1 + $0x4a0] sm:$0xff]
    %v203 = vld [vmem:[%s1 + $0x4a8] sm:$0xff]
    %v204 = vld [vmem:[%s1 + $0x4b0] sm:$0xff]
    %v205 = vld [vmem:[%s1 + $0x4b8] sm:$0xff]
    %v206 = vld [vmem:[%s1 + $0x4c0] sm:$0xff]
    %v207 = vld [vmem:[%s1 + $0x4c8] sm:$0xff]
    %v208 = vld [vmem:[%s1 + $0x4d0] sm:$0xff]
    %v209 = vld [vmem:[%s1 + $0x4d8] sm:$0xff]
    %v210 = vld [vmem:[%s1 + $0x4e0] sm:$0xff]
    %v211 = vld [vmem:[%s1 + $0x4e8] sm:$0xff]
    %v212 = vld [vmem:[%s1 + $0x4f0] sm:$0xff]
    %v213 = vld [vmem:[%s1 + $0x4f8] sm:$0xff]
    %v214 = vld [vmem:[%s1 + $0x500] sm:$0xff]
    %v215 = vld [vmem:[%s1 + $0x508] sm:$0xff]
    %v216 = vld [vmem:[%s1 + $0x510] sm:$0xff]
    %v217 = vld [vmem:[%s1 + $0x518] sm:$0xff]
    %v218 = vld [vmem:[%s1 + $0x520] sm:$0xff]
    %v219 = vld [vmem:[%s1 + $0x528] sm:$0xff]
    %v220 = vld [vmem:[%s1 + $0x530] sm:$0xff]
    %v221 = vld [vmem:[%s1 + $0x538] sm:$0xff]
    %v222 = vld [vmem:[%s1 + $0x540] sm:$0xff]
    %v223 = vld [vmem:[%s1 + $0x548] sm:$0xff]
    %v224 = vld [vmem:[%s1 + $0x550] sm:$0xff]
    %v225 = vld [vmem:[%s1 + $0x558] sm:$0xff]
    %v226 = vld [vmem:[%s1 + $0x560] sm:$0xff]
    %v227 = vld [vmem:[%s1 + $0x568] sm:$0xff]
    %v228 = vld [vmem:[%s1 + $0x570] sm:$0xff]
    %v229 = vld [vmem:[%s1 + $0x578] sm:$0xff]
    %v230 = vld [vmem:[%s1 + $0x580] sm:$0xff]
    %v231 = vld [vmem:[%s1 + $0x588] sm:$0xff]
    %v232 = vld [vmem:[%s1 + $0x590] sm:$0xff]
    %v233 = vld [vmem:[%s1 + $0x598] sm:$0xff]
    %v234 = vld [vmem:[%s1 + $0x5a0] sm:$0xff]
    %v235 = vld [vmem:[%s1 + $0x5a8] sm:$0xff]
    %v236 = vld [vmem:[%s1 + $0x5b0] sm:$0xff]
    %v237 = vld [vmem:[%s1 + $0x5b8] sm:$0xff]
    %v238 = vld [vmem:[%s1 + $0x5c0] sm:$0xff]
    %v239 = vld [vmem:[%s1 + $0x5c8] sm:$0xff]
    %v240 = vld [vmem:[%s1 + $0x5d0] sm:$0xff]
    %v241 = vld [vmem:[%s1 + $0x5d8] sm:$0xff]
    %v242 = vld [vmem:[%s1 + $0x5e0] sm:$0xff]
    %v243 = vld [vmem:[%s1 + $0x5e8] sm:$0xff]
    %v244 = vld [vmem:[%s1 + $0x5f0] sm:$0xff]
    %v245 = vld [vmem:[%s1 + $0x5f8] sm:$0xff]
    %v246 = vld [vmem:[%s1 + $0x600] sm:$0xff]
    %v247 = vld [vmem:[%s1 + $0x608] sm:$0xff]
    %v248 = vld [vmem:[%s1 + $0x610] sm:$0xff]
    %v249 = vld [vmem:[%s1 + $0x618] sm:$0xff]
    %v250 = vld [vmem:[%s1 + $0x620] sm:$0xff]
    %v251 = vld [vmem:[%s1 + $0x628] sm:$0xff]
    %v252 = vld [vmem:[%s1 + $0x630] sm:$0xff]
    %v253 = vld [vmem:[%s1 + $0x638] sm:$0xff]
    %v254 = vld [vmem:[%s1 + $0x640] sm:$0xff]
    %v255 = vld [vmem:[%s1 + $0x648] sm:$0xff]
    %v256 = vld [vmem:[%s1 + $0x650] sm:$0xff]
    %v257 = vld [vmem:[%s1 + $0x658] sm:$0xff]
    %v258 = vld [vmem:[%s1 + $0x660] sm:$0xff]
    %v259 = vld [vmem:[%s1 + $0x668] sm:$0xff]
    %v260 = vld [vmem:[%s1 + $0x670] sm:$0xff]
    %v261 = vld [vmem:[%s1 + $0x678] sm:$0xff]
    %v262 = vld [vmem:[%s1 + $0x680] sm:$0xff]
    %v263 = vld [vmem:[%s1 + $0x688] sm:$0xff]
    %v264 = vld [vmem:[%s1 + $0x690] sm:$0xff]
    %v265 = vld [vmem:[%s1 + $0x698] sm:$0xff]
    %v266 = vld [vmem:[%s1 + $0x6a0] sm:$0xff]
    %v267 = vld [vmem:[%s1 + $0x6a8] sm:$0xff]
    %v268 = vld [vmem:[%s1 + $0x6b0] sm:$0xff]
    %v269 = vld [vmem:[%s1 + $0x6b8] sm:$0xff]
    %v270 = vld [vmem:[%s1 + $0x6c0] sm:$0xff]
    %v271 = vld [vmem:[%s1 + $0x6c8] sm:$0xff]
    %v272 = vld [vmem:[%s1 + $0x6d0] sm:$0xff]
    %v273 = vld [vmem:[%s1 + $0x6d8] sm:$0xff]
    %v274 = vld [vmem:[%s1 + $0x6e0] sm:$0xff]
    %v275 = vld [vmem:[%s1 + $0x6e8] sm:$0xff]
    %v276 = vld [vmem:[%s1 + $0x6f0] sm:$0xff]
    %v277 = vld [vmem:[%s1 + $0x6f8] sm:$0xff]
    %v278 = vld [vmem:[%s1 + $0x700] sm:$0xff]
    %v279 = vld [vmem:[%s1 + $0x708] sm:$0xff]
    %v280 = vld [vmem:[%s1 + $0x710] sm:$0xff]
    %v281 = vld [vmem:[%s1 + $0x718] sm:$0xff]
    %v282 = vld [vmem:[%s1 + $0x720] sm:$0xff]
    %v283 = vld [vmem:[%s1 + $0x728] sm:$0xff]
    %v284 = vld [vmem:[%s1 + $0x730] sm:$0xff]
    %v285 = vld [vmem:[%s1 + $0x738] sm:$0xff]
    %v286 = vld [vmem:[%s1 + $0x740] sm:$0xff]
    %v287 = vld [vmem:[%s1 + $0x748] sm:$0xff]
    %v288 = vld [vmem:[%s1 + $0x750] sm:$0xff]
    %v289 = vld [vmem:[%s1 + $0x758] sm:$0xff]
    %v290 = vld [vmem:[%s1 + $0x760] sm:$0xff]
    %v291 = vld [vmem:[%s1 + $0x768] sm:$0xff]
    %v292 = vld [vmem:[%s1 + $0x770] sm:$0xff]
    %v293 = vld [vmem:[%s1 + $0x778] sm:$0xff]
    %v294 = vld [vmem:[%s1 + $0x780] sm:$0xff]
    %v295 = vld [vmem:[%s1 + $0x788] sm:$0xff]
    %v296 = vld [vmem:[%s1 + $0x790] sm:$0xff]
    %v297 = vld [vmem:[%s1 + $0x798] sm:$0xff]
    %v298 = vld [vmem:[%s1 + $0x7a0] sm:$0xff]
    %v299 = vld [vmem:[%s1 + $0x7a8] sm:$0xff]
    %v300 = vld [vmem:[%s1 + $0x7b0] sm:$0xff]
    %v301 = vld [vmem:[%s1 + $0x7b8] sm:$0xff]
    %v302 = vld [vmem:[%s1 + $0x7c0] sm:$0xff]
    %v303 = vld [vmem:[%s1 + $0x7c8] sm:$0xff]
    %v304 = vld [vmem:[%s1 + $0x7d0] sm:$0xff]
    %v305 = vld [vmem:[%s1 + $0x7d8] sm:$0xff]
    %v306 = vld [vmem:[%s1 + $0x7e0] sm:$0xff]
    %v307 = vld [vmem:[%s1 + $0x7e8] sm:$0xff]
    %v308 = vld [vmem:[%s1 + $0x7f0] sm:$0xff]
    %v309 = vld [vmem:[%s1 + $0x7f8] sm:$0xff]
    %v310 = vld [vmem:[%s1 + $0x800] sm:$0xff]
    %v311 = vld [vmem:[%s1 + $0x808] sm:$0xff]
    %v312 = vld [vmem:[%s1 + $0x810] sm:$0xff]
    %v313 = vld [vmem:[%s1 + $0x818] sm:$0xff]
    %v314 = vld [vmem:[%s1 + $0x820] sm:$0xff]
    %v315 = vld [vmem:[%s1 + $0x828] sm:$0xff]
    %v316 = vld [vmem:[%s1 + $0x830] sm:$0xff]
    %v317 = vld [vmem:[%s1 + $0x838] sm:$0xff]
    %v318 = vld [vmem:[%s1 + $0x840] sm:$0xff]
    %v319 = vld [vmem:[%s1 + $0x848] sm:$0xff]
    %v320 = vld [vmem:[%s1 + $0x850] sm:$0xff]
    %v321 = vld [vmem:[%s1 + $0x858] sm:$0xff]
    %v322 = vld [vmem:[%s1 + $0x860] sm:$0xff]
    %v323 = vld [vmem:[%s1 + $0x868] sm:$0xff]
    %v324 = vld [vmem:[%s1 + $0x870] sm:$0xff]
    %v325 = vld [vmem:[%s1 + $0x878] sm:$0xff]
    %v326 = vld [vmem:[%s1 + $0x880] sm:$0xff]
    %v327 = vld [vmem:[%s1 + $0x888] sm:$0xff]
    %v328 = vld [vmem:[%s1 + $0x890] sm:$0xff]
    %v329 = vld [vmem:[%s1 + $0x898] sm:$0xff]
    %v330 = vld [vmem:[%s1 + $0x8a0] sm:$0xff]
    %v331 = vld [vmem:[%s1 + $0x8a8] sm:$0xff]
    %v332 = vld [vmem:[%s1 + $0x8b0] sm:$0xff]
    %v333 = vld [vmem:[%s1 + $0x8b8] sm:$0xff]
    %v334 = vld [vmem:[%s1 + $0x8c0] sm:$0xff]
    %v335 = vld [vmem:[%s1 + $0x8c8] sm:$0xff]
    %v336 = vld [vmem:[%s1 + $0x8d0] sm:$0xff]
    %v337 = vld [vmem:[%s1 + $0x8d8] sm:$0xff]
    %v338 = vld [vmem:[%s1 + $0x8e0] sm:$0xff]
    %v339 = vld [vmem:[%s1 + $0x8e8] sm:$0xff]
    %v340 = vld [vmem:[%s1 + $0x8f0] sm:$0xff]
    %v341 = vld [vmem:[%s1 + $0x8f8] sm:$0xff]
    %v342 = vld [vmem:[%s1 + $0x900] sm:$0xff]
    %v343 = vld [vmem:[%s1 + $0x908] sm:$0xff]
    %v344 = vld [vmem:[%s1 + $0x910] sm:$0xff]
    %v345 = vld [vmem:[%s1 + $0x918] sm:$0xff]
    %v346 = vld [vmem:[%s1 + $0x920] sm:$0xff]
    %v347 = vld [vmem:[%s1 + $0x928] sm:$0xff]
    %v348 = vld [vmem:[%s1 + $0x930] sm:$0xff]
    %v349 = vld [vmem:[%s1 + $0x938] sm:$0xff]
    %v350 = vld [vmem:[%s1 + $0x940] sm:$0xff]
    %v351 = vld [vmem:[%s1 + $0x948] sm:$0xff]
    %v352 = vld [vmem:[%s1 + $0x950] sm:$0xff]
    %v353 = vld [vmem:[%s1 + $0x958] sm:$0xff]
    %v354 = vld [vmem:[%s1 + $0x960] sm:$0xff]
    %v355 = vld [vmem:[%s1 + $0x968] sm:$0xff]
    %v356 = vld [vmem:[%s1 + $0x970] sm:$0xff]
    %v357 = vld [vmem:[%s1 + $0x978] sm:$0xff]
    %v358 = vld [vmem:[%s1 + $0x980] sm:$0xff]
    %v359 = vld [vmem:[%s1 + $0x988] sm:$0xff]
    %v360 = vld [vmem:[%s1 + $0x990] sm:$0xff]
    %v361 = vld [vmem:[%s1 + $0x998] sm:$0xff]
    %v362 = vld [vmem:[%s1 + $0x9a0] sm:$0xff]
    %v363 = vld [vmem:[%s1 + $0x9a8] sm:$0xff]
    %v364 = vld [vmem:[%s1 + $0x9b0] sm:$0xff]
    %v365 = vld [vmem:[%s1 + $0x9b8] sm:$0xff]
    %v366 = vld [vmem:[%s1 + $0x9c0] sm:$0xff]
    %v367 = vld [vmem:[%s1 + $0x9c8] sm:$0xff]
    %v368 = vld [vmem:[%s1 + $0x9d0] sm:$0xff]
    %v369 = vld [vmem:[%s1 + $0x9d8] sm:$0xff]
    %v370 = vld [vmem:[%s1 + $0x9e0] sm:$0xff]
    %v371 = vld [vmem:[%s1 + $0x9e8] sm:$0xff]
    %v372 = vld [vmem:[%s1 + $0x9f0] sm:$0xff]
    %v373 = vld [vmem:[%s1 + $0x9f8] sm:$0xff]
    %v374 = vld [vmem:[%s1 + $0xa00] sm:$0xff]
    %v375 = vld [vmem:[%s1 + $0xa08] sm:$0xff]
    %v376 = vld [vmem:[%s1 + $0xa10] sm:$0xff]
    %v377 = vld [vmem:[%s1 + $0xa18] sm:$0xff]
    %v378 = vld [vmem:[%s1 + $0xa20] sm:$0xff]
    %v379 = vld [vmem:[%s1 + $0xa28] sm:$0xff]
    %v380 = vld [vmem:[%s1 + $0xa30] sm:$0xff]
    %v381 = vld [vmem:[%s1 + $0xa38] sm:$0xff]
    %v382 = vld [vmem:[%s1 + $0xa40] sm:$0xff]
    %v383 = vld [vmem:[%s1 + $0xa48] sm:$0xff]
    %v384 = vld [vmem:[%s1 + $0xa50] sm:$0xff]
    %v385 = vld [vmem:[%s1 + $0xa58] sm:$0xff]
    %v386 = vld [vmem:[%s1 + $0xa60] sm:$0xff]
    %v387 = vld [vmem:[%s1 + $0xa68] sm:$0xff]
    %v388 = vld [vmem:[%s1 + $0xa70] sm:$0xff]
    %v389 = vld [vmem:[%s1 + $0xa78] sm:$0xff]
    %v390 = vld [vmem:[%s1 + $0xa80] sm:$0xff]
    %v391 = vld [vmem:[%s1 + $0xa88] sm:$0xff]
    %v392 = vld [vmem:[%s1 + $0xa90] sm:$0xff]
    %v393 = vld [vmem:[%s1 + $0xa98] sm:$0xff]
    %v394 = vld [vmem:[%s1 + $0xaa0] sm:$0xff]
    %v395 = vld [vmem:[%s1 + $0xaa8] sm:$0xff]
    %v396 = vld [vmem:[%s1 + $0xab0] sm:$0xff]
    %v397 = vld [vmem:[%s1 + $0xab8] sm:$0xff]
    %v398 = vld [vmem:[%s1 + $0xac0] sm:$0xff]
    %v399 = vld [vmem:[%s1 + $0xac8] sm:$0xff]
    %v400 = vld [vmem:[%s1 + $0xad0] sm:$0xff]
    %v401 = vld [vmem:[%s1 + $0xad8] sm:$0xff]
    %v402 = vld [vmem:[%s1 + $0xae0] sm:$0xff]
    %v403 = vld [vmem:[%s1 + $0xae8] sm:$0xff]
    %v404 = vld [vmem:[%s1 + $0xaf0] sm:$0xff]
    %v405 = vld [vmem:[%s1 + $0xaf8] sm:$0xff]
    %v406 = vld [vmem:[%s1 + $0xb00] sm:$0xff]
    %v407 = vld [vmem:[%s1 + $0xb08] sm:$0xff]
    %v408 = vld [vmem:[%s1 + $0xb10] sm:$0xff]
    %v409 = vld [vmem:[%s1 + $0xb18] sm:$0xff]
    %v410 = vld [vmem:[%s1 + $0xb20] sm:$0xff]
    %v411 = vld [vmem:[%s1 + $0xb28] sm:$0xff]
    %v412 = vld [vmem:[%s1 + $0xb30] sm:$0xff]
    %v413 = vld [vmem:[%s1 + $0xb38] sm:$0xff]
    %v414 = vld [vmem:[%s1 + $0xb40] sm:$0xff]
    %v415 = vld [vmem:[%s1 + $0xb48] sm:$0xff]
    %v416 = vld [vmem:[%s1 + $0xb50] sm:$0xff]
    %v417 = vld [vmem:[%s1 + $0xb58] sm:$0xff]
    %v418 = vld [vmem:[%s1 + $0xb60] sm:$0xff]
    %v419 = vld [vmem:[%s1 + $0xb68] sm:$0xff]
    %v420 = vld [vmem:[%s1 + $0xb70] sm:$0xff]
    %v421 = vld [vmem:[%s1 + $0xb78] sm:$0xff]
    %v422 = vld [vmem:[%s1 + $0xb80] sm:$0xff]
    %v423 = vld [vmem:[%s1 + $0xb88] sm:$0xff]
    %v424 = vld [vmem:[%s1 + $0xb90] sm:$0xff]
    %v425 = vld [vmem:[%s1 + $0xb98] sm:$0xff]
    %v426 = vld [vmem:[%s1 + $0xba0] sm:$0xff]
    %v427 = vld [vmem:[%s1 + $0xba8] sm:$0xff]
    %v428 = vld [vmem:[%s1 + $0xbb0] sm:$0xff]
    %v429 = vld [vmem:[%s1 + $0xbb8] sm:$0xff]
    %v430 = vld [vmem:[%s1 + $0xbc0] sm:$0xff]
    %v431 = vld [vmem:[%s1 + $0xbc8] sm:$0xff]
    %v432 = vld [vmem:[%s1 + $0xbd0] sm:$0xff]
    %v433 = vld [vmem:[%s1 + $0xbd8] sm:$0xff]
    %v434 = vld [vmem:[%s1 + $0xbe0] sm:$0xff]
    %v435 = vld [vmem:[%s1 + $0xbe8] sm:$0xff]
    %v436 = vld [vmem:[%s1 + $0xbf0] sm:$0xff]
    %v437 = vld [vmem:[%s1 + $0xbf8] sm:$0xff]
    %v438 = vld [vmem:[%s1 + $0xc00] sm:$0xff]
    %v439 = vld [vmem:[%s1 + $0xc08] sm:$0xff]
    %v440 = vld [vmem:[%s1 + $0xc10] sm:$0xff]
    %v441 = vld [vmem:[%s1 + $0xc18] sm:$0xff]
    %v442 = vld [vmem:[%s1 + $0xc20] sm:$0xff]
    %v443 = vld [vmem:[%s1 + $0xc28] sm:$0xff]
    %v444 = vld [vmem:[%s1 + $0xc30] sm:$0xff]
    %v445 = vld [vmem:[%s1 + $0xc38] sm:$0xff]
    %v446 = vld [vmem:[%s1 + $0xc40] sm:$0xff]
    %v447 = vld [vmem:[%s1 + $0xc48] sm:$0xff]
    %v448 = vld [vmem:[%s1 + $0xc50] sm:$0xff]
    %v449 = vld [vmem:[%s1 + $0xc58] sm:$0xff]
    %v450 = vld [vmem:[%s1 + $0xc60] sm:$0xff]
    %v451 = vld [vmem:[%s1 + $0xc68] sm:$0xff]
    %v452 = vld [vmem:[%s1 + $0xc70] sm:$0xff]
    %v453 = vld [vmem:[%s1 + $0xc78] sm:$0xff]
    %v454 = vld [vmem:[%s1 + $0xc80] sm:$0xff]
    %v455 = vld [vmem:[%s1 + $0xc88] sm:$0xff]
    %v456 = vld [vmem:[%s1 + $0xc90] sm:$0xff]
    %v457 = vld [vmem:[%s1 + $0xc98] sm:$0xff]
    %v458 = vld [vmem:[%s1 + $0xca0] sm:$0xff]
    %v459 = vld [vmem:[%s1 + $0xca8] sm:$0xff]
    %v460 = vld [vmem:[%s1 + $0xcb0] sm:$0xff]
    %v461 = vld [vmem:[%s1 + $0xcb8] sm:$0xff]
    %v462 = vld [vmem:[%s1 + $0xcc0] sm:$0xff]
    %v463 = vld [vmem:[%s1 + $0xcc8] sm:$0xff]
    %v464 = vld [vmem:[%s1 + $0xcd0] sm:$0xff]
    %v465 = vld [vmem:[%s1 + $0xcd8] sm:$0xff]
    %v466 = vld [vmem:[%s1 + $0xce0] sm:$0xff]
    %v467 = vld [vmem:[%s1 + $0xce8] sm:$0xff]
    %v468 = vld [vmem:[%s1 + $0xcf0] sm:$0xff]
    %v469 = vld [vmem:[%s1 + $0xcf8] sm:$0xff]
    %v470 = vld [vmem:[%s1 + $0xd00] sm:$0xff]
    %v471 = vld [vmem:[%s1 + $0xd08] sm:$0xff]
    %v472 = vld [vmem:[%s1 + $0xd10] sm:$0xff]
    %v473 = vld [vmem:[%s1 + $0xd18] sm:$0xff]
    %v474 = vld [vmem:[%s1 + $0xd20] sm:$0xff]
    %v475 = vld [vmem:[%s1 + $0xd28] sm:$0xff]
    %v476 = vld [vmem:[%s1 + $0xd30] sm:$0xff]
    %v477 = vld [vmem:[%s1 + $0xd38] sm:$0xff]
    %v478 = vld [vmem:[%s1 + $0xd40] sm:$0xff]
    %v479 = vld [vmem:[%s1 + $0xd48] sm:$0xff]
    %v480 = vld [vmem:[%s1 + $0xd50] sm:$0xff]
    %v481 = vld [vmem:[%s1 + $0xd58] sm:$0xff]
    %v482 = vld [vmem:[%s1 + $0xd60] sm:$0xff]
    %v483 = vld [vmem:[%s1 + $0xd68] sm:$0xff]
    %v484 = vld [vmem:[%s1 + $0xd70] sm:$0xff]
    %v485 = vld [vmem:[%s1 + $0xd78] sm:$0xff]
    %v486 = vld [vmem:[%s1 + $0xd80] sm:$0xff]
    %v487 = vld [vmem:[%s1 + $0xd88] sm:$0xff]
    %v488 = vld [vmem:[%s1 + $0xd90] sm:$0xff]
    %v489 = vld [vmem:[%s1 + $0xd98] sm:$0xff]
    %v490 = vld [vmem:[%s1 + $0xda0] sm:$0xff]
    %v491 = vld [vmem:[%s1 + $0xda8] sm:$0xff]
    %v492 = vld [vmem:[%s1 + $0xdb0] sm:$0xff]
    %v493 = vld [vmem:[%s1 + $0xdb8] sm:$0xff]
    %v494 = vld [vmem:[%s1 + $0xdc0] sm:$0xff]
    %v495 = vld [vmem:[%s1 + $0xdc8] sm:$0xff]
    %v496 = vld [vmem:[%s1 + $0xdd0] sm:$0xff]
    %v497 = vld [vmem:[%s1 + $0xdd8] sm:$0xff]
    %v498 = vld [vmem:[%s1 + $0xde0] sm:$0xff]
    %v499 = vld [vmem:[%s1 + $0xde8] sm:$0xff]
    %v500 = vld [vmem:[%s1 + $0xdf0] sm:$0xff]
    %v501 = vld [vmem:[%s1 + $0xdf8] sm:$0xff]
    %v502 = vld [vmem:[%s1 + $0xe00] sm:$0xff]
    %v503 = vld [vmem:[%s1 + $0xe08] sm:$0xff]
    %v504 = vld [vmem:[%s1 + $0xe10] sm:$0xff]
    %v505 = vld [vmem:[%s1 + $0xe18] sm:$0xff]
    %v506 = vld [vmem:[%s1 + $0xe20] sm:$0xff]
    %v507 = vld [vmem:[%s1 + $0xe28] sm:$0xff]
    %v508 = vld [vmem:[%s1 + $0xe30] sm:$0xff]
    %v509 = vld [vmem:[%s1 + $0xe38] sm:$0xff]
    %v510 = vld [vmem:[%s1 + $0xe40] sm:$0xff]
    %v511 = vld [vmem:[%s1 + $0xe48] sm:$0xff]
    %v512 = vld [vmem:[%s1 + $0xe50] sm:$0xff]
    %v513 = vld [vmem:[%s1 + $0xe58] sm:$0xff]
    %v514 = vld [vmem:[%s1 + $0xe60] sm:$0xff]
    %v515 = vld [vmem:[%s1 + $0xe68] sm:$0xff]
    %v516 = vld [vmem:[%s1 + $0xe70] sm:$0xff]
    %v517 = vld [vmem:[%s1 + $0xe78] sm:$0xff]
    %v518 = vld [vmem:[%s1 + $0xe80] sm:$0xff]
    %v519 = vld [vmem:[%s1 + $0xe88] sm:$0xff]
    %v520 = vld [vmem:[%s1 + $0xe90] sm:$0xff]
    %v521 = vld [vmem:[%s1 + $0xe98] sm:$0xff]
    %v522 = vld [vmem:[%s1 + $0xea0] sm:$0xff]
    %v523 = vld [vmem:[%s1 + $0xea8] sm:$0xff]
    %v524 = vld [vmem:[%s1 + $0xeb0] sm:$0xff]
    %v525 = vld [vmem:[%s1 + $0xeb8] sm:$0xff]
    %v526 = vld [vmem:[%s1 + $0xec0] sm:$0xff]
    %v527 = vld [vmem:[%s1 + $0xec8] sm:$0xff]
    %v528 = vld [vmem:[%s1 + $0xed0] sm:$0xff]
    %v529 = vld [vmem:[%s1 + $0xed8] sm:$0xff]
    %v530 = vld [vmem:[%s1 + $0xee0] sm:$0xff]
    %v531 = vld [vmem:[%s1 + $0xee8] sm:$0xff]
    %v532 = vld [vmem:[%s1 + $0xef0] sm:$0xff]
    %v533 = vld [vmem:[%s1 + $0xef8] sm:$0xff]
    %v534 = vstv %s42
    %535 = vmatprep.subr.mxu0 %v145
    %536 = vmatpush1.msra.mxu0 %v144
    %537 = vmatprep.subr.mxu0 %v139
    %538 = vmatpush1.msra.mxu0 %v138
    %539 = vmatprep.subr.mxu0 %v133
    %540 = vmatpush1.msra.mxu0 %v132
    %541 = vmatprep.subr.mxu0 %v127
    %542 = vmatpush1.msra.mxu0 %v126
    %543 = vmatprep.subr.mxu0 %v121
    %544 = vmatpush1.msra.mxu0 %v120
    %545 = vmatprep.subr.mxu0 %v115
    %546 = vmatpush1.msra.mxu0 %v114
    %547 = vmatprep.subr.mxu0 %v109
    %548 = vmatpush1.msra.mxu0 %v108
    %549 = vmatprep.subr.mxu0 %v103
    %550 = vmatpush1.msra.mxu0 %v102
    %551 = vmatprep.subr.mxu0 %v97
    %552 = vmatpush1.msra.mxu0 %v96
    %553 = vmatprep.subr.mxu0 %v91
    %554 = vmatpush1.msra.mxu0 %v90
    %555 = vmatprep.subr.mxu0 %v85
    %556 = vmatpush1.msra.mxu0 %v84
    %557 = vmatprep.subr.mxu0 %v79
    %558 = vmatpush1.msra.mxu0 %v78
    %559 = vmatprep.subr.mxu0 %v73
    %560 = vmatpush1.msra.mxu0 %v72
    %561 = vmatprep.subr.mxu0 %v67
    %562 = vmatpush1.msra.mxu0 %v66
    %563 = vmatprep.subr.mxu0 %v61
    %564 = vmatpush1.msra.mxu0 %v60
    %565 = vmatprep.subr.mxu0 %v55
    %566 = vmatpush1.msra.mxu0 %v54
    %567 = vmatprep.subr.mxu0 %v241
    %568 = vmatpush2.msra.mxu0 %v240
    %569 = vmatprep.subr.mxu0 %v235
    %570 = vmatpush2.msra.mxu0 %v234
    %571 = vmatprep.subr.mxu0 %v229
    %572 = vmatpush2.msra.mxu0 %v228
    %573 = vmatprep.subr.mxu0 %v223
    %574 = vmatpush2.msra.mxu0 %v222
    %575 = vmatprep.subr.mxu0 %v217
    %576 = vmatpush2.msra.mxu0 %v216
    %577 = vmatprep.subr.mxu0 %v211
    %578 = vmatpush2.msra.mxu0 %v210
    %579 = vmatprep.subr.mxu0 %v205
    %580 = vmatpush2.msra.mxu0 %v204
    %581 = vmatprep.subr.mxu0 %v199
    %582 = vmatpush2.msra.mxu0 %v198
    %583 = vmatprep.subr.mxu0 %v193
    %584 = vmatpush2.msra.mxu0 %v192
    %585 = vmatprep.subr.mxu0 %v187
    %586 = vmatpush2.msra.mxu0 %v186
    %587 = vmatprep.subr.mxu0 %v181
    %588 = vmatpush2.msra.mxu0 %v180
    %589 = vmatprep.subr.mxu0 %v175
    %590 = vmatpush2.msra.mxu0 %v174
    %591 = vmatprep.subr.mxu0 %v169
    %592 = vmatpush2.msra.mxu0 %v168
    %593 = vmatprep.subr.mxu0 %v163
    %594 = vmatpush2.msra.mxu0 %v162
    %595 = vmatprep.subr.mxu0 %v157
    %596 = vmatpush2.msra.mxu0 %v156
    %597 = vmatprep.subr.mxu0 %v151
    %598 = vmatpush2.msra.mxu0 %v150
    %599 = vmatprep.mubr.f32.mxu0 %v45
    %600 = vmatmul.mubr.f32.gmra.mxu0 %v44
    %v601 = vpop.f32.mrf.mxu0
    %v602 = vadd.f32 %v534, %v601
    %v603 = vpop.f32.mrf.mxu0
    %v604 = vadd.f32 %v534, %v603
    %605 = vmatprep.mubr.f32.mxu0 %v50
    %606 = vmatmul.mubr.f32.gmra.mxu0 %v49
    %v607 = vpop.f32.mrf.mxu0
    %v608 = vadd.f32 %v534, %v607
    %v609 = vpop.f32.mrf.mxu0
    %v610 = vadd.f32 %v534, %v609
    %611 = vdwg.mxu0
    %612 = vmatprep.subr.mxu0 %v337
    %613 = vmatpush1.msra.mxu0 %v336
    %614 = vmatprep.subr.mxu0 %v331
    %615 = vmatpush1.msra.mxu0 %v330
    %616 = vmatprep.subr.mxu0 %v325
    %617 = vmatpush1.msra.mxu0 %v324
    %618 = vmatprep.subr.mxu0 %v319
    %619 = vmatpush1.msra.mxu0 %v318
    %620 = vmatprep.subr.mxu0 %v313
    %621 = vmatpush1.msra.mxu0 %v312
    %622 = vmatprep.subr.mxu0 %v307
    %623 = vmatpush1.msra.mxu0 %v306
    %624 = vmatprep.subr.mxu0 %v301
    %625 = vmatpush1.msra.mxu0 %v300
    %626 = vmatprep.subr.mxu0 %v295
    %627 = vmatpush1.msra.mxu0 %v294
    %628 = vmatprep.subr.mxu0 %v289
    %629 = vmatpush1.msra.mxu0 %v288
    %630 = vmatprep.subr.mxu0 %v283
    %631 = vmatpush1.msra.mxu0 %v282
    %632 = vmatprep.subr.mxu0 %v277
    %633 = vmatpush1.msra.mxu0 %v276
    %634 = vmatprep.subr.mxu0 %v271
    %635 = vmatpush1.msra.mxu0 %v270
    %636 = vmatprep.subr.mxu0 %v265
    %637 = vmatpush1.msra.mxu0 %v264
    %638 = vmatprep.subr.mxu0 %v259
    %639 = vmatpush1.msra.mxu0 %v258
    %640 = vmatprep.subr.mxu0 %v253
    %641 = vmatpush1.msra.mxu0 %v252
    %642 = vmatprep.subr.mxu0 %v247
    %643 = vmatpush1.msra.mxu0 %v246
    %644 = vmatprep.subr.mxu0 %v433
    %645 = vmatpush2.msra.mxu0 %v432
    %646 = vmatprep.subr.mxu0 %v427
    %647 = vmatpush2.msra.mxu0 %v426
    %648 = vmatprep.subr.mxu0 %v421
    %649 = vmatpush2.msra.mxu0 %v420
    %650 = vmatprep.subr.mxu0 %v415
    %651 = vmatpush2.msra.mxu0 %v414
    %652 = vmatprep.subr.mxu0 %v409
    %653 = vmatpush2.msra.mxu0 %v408
    %654 = vmatprep.subr.mxu0 %v403
    %655 = vmatpush2.msra.mxu0 %v402
    %656 = vmatprep.subr.mxu0 %v397
    %657 = vmatpush2.msra.mxu0 %v396
    %658 = vmatprep.subr.mxu0 %v391
    %659 = vmatpush2.msra.mxu0 %v390
    %660 = vmatprep.subr.mxu0 %v385
    %661 = vmatpush2.msra.mxu0 %v384
    %662 = vmatprep.subr.mxu0 %v379
    %663 = vmatpush2.msra.mxu0 %v378
    %664 = vmatprep.subr.mxu0 %v373
    %665 = vmatpush2.msra.mxu0 %v372
    %666 = vmatprep.subr.mxu0 %v367
    %667 = vmatpush2.msra.mxu0 %v366
    %668 = vmatprep.subr.mxu0 %v361
    %669 = vmatpush2.msra.mxu0 %v360
    %670 = vmatprep.subr.mxu0 %v355
    %671 = vmatpush2.msra.mxu0 %v354
    %672 = vmatprep.subr.mxu0 %v349
    %673 = vmatpush2.msra.mxu0 %v348
    %674 = vmatprep.subr.mxu0 %v343
    %675 = vmatpush2.msra.mxu0 %v342
    %676 = vmatprep.mubr.f32.mxu0 %v47
    %677 = vmatmul.mubr.f32.gmra.mxu0 %v46
    %v678 = vpop.f32.mrf.mxu0
    %v679 = vadd.f32 %v602, %v678
    %v680 = vpop.f32.mrf.mxu0
    %v681 = vadd.f32 %v604, %v680
    %682 = vmatprep.mubr.f32.mxu0 %v52
    %683 = vmatmul.mubr.f32.gmra.mxu0 %v51
    %v684 = vpop.f32.mrf.mxu0
    %v685 = vadd.f32 %v608, %v684
    %v686 = vpop.f32.mrf.mxu0
    %v687 = vadd.f32 %v610, %v686
    %688 = vdwg.mxu0
    %689 = vmatprep.subr.mxu0 %v529
    %690 = vmatpush1.msra.mxu0 %v528
    %691 = vmatprep.subr.mxu0 %v523
    %692 = vmatpush1.msra.mxu0 %v522
    %693 = vmatprep.subr.mxu0 %v517
    %694 = vmatpush1.msra.mxu0 %v516
    %695 = vmatprep.subr.mxu0 %v511
    %696 = vmatpush1.msra.mxu0 %v510
    %697 = vmatprep.subr.mxu0 %v505
    %698 = vmatpush1.msra.mxu0 %v504
    %699 = vmatprep.subr.mxu0 %v499
    %700 = vmatpush1.msra.mxu0 %v498
    %701 = vmatprep.subr.mxu0 %v493
    %702 = vmatpush1.msra.mxu0 %v492
    %703 = vmatprep.subr.mxu0 %v487
    %704 = vmatpush1.msra.mxu0 %v486
    %705 = vmatprep.subr.mxu0 %v481
    %706 = vmatpush1.msra.mxu0 %v480
    %707 = vmatprep.subr.mxu0 %v475
    %708 = vmatpush1.msra.mxu0 %v474
    %709 = vmatprep.subr.mxu0 %v469
    %710 = vmatpush1.msra.mxu0 %v468
    %711 = vmatprep.subr.mxu0 %v463
    %712 = vmatpush1.msra.mxu0 %v462
    %713 = vmatprep.subr.mxu0 %v457
    %714 = vmatpush1.msra.mxu0 %v456
    %715 = vmatprep.subr.mxu0 %v451
    %716 = vmatpush1.msra.mxu0 %v450
    %717 = vmatprep.subr.mxu0 %v445
    %718 = vmatpush1.msra.mxu0 %v444
    %719 = vmatprep.subr.mxu0 %v439
    %720 = vmatpush1.msra.mxu0 %v438
    %721 = vmatprep.subr.mxu0 0.0
    %722 = vmatpush2.msra.mxu0 0.0
    %723 = vmatprep.subr.mxu0 0.0
    %724 = vmatpush2.msra.mxu0 0.0
    %725 = vmatprep.subr.mxu0 0.0
    %726 = vmatpush2.msra.mxu0 0.0
    %727 = vmatprep.subr.mxu0 0.0
    %728 = vmatpush2.msra.mxu0 0.0
    %729 = vmatprep.subr.mxu0 0.0
    %730 = vmatpush2.msra.mxu0 0.0
    %731 = vmatprep.subr.mxu0 0.0
    %732 = vmatpush2.msra.mxu0 0.0
    %733 = vmatprep.subr.mxu0 0.0
    %734 = vmatpush2.msra.mxu0 0.0
    %735 = vmatprep.subr.mxu0 0.0
    %736 = vmatpush2.msra.mxu0 0.0
    %737 = vmatprep.subr.mxu0 0.0
    %738 = vmatpush2.msra.mxu0 0.0
    %739 = vmatprep.subr.mxu0 0.0
    %740 = vmatpush2.msra.mxu0 0.0
    %741 = vmatprep.subr.mxu0 0.0
    %742 = vmatpush2.msra.mxu0 0.0
    %743 = vmatprep.subr.mxu0 0.0
    %744 = vmatpush2.msra.mxu0 0.0
    %745 = vmatprep.subr.mxu0 0.0
    %746 = vmatpush2.msra.mxu0 0.0
    %747 = vmatprep.subr.mxu0 0.0
    %748 = vmatpush2.msra.mxu0 0.0
    %749 = vmatprep.subr.mxu0 0.0
    %750 = vmatpush2.msra.mxu0 0.0
    %751 = vmatprep.subr.mxu0 0.0
    %752 = vmatpush2.msra.mxu0 0.0
    %753 = vmatprep.mubr.f32.mxu0 0.0
    %754 = vmatmul.mubr.f32.gmra.mxu0 %v48
    %v755 = vpop.f32.mrf.mxu0
    %v756 = vadd.f32 %v679, %v755
    %v757 = vpop.f32.mrf.mxu0
    %v758 = vadd.f32 %v681, %v757
    %759 = vmatprep.mubr.f32.mxu0 0.0
    %760 = vmatmul.mubr.f32.gmra.mxu0 %v53
    %v761 = vpop.f32.mrf.mxu0
    %v762 = vadd.f32 %v685, %v761
    %v763 = vpop.f32.mrf.mxu0
    %v764 = vadd.f32 %v687, %v763
    %765 = vdwg.mxu0
    %766 = vmatprep.subr.mxu0 %v147
    %767 = vmatpush1.msra.mxu0 %v146
    %768 = vmatprep.subr.mxu0 %v141
    %769 = vmatpush1.msra.mxu0 %v140
    %770 = vmatprep.subr.mxu0 %v135
    %771 = vmatpush1.msra.mxu0 %v134
    %772 = vmatprep.subr.mxu0 %v129
    %773 = vmatpush1.msra.mxu0 %v128
    %774 = vmatprep.subr.mxu0 %v123
    %775 = vmatpush1.msra.mxu0 %v122
    %776 = vmatprep.subr.mxu0 %v117
    %777 = vmatpush1.msra.mxu0 %v116
    %778 = vmatprep.subr.mxu0 %v111
    %779 = vmatpush1.msra.mxu0 %v110
    %780 = vmatprep.subr.mxu0 %v105
    %781 = vmatpush1.msra.mxu0 %v104
    %782 = vmatprep.subr.mxu0 %v99
    %783 = vmatpush1.msra.mxu0 %v98
    %784 = vmatprep.subr.mxu0 %v93
    %785 = vmatpush1.msra.mxu0 %v92
    %786 = vmatprep.subr.mxu0 %v87
    %787 = vmatpush1.msra.mxu0 %v86
    %788 = vmatprep.subr.mxu0 %v81
    %789 = vmatpush1.msra.mxu0 %v80
    %790 = vmatprep.subr.mxu0 %v75
    %791 = vmatpush1.msra.mxu0 %v74
    %792 = vmatprep.subr.mxu0 %v69
    %793 = vmatpush1.msra.mxu0 %v68
    %794 = vmatprep.subr.mxu0 %v63
    %795 = vmatpush1.msra.mxu0 %v62
    %796 = vmatprep.subr.mxu0 %v57
    %797 = vmatpush1.msra.mxu0 %v56
    %798 = vmatprep.subr.mxu0 %v243
    %799 = vmatpush2.msra.mxu0 %v242
    %800 = vmatprep.subr.mxu0 %v237
    %801 = vmatpush2.msra.mxu0 %v236
    %802 = vmatprep.subr.mxu0 %v231
    %803 = vmatpush2.msra.mxu0 %v230
    %804 = vmatprep.subr.mxu0 %v225
    %805 = vmatpush2.msra.mxu0 %v224
    %806 = vmatprep.subr.mxu0 %v219
    %807 = vmatpush2.msra.mxu0 %v218
    %808 = vmatprep.subr.mxu0 %v213
    %809 = vmatpush2.msra.mxu0 %v212
    %810 = vmatprep.subr.mxu0 %v207
    %811 = vmatpush2.msra.mxu0 %v206
    %812 = vmatprep.subr.mxu0 %v201
    %813 = vmatpush2.msra.mxu0 %v200
    %814 = vmatprep.subr.mxu0 %v195
    %815 = vmatpush2.msra.mxu0 %v194
    %816 = vmatprep.subr.mxu0 %v189
    %817 = vmatpush2.msra.mxu0 %v188
    %818 = vmatprep.subr.mxu0 %v183
    %819 = vmatpush2.msra.mxu0 %v182
    %820 = vmatprep.subr.mxu0 %v177
    %821 = vmatpush2.msra.mxu0 %v176
    %822 = vmatprep.subr.mxu0 %v171
    %823 = vmatpush2.msra.mxu0 %v170
    %824 = vmatprep.subr.mxu0 %v165
    %825 = vmatpush2.msra.mxu0 %v164
    %826 = vmatprep.subr.mxu0 %v159
    %827 = vmatpush2.msra.mxu0 %v158
    %828 = vmatprep.subr.mxu0 %v153
    %829 = vmatpush2.msra.mxu0 %v152
    %830 = vmatprep.mubr.f32.mxu0 %v45
    %831 = vmatmul.mubr.f32.gmra.mxu0 %v44
    %v832 = vpop.f32.mrf.mxu0
    %v833 = vadd.f32 %v534, %v832
    %v834 = vpop.f32.mrf.mxu0
    %v835 = vadd.f32 %v534, %v834
    %836 = vmatprep.mubr.f32.mxu0 %v50
    %837 = vmatmul.mubr.f32.gmra.mxu0 %v49
    %v838 = vpop.f32.mrf.mxu0
    %v839 = vadd.f32 %v534, %v838
    %v840 = vpop.f32.mrf.mxu0
    %v841 = vadd.f32 %v534, %v840
    %842 = vdwg.mxu0
    %843 = vmatprep.subr.mxu0 %v339
    %844 = vmatpush1.msra.mxu0 %v338
    %845 = vmatprep.subr.mxu0 %v333
    %846 = vmatpush1.msra.mxu0 %v332
    %847 = vmatprep.subr.mxu0 %v327
    %848 = vmatpush1.msra.mxu0 %v326
    %849 = vmatprep.subr.mxu0 %v321
    %850 = vmatpush1.msra.mxu0 %v320
    %851 = vmatprep.subr.mxu0 %v315
    %852 = vmatpush1.msra.mxu0 %v314
    %853 = vmatprep.subr.mxu0 %v309
    %854 = vmatpush1.msra.mxu0 %v308
    %855 = vmatprep.subr.mxu0 %v303
    %856 = vmatpush1.msra.mxu0 %v302
    %857 = vmatprep.subr.mxu0 %v297
    %858 = vmatpush1.msra.mxu0 %v296
    %859 = vmatprep.subr.mxu0 %v291
    %860 = vmatpush1.msra.mxu0 %v290
    %861 = vmatprep.subr.mxu0 %v285
    %862 = vmatpush1.msra.mxu0 %v284
    %863 = vmatprep.subr.mxu0 %v279
    %864 = vmatpush1.msra.mxu0 %v278
    %865 = vmatprep.subr.mxu0 %v273
    %866 = vmatpush1.msra.mxu0 %v272
    %867 = vmatprep.subr.mxu0 %v267
    %868 = vmatpush1.msra.mxu0 %v266
    %869 = vmatprep.subr.mxu0 %v261
    %870 = vmatpush1.msra.mxu0 %v260
    %871 = vmatprep.subr.mxu0 %v255
    %872 = vmatpush1.msra.mxu0 %v254
    %873 = vmatprep.subr.mxu0 %v249
    %874 = vmatpush1.msra.mxu0 %v248
    %875 = vmatprep.subr.mxu0 %v435
    %876 = vmatpush2.msra.mxu0 %v434
    %877 = vmatprep.subr.mxu0 %v429
    %878 = vmatpush2.msra.mxu0 %v428
    %879 = vmatprep.subr.mxu0 %v423
    %880 = vmatpush2.msra.mxu0 %v422
    %881 = vmatprep.subr.mxu0 %v417
    %882 = vmatpush2.msra.mxu0 %v416
    %883 = vmatprep.subr.mxu0 %v411
    %884 = vmatpush2.msra.mxu0 %v410
    %885 = vmatprep.subr.mxu0 %v405
    %886 = vmatpush2.msra.mxu0 %v404
    %887 = vmatprep.subr.mxu0 %v399
    %888 = vmatpush2.msra.mxu0 %v398
    %889 = vmatprep.subr.mxu0 %v393
    %890 = vmatpush2.msra.mxu0 %v392
    %891 = vmatprep.subr.mxu0 %v387
    %892 = vmatpush2.msra.mxu0 %v386
    %893 = vmatprep.subr.mxu0 %v381
    %894 = vmatpush2.msra.mxu0 %v380
    %895 = vmatprep.subr.mxu0 %v375
    %896 = vmatpush2.msra.mxu0 %v374
    %897 = vmatprep.subr.mxu0 %v369
    %898 = vmatpush2.msra.mxu0 %v368
    %899 = vmatprep.subr.mxu0 %v363
    %900 = vmatpush2.msra.mxu0 %v362
    %901 = vmatprep.subr.mxu0 %v357
    %902 = vmatpush2.msra.mxu0 %v356
    %903 = vmatprep.subr.mxu0 %v351
    %904 = vmatpush2.msra.mxu0 %v350
    %905 = vmatprep.subr.mxu0 %v345
    %906 = vmatpush2.msra.mxu0 %v344
    %907 = vmatprep.mubr.f32.mxu0 %v47
    %908 = vmatmul.mubr.f32.gmra.mxu0 %v46
    %v909 = vpop.f32.mrf.mxu0
    %v910 = vadd.f32 %v833, %v909
    %v911 = vpop.f32.mrf.mxu0
    %v912 = vadd.f32 %v835, %v911
    %913 = vmatprep.mubr.f32.mxu0 %v52
    %914 = vmatmul.mubr.f32.gmra.mxu0 %v51
    %v915 = vpop.f32.mrf.mxu0
    %v916 = vadd.f32 %v839, %v915
    %v917 = vpop.f32.mrf.mxu0
    %v918 = vadd.f32 %v841, %v917
    %919 = vdwg.mxu0
    %920 = vmatprep.subr.mxu0 %v531
    %921 = vmatpush1.msra.mxu0 %v530
    %922 = vmatprep.subr.mxu0 %v525
    %923 = vmatpush1.msra.mxu0 %v524
    %924 = vmatprep.subr.mxu0 %v519
    %925 = vmatpush1.msra.mxu0 %v518
    %926 = vmatprep.subr.mxu0 %v513
    %927 = vmatpush1.msra.mxu0 %v512
    %928 = vmatprep.subr.mxu0 %v507
    %929 = vmatpush1.msra.mxu0 %v506
    %930 = vmatprep.subr.mxu0 %v501
    %931 = vmatpush1.msra.mxu0 %v500
    %932 = vmatprep.subr.mxu0 %v495
    %933 = vmatpush1.msra.mxu0 %v494
    %934 = vmatprep.subr.mxu0 %v489
    %935 = vmatpush1.msra.mxu0 %v488
    %936 = vmatprep.subr.mxu0 %v483
    %937 = vmatpush1.msra.mxu0 %v482
    %938 = vmatprep.subr.mxu0 %v477
    %939 = vmatpush1.msra.mxu0 %v476
    %940 = vmatprep.subr.mxu0 %v471
    %941 = vmatpush1.msra.mxu0 %v470
    %942 = vmatprep.subr.mxu0 %v465
    %943 = vmatpush1.msra.mxu0 %v464
    %944 = vmatprep.subr.mxu0 %v459
    %945 = vmatpush1.msra.mxu0 %v458
    %946 = vmatprep.subr.mxu0 %v453
    %947 = vmatpush1.msra.mxu0 %v452
    %948 = vmatprep.subr.mxu0 %v447
    %949 = vmatpush1.msra.mxu0 %v446
    %950 = vmatprep.subr.mxu0 %v441
    %951 = vmatpush1.msra.mxu0 %v440
    %952 = vmatprep.subr.mxu0 0.0
    %953 = vmatpush2.msra.mxu0 0.0
    %954 = vmatprep.subr.mxu0 0.0
    %955 = vmatpush2.msra.mxu0 0.0
    %956 = vmatprep.subr.mxu0 0.0
    %957 = vmatpush2.msra.mxu0 0.0
    %958 = vmatprep.subr.mxu0 0.0
    %959 = vmatpush2.msra.mxu0 0.0
    %960 = vmatprep.subr.mxu0 0.0
    %961 = vmatpush2.msra.mxu0 0.0
    %962 = vmatprep.subr.mxu0 0.0
    %963 = vmatpush2.msra.mxu0 0.0
    %964 = vmatprep.subr.mxu0 0.0
    %965 = vmatpush2.msra.mxu0 0.0
    %966 = vmatprep.subr.mxu0 0.0
    %967 = vmatpush2.msra.mxu0 0.0
    %968 = vmatprep.subr.mxu0 0.0
    %969 = vmatpush2.msra.mxu0 0.0
    %970 = vmatprep.subr.mxu0 0.0
    %971 = vmatpush2.msra.mxu0 0.0
    %972 = vmatprep.subr.mxu0 0.0
    %973 = vmatpush2.msra.mxu0 0.0
    %974 = vmatprep.subr.mxu0 0.0
    %975 = vmatpush2.msra.mxu0 0.0
    %976 = vmatprep.subr.mxu0 0.0
    %977 = vmatpush2.msra.mxu0 0.0
    %978 = vmatprep.subr.mxu0 0.0
    %979 = vmatpush2.msra.mxu0 0.0
    %980 = vmatprep.subr.mxu0 0.0
    %981 = vmatpush2.msra.mxu0 0.0
    %982 = vmatprep.subr.mxu0 0.0
    %983 = vmatpush2.msra.mxu0 0.0
    %984 = vmatprep.mubr.f32.mxu0 0.0
    %985 = vmatmul.mubr.f32.gmra.mxu0 %v48
    %v986 = vpop.f32.mrf.mxu0
    %v987 = vadd.f32 %v910, %v986
    %v988 = vpop.f32.mrf.mxu0
    %v989 = vadd.f32 %v912, %v988
    %990 = vmatprep.mubr.f32.mxu0 0.0
    %991 = vmatmul.mubr.f32.gmra.mxu0 %v53
    %v992 = vpop.f32.mrf.mxu0
    %v993 = vadd.f32 %v916, %v992
    %v994 = vpop.f32.mrf.mxu0
    %v995 = vadd.f32 %v918, %v994
    %996 = vdwg.mxu0
    %997 = vmatprep.subr.mxu0 %v149
    %998 = vmatpush1.msra.mxu0 %v148
    %999 = vmatprep.subr.mxu0 %v143
    %1000 = vmatpush1.msra.mxu0 %v142
    %1001 = vmatprep.subr.mxu0 %v137
    %1002 = vmatpush1.msra.mxu0 %v136
    %1003 = vmatprep.subr.mxu0 %v131
    %1004 = vmatpush1.msra.mxu0 %v130
    %1005 = vmatprep.subr.mxu0 %v125
    %1006 = vmatpush1.msra.mxu0 %v124
    %1007 = vmatprep.subr.mxu0 %v119
    %1008 = vmatpush1.msra.mxu0 %v118
    %1009 = vmatprep.subr.mxu0 %v113
    %1010 = vmatpush1.msra.mxu0 %v112
    %1011 = vmatprep.subr.mxu0 %v107
    %1012 = vmatpush1.msra.mxu0 %v106
    %1013 = vmatprep.subr.mxu0 %v101
    %1014 = vmatpush1.msra.mxu0 %v100
    %1015 = vmatprep.subr.mxu0 %v95
    %1016 = vmatpush1.msra.mxu0 %v94
    %1017 = vmatprep.subr.mxu0 %v89
    %1018 = vmatpush1.msra.mxu0 %v88
    %1019 = vmatprep.subr.mxu0 %v83
    %1020 = vmatpush1.msra.mxu0 %v82
    %1021 = vmatprep.subr.mxu0 %v77
    %1022 = vmatpush1.msra.mxu0 %v76
    %1023 = vmatprep.subr.mxu0 %v71
    %1024 = vmatpush1.msra.mxu0 %v70
    %1025 = vmatprep.subr.mxu0 %v65
    %1026 = vmatpush1.msra.mxu0 %v64
    %1027 = vmatprep.subr.mxu0 %v59
    %1028 = vmatpush1.msra.mxu0 %v58
    %1029 = vmatprep.subr.mxu0 %v245
    %1030 = vmatpush2.msra.mxu0 %v244
    %1031 = vmatprep.subr.mxu0 %v239
    %1032 = vmatpush2.msra.mxu0 %v238
    %1033 = vmatprep.subr.mxu0 %v233
    %1034 = vmatpush2.msra.mxu0 %v232
    %1035 = vmatprep.subr.mxu0 %v227
    %1036 = vmatpush2.msra.mxu0 %v226
    %1037 = vmatprep.subr.mxu0 %v221
    %1038 = vmatpush2.msra.mxu0 %v220
    %1039 = vmatprep.subr.mxu0 %v215
    %1040 = vmatpush2.msra.mxu0 %v214
    %1041 = vmatprep.subr.mxu0 %v209
    %1042 = vmatpush2.msra.mxu0 %v208
    %1043 = vmatprep.subr.mxu0 %v203
    %1044 = vmatpush2.msra.mxu0 %v202
    %1045 = vmatprep.subr.mxu0 %v197
    %1046 = vmatpush2.msra.mxu0 %v196
    %1047 = vmatprep.subr.mxu0 %v191
    %1048 = vmatpush2.msra.mxu0 %v190
    %1049 = vmatprep.subr.mxu0 %v185
    %1050 = vmatpush2.msra.mxu0 %v184
    %1051 = vmatprep.subr.mxu0 %v179
    %1052 = vmatpush2.msra.mxu0 %v178
    %1053 = vmatprep.subr.mxu0 %v173
    %1054 = vmatpush2.msra.mxu0 %v172
    %1055 = vmatprep.subr.mxu0 %v167
    %1056 = vmatpush2.msra.mxu0 %v166
    %1057 = vmatprep.subr.mxu0 %v161
    %1058 = vmatpush2.msra.mxu0 %v160
    %1059 = vmatprep.subr.mxu0 %v155
    %1060 = vmatpush2.msra.mxu0 %v154
    %1061 = vmatprep.mubr.f32.mxu0 %v45
    %1062 = vmatmul.mubr.f32.gmra.mxu0 %v44
    %v1063 = vpop.f32.mrf.mxu0
    %v1064 = vadd.f32 %v534, %v1063
    %v1065 = vpop.f32.mrf.mxu0
    %v1066 = vadd.f32 %v534, %v1065
    %1067 = vmatprep.mubr.f32.mxu0 %v50
    %1068 = vmatmul.mubr.f32.gmra.mxu0 %v49
    %v1069 = vpop.f32.mrf.mxu0
    %v1070 = vadd.f32 %v534, %v1069
    %v1071 = vpop.f32.mrf.mxu0
    %v1072 = vadd.f32 %v534, %v1071
    %1073 = vdwg.mxu0
    %1074 = vmatprep.subr.mxu0 %v341
    %1075 = vmatpush1.msra.mxu0 %v340
    %1076 = vmatprep.subr.mxu0 %v335
    %1077 = vmatpush1.msra.mxu0 %v334
    %1078 = vmatprep.subr.mxu0 %v329
    %1079 = vmatpush1.msra.mxu0 %v328
    %1080 = vmatprep.subr.mxu0 %v323
    %1081 = vmatpush1.msra.mxu0 %v322
    %1082 = vmatprep.subr.mxu0 %v317
    %1083 = vmatpush1.msra.mxu0 %v316
    %1084 = vmatprep.subr.mxu0 %v311
    %1085 = vmatpush1.msra.mxu0 %v310
    %1086 = vmatprep.subr.mxu0 %v305
    %1087 = vmatpush1.msra.mxu0 %v304
    %1088 = vmatprep.subr.mxu0 %v299
    %1089 = vmatpush1.msra.mxu0 %v298
    %1090 = vmatprep.subr.mxu0 %v293
    %1091 = vmatpush1.msra.mxu0 %v292
    %1092 = vmatprep.subr.mxu0 %v287
    %1093 = vmatpush1.msra.mxu0 %v286
    %1094 = vmatprep.subr.mxu0 %v281
    %1095 = vmatpush1.msra.mxu0 %v280
    %1096 = vmatprep.subr.mxu0 %v275
    %1097 = vmatpush1.msra.mxu0 %v274
    %1098 = vmatprep.subr.mxu0 %v269
    %1099 = vmatpush1.msra.mxu0 %v268
    %1100 = vmatprep.subr.mxu0 %v263
    %1101 = vmatpush1.msra.mxu0 %v262
    %1102 = vmatprep.subr.mxu0 %v257
    %1103 = vmatpush1.msra.mxu0 %v256
    %1104 = vmatprep.subr.mxu0 %v251
    %1105 = vmatpush1.msra.mxu0 %v250
    %1106 = vmatprep.subr.mxu0 %v437
    %1107 = vmatpush2.msra.mxu0 %v436
    %1108 = vmatprep.subr.mxu0 %v431
    %1109 = vmatpush2.msra.mxu0 %v430
    %1110 = vmatprep.subr.mxu0 %v425
    %1111 = vmatpush2.msra.mxu0 %v424
    %1112 = vmatprep.subr.mxu0 %v419
    %1113 = vmatpush2.msra.mxu0 %v418
    %1114 = vmatprep.subr.mxu0 %v413
    %1115 = vmatpush2.msra.mxu0 %v412
    %1116 = vmatprep.subr.mxu0 %v407
    %1117 = vmatpush2.msra.mxu0 %v406
    %1118 = vmatprep.subr.mxu0 %v401
    %1119 = vmatpush2.msra.mxu0 %v400
    %1120 = vmatprep.subr.mxu0 %v395
    %1121 = vmatpush2.msra.mxu0 %v394
    %1122 = vmatprep.subr.mxu0 %v389
    %1123 = vmatpush2.msra.mxu0 %v388
    %1124 = vmatprep.subr.mxu0 %v383
    %1125 = vmatpush2.msra.mxu0 %v382
    %1126 = vmatprep.subr.mxu0 %v377
    %1127 = vmatpush2.msra.mxu0 %v376
    %1128 = vmatprep.subr.mxu0 %v371
    %1129 = vmatpush2.msra.mxu0 %v370
    %1130 = vmatprep.subr.mxu0 %v365
    %1131 = vmatpush2.msra.mxu0 %v364
    %1132 = vmatprep.subr.mxu0 %v359
    %1133 = vmatpush2.msra.mxu0 %v358
    %1134 = vmatprep.subr.mxu0 %v353
    %1135 = vmatpush2.msra.mxu0 %v352
    %1136 = vmatprep.subr.mxu0 %v347
    %1137 = vmatpush2.msra.mxu0 %v346
    %1138 = vmatprep.mubr.f32.mxu0 %v47
    %1139 = vmatmul.mubr.f32.gmra.mxu0 %v46
    %v1140 = vpop.f32.mrf.mxu0
    %v1141 = vadd.f32 %v1064, %v1140
    %v1142 = vpop.f32.mrf.mxu0
    %v1143 = vadd.f32 %v1066, %v1142
    %1144 = vmatprep.mubr.f32.mxu0 %v52
    %1145 = vmatmul.mubr.f32.gmra.mxu0 %v51
    %v1146 = vpop.f32.mrf.mxu0
    %v1147 = vadd.f32 %v1070, %v1146
    %v1148 = vpop.f32.mrf.mxu0
    %v1149 = vadd.f32 %v1072, %v1148
    %1150 = vdwg.mxu0
    %1151 = vmatprep.subr.mxu0 %v533
    %1152 = vmatpush1.msra.mxu0 %v532
    %1153 = vmatprep.subr.mxu0 %v527
    %1154 = vmatpush1.msra.mxu0 %v526
    %1155 = vmatprep.subr.mxu0 %v521
    %1156 = vmatpush1.msra.mxu0 %v520
    %1157 = vmatprep.subr.mxu0 %v515
    %1158 = vmatpush1.msra.mxu0 %v514
    %1159 = vmatprep.subr.mxu0 %v509
    %1160 = vmatpush1.msra.mxu0 %v508
    %1161 = vmatprep.subr.mxu0 %v503
    %1162 = vmatpush1.msra.mxu0 %v502
    %1163 = vmatprep.subr.mxu0 %v497
    %1164 = vmatpush1.msra.mxu0 %v496
    %1165 = vmatprep.subr.mxu0 %v491
    %1166 = vmatpush1.msra.mxu0 %v490
    %1167 = vmatprep.subr.mxu0 %v485
    %1168 = vmatpush1.msra.mxu0 %v484
    %1169 = vmatprep.subr.mxu0 %v479
    %1170 = vmatpush1.msra.mxu0 %v478
    %1171 = vmatprep.subr.mxu0 %v473
    %1172 = vmatpush1.msra.mxu0 %v472
    %1173 = vmatprep.subr.mxu0 %v467
    %1174 = vmatpush1.msra.mxu0 %v466
    %1175 = vmatprep.subr.mxu0 %v461
    %1176 = vmatpush1.msra.mxu0 %v460
    %1177 = vmatprep.subr.mxu0 %v455
    %1178 = vmatpush1.msra.mxu0 %v454
    %1179 = vmatprep.subr.mxu0 %v449
    %1180 = vmatpush1.msra.mxu0 %v448
    %1181 = vmatprep.subr.mxu0 %v443
    %1182 = vmatpush1.msra.mxu0 %v442
    %1183 = vmatprep.subr.mxu0 0.0
    %1184 = vmatpush2.msra.mxu0 0.0
    %1185 = vmatprep.subr.mxu0 0.0
    %1186 = vmatpush2.msra.mxu0 0.0
    %1187 = vmatprep.subr.mxu0 0.0
    %1188 = vmatpush2.msra.mxu0 0.0
    %1189 = vmatprep.subr.mxu0 0.0
    %1190 = vmatpush2.msra.mxu0 0.0
    %1191 = vmatprep.subr.mxu0 0.0
    %1192 = vmatpush2.msra.mxu0 0.0
    %1193 = vmatprep.subr.mxu0 0.0
    %1194 = vmatpush2.msra.mxu0 0.0
    %1195 = vmatprep.subr.mxu0 0.0
    %1196 = vmatpush2.msra.mxu0 0.0
    %1197 = vmatprep.subr.mxu0 0.0
    %1198 = vmatpush2.msra.mxu0 0.0
    %1199 = vmatprep.subr.mxu0 0.0
    %1200 = vmatpush2.msra.mxu0 0.0
    %1201 = vmatprep.subr.mxu0 0.0
    %1202 = vmatpush2.msra.mxu0 0.0
    %1203 = vmatprep.subr.mxu0 0.0
    %1204 = vmatpush2.msra.mxu0 0.0
    %1205 = vmatprep.subr.mxu0 0.0
    %1206 = vmatpush2.msra.mxu0 0.0
    %1207 = vmatprep.subr.mxu0 0.0
    %1208 = vmatpush2.msra.mxu0 0.0
    %1209 = vmatprep.subr.mxu0 0.0
    %1210 = vmatpush2.msra.mxu0 0.0
    %1211 = vmatprep.subr.mxu0 0.0
    %1212 = vmatpush2.msra.mxu0 0.0
    %1213 = vmatprep.subr.mxu0 0.0
    %1214 = vmatpush2.msra.mxu0 0.0
    %1215 = vmatprep.mubr.f32.mxu0 0.0
    %1216 = vmatmul.mubr.f32.gmra.mxu0 %v48
    %v1217 = vpop.f32.mrf.mxu0
    %v1218 = vadd.f32 %v1141, %v1217
    %v1219 = vpop.f32.mrf.mxu0
    %v1220 = vadd.f32 %v1143, %v1219
    %1221 = vmatprep.mubr.f32.mxu0 0.0
    %1222 = vmatmul.mubr.f32.gmra.mxu0 %v53
    %v1223 = vpop.f32.mrf.mxu0
    %v1224 = vadd.f32 %v1147, %v1223
    %v1225 = vpop.f32.mrf.mxu0
    %v1226 = vadd.f32 %v1149, %v1225
    %1227 = vdwg.mxu0
    %v1228 = vmax.f32 %v756, 0.0
    %v1229 = vmax.f32 %v758, 0.0
    %v1230 = vmax.f32 %v987, 0.0
    %v1231 = vmax.f32 %v989, 0.0
    %v1232 = vmax.f32 %v1218, 0.0
    %v1233 = vmax.f32 %v1220, 0.0
    %v1234 = vmax.f32 %v762, 0.0
    %v1235 = vmax.f32 %v764, 0.0
    %v1236 = vmax.f32 %v993, 0.0
    %v1237 = vmax.f32 %v995, 0.0
    %v1238 = vmax.f32 %v1224, 0.0
    %v1239 = vmax.f32 %v1226, 0.0
    %v1240 = vld [vmem:[%s2] sm:$0xff]
    %v1241 = vld [vmem:[%s2 + $0x8] sm:$0xff]
    %v1242 = vld [vmem:[%s2 + $0x10] sm:$0xff]
    %v1243 = vld [vmem:[%s2 + $0x18] sm:$0xff]
    %v1244 = vld [vmem:[%s2 + $0x20] sm:$0xff]
    %v1245 = vld [vmem:[%s2 + $0x28] sm:$0xff]
    %v1246 = vld [vmem:[%s2 + $0x30] sm:$0xff]
    %v1247 = vld [vmem:[%s2 + $0x38] sm:$0xff]
    %v1248 = vld [vmem:[%s2 + $0x40] sm:$0xff]
    %v1249 = vld [vmem:[%s2 + $0x48] sm:$0xff]
    %v1250 = vld [vmem:[%s2 + $0x50] sm:$0xff]
    %v1251 = vld [vmem:[%s2 + $0x58] sm:$0xff]
    %v1252 = vld [vmem:[%s2 + $0x60] sm:$0xff]
    %v1253 = vld [vmem:[%s2 + $0x68] sm:$0xff]
    %v1254 = vld [vmem:[%s2 + $0x70] sm:$0xff]
    %v1255 = vld [vmem:[%s2 + $0x78] sm:$0xff]
    %v1256 = vld [vmem:[%s2 + $0x80] sm:$0xff]
    %v1257 = vld [vmem:[%s2 + $0x88] sm:$0xff]
    %v1258 = vld [vmem:[%s2 + $0x90] sm:$0xff]
    %v1259 = vld [vmem:[%s2 + $0x98] sm:$0xff]
    %v1260 = vld [vmem:[%s2 + $0xa0] sm:$0xff]
    %v1261 = vld [vmem:[%s2 + $0xa8] sm:$0xff]
    %v1262 = vld [vmem:[%s2 + $0xb0] sm:$0xff]
    %v1263 = vld [vmem:[%s2 + $0xb8] sm:$0xff]
    %v1264 = vld [vmem:[%s2 + $0xc0] sm:$0xff]
    %v1265 = vld [vmem:[%s2 + $0xc8] sm:$0xff]
    %v1266 = vld [vmem:[%s2 + $0xd0] sm:$0xff]
    %v1267 = vld [vmem:[%s2 + $0xd8] sm:$0xff]
    %v1268 = vld [vmem:[%s2 + $0xe0] sm:$0xff]
    %v1269 = vld [vmem:[%s2 + $0xe8] sm:$0xff]
    %v1270 = vld [vmem:[%s2 + $0xf0] sm:$0xff]
    %v1271 = vld [vmem:[%s2 + $0xf8] sm:$0xff]
    %v1272 = vld [vmem:[%s2 + $0x100] sm:$0xff]
    %v1273 = vld [vmem:[%s2 + $0x108] sm:$0xff]
    %v1274 = vld [vmem:[%s2 + $0x110] sm:$0xff]
    %v1275 = vld [vmem:[%s2 + $0x118] sm:$0xff]
    %v1276 = vld [vmem:[%s2 + $0x120] sm:$0xff]
    %v1277 = vld [vmem:[%s2 + $0x128] sm:$0xff]
    %v1278 = vld [vmem:[%s2 + $0x130] sm:$0xff]
    %v1279 = vld [vmem:[%s2 + $0x138] sm:$0xff]
    %v1280 = vld [vmem:[%s2 + $0x140] sm:$0xff]
    %v1281 = vld [vmem:[%s2 + $0x148] sm:$0xff]
    %v1282 = vld [vmem:[%s2 + $0x150] sm:$0xff]
    %v1283 = vld [vmem:[%s2 + $0x158] sm:$0xff]
    %v1284 = vld [vmem:[%s2 + $0x160] sm:$0xff]
    %v1285 = vld [vmem:[%s2 + $0x168] sm:$0xff]
    %v1286 = vld [vmem:[%s2 + $0x170] sm:$0xff]
    %v1287 = vld [vmem:[%s2 + $0x178] sm:$0xff]
    %v1288 = vld [vmem:[%s2 + $0x180] sm:$0xff]
    %v1289 = vld [vmem:[%s2 + $0x188] sm:$0xff]
    %v1290 = vld [vmem:[%s2 + $0x190] sm:$0xff]
    %v1291 = vld [vmem:[%s2 + $0x198] sm:$0xff]
    %v1292 = vld [vmem:[%s2 + $0x1a0] sm:$0xff]
    %v1293 = vld [vmem:[%s2 + $0x1a8] sm:$0xff]
    %v1294 = vld [vmem:[%s2 + $0x1b0] sm:$0xff]
    %v1295 = vld [vmem:[%s2 + $0x1b8] sm:$0xff]
    %v1296 = vld [vmem:[%s2 + $0x1c0] sm:$0xff]
    %v1297 = vld [vmem:[%s2 + $0x1c8] sm:$0xff]
    %v1298 = vld [vmem:[%s2 + $0x1d0] sm:$0xff]
    %v1299 = vld [vmem:[%s2 + $0x1d8] sm:$0xff]
    %v1300 = vld [vmem:[%s2 + $0x1e0] sm:$0xff]
    %v1301 = vld [vmem:[%s2 + $0x1e8] sm:$0xff]
    %v1302 = vld [vmem:[%s2 + $0x1f0] sm:$0xff]
    %v1303 = vld [vmem:[%s2 + $0x1f8] sm:$0xff]
    %v1304 = vld [vmem:[%s2 + $0x200] sm:$0xff]
    %v1305 = vld [vmem:[%s2 + $0x208] sm:$0xff]
    %v1306 = vld [vmem:[%s2 + $0x210] sm:$0xff]
    %v1307 = vld [vmem:[%s2 + $0x218] sm:$0xff]
    %v1308 = vld [vmem:[%s2 + $0x220] sm:$0xff]
    %v1309 = vld [vmem:[%s2 + $0x228] sm:$0xff]
    %v1310 = vld [vmem:[%s2 + $0x230] sm:$0xff]
    %v1311 = vld [vmem:[%s2 + $0x238] sm:$0xff]
    %v1312 = vld [vmem:[%s2 + $0x240] sm:$0xff]
    %v1313 = vld [vmem:[%s2 + $0x248] sm:$0xff]
    %v1314 = vld [vmem:[%s2 + $0x250] sm:$0xff]
    %v1315 = vld [vmem:[%s2 + $0x258] sm:$0xff]
    %v1316 = vld [vmem:[%s2 + $0x260] sm:$0xff]
    %v1317 = vld [vmem:[%s2 + $0x268] sm:$0xff]
    %v1318 = vld [vmem:[%s2 + $0x270] sm:$0xff]
    %v1319 = vld [vmem:[%s2 + $0x278] sm:$0xff]
    %v1320 = vld [vmem:[%s2 + $0x280] sm:$0xff]
    %v1321 = vld [vmem:[%s2 + $0x288] sm:$0xff]
    %v1322 = vld [vmem:[%s2 + $0x290] sm:$0xff]
    %v1323 = vld [vmem:[%s2 + $0x298] sm:$0xff]
    %v1324 = vld [vmem:[%s2 + $0x2a0] sm:$0xff]
    %v1325 = vld [vmem:[%s2 + $0x2a8] sm:$0xff]
    %v1326 = vld [vmem:[%s2 + $0x2b0] sm:$0xff]
    %v1327 = vld [vmem:[%s2 + $0x2b8] sm:$0xff]
    %v1328 = vld [vmem:[%s2 + $0x2c0] sm:$0xff]
    %v1329 = vld [vmem:[%s2 + $0x2c8] sm:$0xff]
    %v1330 = vld [vmem:[%s2 + $0x2d0] sm:$0xff]
    %v1331 = vld [vmem:[%s2 + $0x2d8] sm:$0xff]
    %v1332 = vld [vmem:[%s2 + $0x2e0] sm:$0xff]
    %v1333 = vld [vmem:[%s2 + $0x2e8] sm:$0xff]
    %v1334 = vld [vmem:[%s2 + $0x2f0] sm:$0xff]
    %v1335 = vld [vmem:[%s2 + $0x2f8] sm:$0xff]
    %v1336 = vld [vmem:[%s2 + $0x300] sm:$0xff]
    %v1337 = vld [vmem:[%s2 + $0x308] sm:$0xff]
    %v1338 = vld [vmem:[%s2 + $0x310] sm:$0xff]
    %v1339 = vld [vmem:[%s2 + $0x318] sm:$0xff]
    %v1340 = vld [vmem:[%s2 + $0x320] sm:$0xff]
    %v1341 = vld [vmem:[%s2 + $0x328] sm:$0xff]
    %v1342 = vld [vmem:[%s2 + $0x330] sm:$0xff]
    %v1343 = vld [vmem:[%s2 + $0x338] sm:$0xff]
    %v1344 = vld [vmem:[%s2 + $0x340] sm:$0xff]
    %v1345 = vld [vmem:[%s2 + $0x348] sm:$0xff]
    %v1346 = vld [vmem:[%s2 + $0x350] sm:$0xff]
    %v1347 = vld [vmem:[%s2 + $0x358] sm:$0xff]
    %v1348 = vld [vmem:[%s2 + $0x360] sm:$0xff]
    %v1349 = vld [vmem:[%s2 + $0x368] sm:$0xff]
    %v1350 = vld [vmem:[%s2 + $0x370] sm:$0xff]
    %v1351 = vld [vmem:[%s2 + $0x378] sm:$0xff]
    %v1352 = vld [vmem:[%s2 + $0x380] sm:$0xff]
    %v1353 = vld [vmem:[%s2 + $0x388] sm:$0xff]
    %v1354 = vld [vmem:[%s2 + $0x390] sm:$0xff]
    %v1355 = vld [vmem:[%s2 + $0x398] sm:$0xff]
    %v1356 = vld [vmem:[%s2 + $0x3a0] sm:$0xff]
    %v1357 = vld [vmem:[%s2 + $0x3a8] sm:$0xff]
    %v1358 = vld [vmem:[%s2 + $0x3b0] sm:$0xff]
    %v1359 = vld [vmem:[%s2 + $0x3b8] sm:$0xff]
    %v1360 = vld [vmem:[%s2 + $0x3c0] sm:$0xff]
    %v1361 = vld [vmem:[%s2 + $0x3c8] sm:$0xff]
    %v1362 = vld [vmem:[%s2 + $0x3d0] sm:$0xff]
    %v1363 = vld [vmem:[%s2 + $0x3d8] sm:$0xff]
    %v1364 = vld [vmem:[%s2 + $0x3e0] sm:$0xff]
    %v1365 = vld [vmem:[%s2 + $0x3e8] sm:$0xff]
    %v1366 = vld [vmem:[%s2 + $0x3f0] sm:$0xff]
    %v1367 = vld [vmem:[%s2 + $0x3f8] sm:$0xff]
    %v1368 = vld [vmem:[%s2 + $0x400] sm:$0xff]
    %v1369 = vld [vmem:[%s2 + $0x408] sm:$0xff]
    %v1370 = vld [vmem:[%s2 + $0x410] sm:$0xff]
    %v1371 = vld [vmem:[%s2 + $0x418] sm:$0xff]
    %v1372 = vld [vmem:[%s2 + $0x420] sm:$0xff]
    %v1373 = vld [vmem:[%s2 + $0x428] sm:$0xff]
    %v1374 = vld [vmem:[%s2 + $0x430] sm:$0xff]
    %v1375 = vld [vmem:[%s2 + $0x438] sm:$0xff]
    %v1376 = vld [vmem:[%s2 + $0x440] sm:$0xff]
    %v1377 = vld [vmem:[%s2 + $0x448] sm:$0xff]
    %v1378 = vld [vmem:[%s2 + $0x450] sm:$0xff]
    %v1379 = vld [vmem:[%s2 + $0x458] sm:$0xff]
    %v1380 = vld [vmem:[%s2 + $0x460] sm:$0xff]
    %v1381 = vld [vmem:[%s2 + $0x468] sm:$0xff]
    %v1382 = vld [vmem:[%s2 + $0x470] sm:$0xff]
    %v1383 = vld [vmem:[%s2 + $0x478] sm:$0xff]
    %v1384 = vld [vmem:[%s2 + $0x480] sm:$0xff]
    %v1385 = vld [vmem:[%s2 + $0x488] sm:$0xff]
    %v1386 = vld [vmem:[%s2 + $0x490] sm:$0xff]
    %v1387 = vld [vmem:[%s2 + $0x498] sm:$0xff]
    %v1388 = vld [vmem:[%s2 + $0x4a0] sm:$0xff]
    %v1389 = vld [vmem:[%s2 + $0x4a8] sm:$0xff]
    %v1390 = vld [vmem:[%s2 + $0x4b0] sm:$0xff]
    %v1391 = vld [vmem:[%s2 + $0x4b8] sm:$0xff]
    %v1392 = vld [vmem:[%s2 + $0x4c0] sm:$0xff]
    %v1393 = vld [vmem:[%s2 + $0x4c8] sm:$0xff]
    %v1394 = vld [vmem:[%s2 + $0x4d0] sm:$0xff]
    %v1395 = vld [vmem:[%s2 + $0x4d8] sm:$0xff]
    %v1396 = vld [vmem:[%s2 + $0x4e0] sm:$0xff]
    %v1397 = vld [vmem:[%s2 + $0x4e8] sm:$0xff]
    %v1398 = vld [vmem:[%s2 + $0x4f0] sm:$0xff]
    %v1399 = vld [vmem:[%s2 + $0x4f8] sm:$0xff]
    %v1400 = vld [vmem:[%s2 + $0x500] sm:$0xff]
    %v1401 = vld [vmem:[%s2 + $0x508] sm:$0xff]
    %v1402 = vld [vmem:[%s2 + $0x510] sm:$0xff]
    %v1403 = vld [vmem:[%s2 + $0x518] sm:$0xff]
    %v1404 = vld [vmem:[%s2 + $0x520] sm:$0xff]
    %v1405 = vld [vmem:[%s2 + $0x528] sm:$0xff]
    %v1406 = vld [vmem:[%s2 + $0x530] sm:$0xff]
    %v1407 = vld [vmem:[%s2 + $0x538] sm:$0xff]
    %v1408 = vld [vmem:[%s2 + $0x540] sm:$0xff]
    %v1409 = vld [vmem:[%s2 + $0x548] sm:$0xff]
    %v1410 = vld [vmem:[%s2 + $0x550] sm:$0xff]
    %v1411 = vld [vmem:[%s2 + $0x558] sm:$0xff]
    %v1412 = vld [vmem:[%s2 + $0x560] sm:$0xff]
    %v1413 = vld [vmem:[%s2 + $0x568] sm:$0xff]
    %v1414 = vld [vmem:[%s2 + $0x570] sm:$0xff]
    %v1415 = vld [vmem:[%s2 + $0x578] sm:$0xff]
    %v1416 = vld [vmem:[%s2 + $0x580] sm:$0xff]
    %v1417 = vld [vmem:[%s2 + $0x588] sm:$0xff]
    %v1418 = vld [vmem:[%s2 + $0x590] sm:$0xff]
    %v1419 = vld [vmem:[%s2 + $0x598] sm:$0xff]
    %v1420 = vld [vmem:[%s2 + $0x5a0] sm:$0xff]
    %v1421 = vld [vmem:[%s2 + $0x5a8] sm:$0xff]
    %v1422 = vld [vmem:[%s2 + $0x5b0] sm:$0xff]
    %v1423 = vld [vmem:[%s2 + $0x5b8] sm:$0xff]
    %v1424 = vld [vmem:[%s2 + $0x5c0] sm:$0xff]
    %v1425 = vld [vmem:[%s2 + $0x5c8] sm:$0xff]
    %v1426 = vld [vmem:[%s2 + $0x5d0] sm:$0xff]
    %v1427 = vld [vmem:[%s2 + $0x5d8] sm:$0xff]
    %v1428 = vld [vmem:[%s2 + $0x5e0] sm:$0xff]
    %v1429 = vld [vmem:[%s2 + $0x5e8] sm:$0xff]
    %v1430 = vld [vmem:[%s2 + $0x5f0] sm:$0xff]
    %v1431 = vld [vmem:[%s2 + $0x5f8] sm:$0xff]
    %1432 = vmatprep.subr.mxu0 %v1271
    %1433 = vmatpush1.msra.mxu0 %v1270
    %1434 = vmatprep.subr.mxu0 %v1269
    %1435 = vmatpush1.msra.mxu0 %v1268
    %1436 = vmatprep.subr.mxu0 %v1267
    %1437 = vmatpush1.msra.mxu0 %v1266
    %1438 = vmatprep.subr.mxu0 %v1265
    %1439 = vmatpush1.msra.mxu0 %v1264
    %1440 = vmatprep.subr.mxu0 %v1263
    %1441 = vmatpush1.msra.mxu0 %v1262
    %1442 = vmatprep.subr.mxu0 %v1261
    %1443 = vmatpush1.msra.mxu0 %v1260
    %1444 = vmatprep.subr.mxu0 %v1259
    %1445 = vmatpush1.msra.mxu0 %v1258
    %1446 = vmatprep.subr.mxu0 %v1257
    %1447 = vmatpush1.msra.mxu0 %v1256
    %1448 = vmatprep.subr.mxu0 %v1255
    %1449 = vmatpush1.msra.mxu0 %v1254
    %1450 = vmatprep.subr.mxu0 %v1253
    %1451 = vmatpush1.msra.mxu0 %v1252
    %1452 = vmatprep.subr.mxu0 %v1251
    %1453 = vmatpush1.msra.mxu0 %v1250
    %1454 = vmatprep.subr.mxu0 %v1249
    %1455 = vmatpush1.msra.mxu0 %v1248
    %1456 = vmatprep.subr.mxu0 %v1247
    %1457 = vmatpush1.msra.mxu0 %v1246
    %1458 = vmatprep.subr.mxu0 %v1245
    %1459 = vmatpush1.msra.mxu0 %v1244
    %1460 = vmatprep.subr.mxu0 %v1243
    %1461 = vmatpush1.msra.mxu0 %v1242
    %1462 = vmatprep.subr.mxu0 %v1241
    %1463 = vmatpush1.msra.mxu0 %v1240
    %1464 = vmatprep.subr.mxu0 %v1303
    %1465 = vmatpush2.msra.mxu0 %v1302
    %1466 = vmatprep.subr.mxu0 %v1301
    %1467 = vmatpush2.msra.mxu0 %v1300
    %1468 = vmatprep.subr.mxu0 %v1299
    %1469 = vmatpush2.msra.mxu0 %v1298
    %1470 = vmatprep.subr.mxu0 %v1297
    %1471 = vmatpush2.msra.mxu0 %v1296
    %1472 = vmatprep.subr.mxu0 %v1295
    %1473 = vmatpush2.msra.mxu0 %v1294
    %1474 = vmatprep.subr.mxu0 %v1293
    %1475 = vmatpush2.msra.mxu0 %v1292
    %1476 = vmatprep.subr.mxu0 %v1291
    %1477 = vmatpush2.msra.mxu0 %v1290
    %1478 = vmatprep.subr.mxu0 %v1289
    %1479 = vmatpush2.msra.mxu0 %v1288
    %1480 = vmatprep.subr.mxu0 %v1287
    %1481 = vmatpush2.msra.mxu0 %v1286
    %1482 = vmatprep.subr.mxu0 %v1285
    %1483 = vmatpush2.msra.mxu0 %v1284
    %1484 = vmatprep.subr.mxu0 %v1283
    %1485 = vmatpush2.msra.mxu0 %v1282
    %1486 = vmatprep.subr.mxu0 %v1281
    %1487 = vmatpush2.msra.mxu0 %v1280
    %1488 = vmatprep.subr.mxu0 %v1279
    %1489 = vmatpush2.msra.mxu0 %v1278
    %1490 = vmatprep.subr.mxu0 %v1277
    %1491 = vmatpush2.msra.mxu0 %v1276
    %1492 = vmatprep.subr.mxu0 %v1275
    %1493 = vmatpush2.msra.mxu0 %v1274
    %1494 = vmatprep.subr.mxu0 %v1273
    %1495 = vmatpush2.msra.mxu0 %v1272
    %1496 = vmatprep.mubr.f32.mxu0 %v1229
    %1497 = vmatmul.mubr.f32.gmra.mxu0 %v1228
    %v1498 = vpop.f32.mrf.mxu0
    %v1499 = vadd.f32 0.0, %v1498
    %v1500 = vpop.f32.mrf.mxu0
    %v1501 = vadd.f32 0.0, %v1500
    %1502 = vmatprep.mubr.f32.mxu0 %v1235
    %1503 = vmatmul.mubr.f32.gmra.mxu0 %v1234
    %v1504 = vpop.f32.mrf.mxu0
    %v1505 = vadd.f32 0.0, %v1504
    %v1506 = vpop.f32.mrf.mxu0
    %v1507 = vadd.f32 0.0, %v1506
    %1508 = vdwg.mxu0
    %1509 = vmatprep.subr.mxu0 %v1335
    %1510 = vmatpush1.msra.mxu0 %v1334
    %1511 = vmatprep.subr.mxu0 %v1333
    %1512 = vmatpush1.msra.mxu0 %v1332
    %1513 = vmatprep.subr.mxu0 %v1331
    %1514 = vmatpush1.msra.mxu0 %v1330
    %1515 = vmatprep.subr.mxu0 %v1329
    %1516 = vmatpush1.msra.mxu0 %v1328
    %1517 = vmatprep.subr.mxu0 %v1327
    %1518 = vmatpush1.msra.mxu0 %v1326
    %1519 = vmatprep.subr.mxu0 %v1325
    %1520 = vmatpush1.msra.mxu0 %v1324
    %1521 = vmatprep.subr.mxu0 %v1323
    %1522 = vmatpush1.msra.mxu0 %v1322
    %1523 = vmatprep.subr.mxu0 %v1321
    %1524 = vmatpush1.msra.mxu0 %v1320
    %1525 = vmatprep.subr.mxu0 %v1319
    %1526 = vmatpush1.msra.mxu0 %v1318
    %1527 = vmatprep.subr.mxu0 %v1317
    %1528 = vmatpush1.msra.mxu0 %v1316
    %1529 = vmatprep.subr.mxu0 %v1315
    %1530 = vmatpush1.msra.mxu0 %v1314
    %1531 = vmatprep.subr.mxu0 %v1313
    %1532 = vmatpush1.msra.mxu0 %v1312
    %1533 = vmatprep.subr.mxu0 %v1311
    %1534 = vmatpush1.msra.mxu0 %v1310
    %1535 = vmatprep.subr.mxu0 %v1309
    %1536 = vmatpush1.msra.mxu0 %v1308
    %1537 = vmatprep.subr.mxu0 %v1307
    %1538 = vmatpush1.msra.mxu0 %v1306
    %1539 = vmatprep.subr.mxu0 %v1305
    %1540 = vmatpush1.msra.mxu0 %v1304
    %1541 = vmatprep.subr.mxu0 %v1367
    %1542 = vmatpush2.msra.mxu0 %v1366
    %1543 = vmatprep.subr.mxu0 %v1365
    %1544 = vmatpush2.msra.mxu0 %v1364
    %1545 = vmatprep.subr.mxu0 %v1363
    %1546 = vmatpush2.msra.mxu0 %v1362
    %1547 = vmatprep.subr.mxu0 %v1361
    %1548 = vmatpush2.msra.mxu0 %v1360
    %1549 = vmatprep.subr.mxu0 %v1359
    %1550 = vmatpush2.msra.mxu0 %v1358
    %1551 = vmatprep.subr.mxu0 %v1357
    %1552 = vmatpush2.msra.mxu0 %v1356
    %1553 = vmatprep.subr.mxu0 %v1355
    %1554 = vmatpush2.msra.mxu0 %v1354
    %1555 = vmatprep.subr.mxu0 %v1353
    %1556 = vmatpush2.msra.mxu0 %v1352
    %1557 = vmatprep.subr.mxu0 %v1351
    %1558 = vmatpush2.msra.mxu0 %v1350
    %1559 = vmatprep.subr.mxu0 %v1349
    %1560 = vmatpush2.msra.mxu0 %v1348
    %1561 = vmatprep.subr.mxu0 %v1347
    %1562 = vmatpush2.msra.mxu0 %v1346
    %1563 = vmatprep.subr.mxu0 %v1345
    %1564 = vmatpush2.msra.mxu0 %v1344
    %1565 = vmatprep.subr.mxu0 %v1343
    %1566 = vmatpush2.msra.mxu0 %v1342
    %1567 = vmatprep.subr.mxu0 %v1341
    %1568 = vmatpush2.msra.mxu0 %v1340
    %1569 = vmatprep.subr.mxu0 %v1339
    %1570 = vmatpush2.msra.mxu0 %v1338
    %1571 = vmatprep.subr.mxu0 %v1337
    %1572 = vmatpush2.msra.mxu0 %v1336
    %1573 = vmatprep.mubr.f32.mxu0 %v1231
    %1574 = vmatmul.mubr.f32.gmra.mxu0 %v1230
    %v1575 = vpop.f32.mrf.mxu0
    %v1576 = vadd.f32 %v1499, %v1575
    %v1577 = vpop.f32.mrf.mxu0
    %v1578 = vadd.f32 %v1501, %v1577
    %1579 = vmatprep.mubr.f32.mxu0 %v1237
    %1580 = vmatmul.mubr.f32.gmra.mxu0 %v1236
    %v1581 = vpop.f32.mrf.mxu0
    %v1582 = vadd.f32 %v1505, %v1581
    %v1583 = vpop.f32.mrf.mxu0
    %v1584 = vadd.f32 %v1507, %v1583
    %1585 = vdwg.mxu0
    %1586 = vmatprep.subr.mxu0 %v1399
    %1587 = vmatpush1.msra.mxu0 %v1398
    %1588 = vmatprep.subr.mxu0 %v1397
    %1589 = vmatpush1.msra.mxu0 %v1396
    %1590 = vmatprep.subr.mxu0 %v1395
    %1591 = vmatpush1.msra.mxu0 %v1394
    %1592 = vmatprep.subr.mxu0 %v1393
    %1593 = vmatpush1.msra.mxu0 %v1392
    %1594 = vmatprep.subr.mxu0 %v1391
    %1595 = vmatpush1.msra.mxu0 %v1390
    %1596 = vmatprep.subr.mxu0 %v1389
    %1597 = vmatpush1.msra.mxu0 %v1388
    %1598 = vmatprep.subr.mxu0 %v1387
    %1599 = vmatpush1.msra.mxu0 %v1386
    %1600 = vmatprep.subr.mxu0 %v1385
    %1601 = vmatpush1.msra.mxu0 %v1384
    %1602 = vmatprep.subr.mxu0 %v1383
    %1603 = vmatpush1.msra.mxu0 %v1382
    %1604 = vmatprep.subr.mxu0 %v1381
    %1605 = vmatpush1.msra.mxu0 %v1380
    %1606 = vmatprep.subr.mxu0 %v1379
    %1607 = vmatpush1.msra.mxu0 %v1378
    %1608 = vmatprep.subr.mxu0 %v1377
    %1609 = vmatpush1.msra.mxu0 %v1376
    %1610 = vmatprep.subr.mxu0 %v1375
    %1611 = vmatpush1.msra.mxu0 %v1374
    %1612 = vmatprep.subr.mxu0 %v1373
    %1613 = vmatpush1.msra.mxu0 %v1372
    %1614 = vmatprep.subr.mxu0 %v1371
    %1615 = vmatpush1.msra.mxu0 %v1370
    %1616 = vmatprep.subr.mxu0 %v1369
    %1617 = vmatpush1.msra.mxu0 %v1368
    %1618 = vmatprep.subr.mxu0 %v1431
    %1619 = vmatpush2.msra.mxu0 %v1430
    %1620 = vmatprep.subr.mxu0 %v1429
    %1621 = vmatpush2.msra.mxu0 %v1428
    %1622 = vmatprep.subr.mxu0 %v1427
    %1623 = vmatpush2.msra.mxu0 %v1426
    %1624 = vmatprep.subr.mxu0 %v1425
    %1625 = vmatpush2.msra.mxu0 %v1424
    %1626 = vmatprep.subr.mxu0 %v1423
    %1627 = vmatpush2.msra.mxu0 %v1422
    %1628 = vmatprep.subr.mxu0 %v1421
    %1629 = vmatpush2.msra.mxu0 %v1420
    %1630 = vmatprep.subr.mxu0 %v1419
    %1631 = vmatpush2.msra.mxu0 %v1418
    %1632 = vmatprep.subr.mxu0 %v1417
    %1633 = vmatpush2.msra.mxu0 %v1416
    %1634 = vmatprep.subr.mxu0 %v1415
    %1635 = vmatpush2.msra.mxu0 %v1414
    %1636 = vmatprep.subr.mxu0 %v1413
    %1637 = vmatpush2.msra.mxu0 %v1412
    %1638 = vmatprep.subr.mxu0 %v1411
    %1639 = vmatpush2.msra.mxu0 %v1410
    %1640 = vmatprep.subr.mxu0 %v1409
    %1641 = vmatpush2.msra.mxu0 %v1408
    %1642 = vmatprep.subr.mxu0 %v1407
    %1643 = vmatpush2.msra.mxu0 %v1406
    %1644 = vmatprep.subr.mxu0 %v1405
    %1645 = vmatpush2.msra.mxu0 %v1404
    %1646 = vmatprep.subr.mxu0 %v1403
    %1647 = vmatpush2.msra.mxu0 %v1402
    %1648 = vmatprep.subr.mxu0 %v1401
    %1649 = vmatpush2.msra.mxu0 %v1400
    %1650 = vmatprep.mubr.f32.mxu0 %v1233
    %1651 = vmatmul.mubr.f32.gmra.mxu0 %v1232
    %v1652 = vpop.f32.mrf.mxu0
    %v1653 = vadd.f32 %v1576, %v1652
    %v1654 = vpop.f32.mrf.mxu0
    %v1655 = vadd.f32 %v1578, %v1654
    %1656 = vmatprep.mubr.f32.mxu0 %v1239
    %1657 = vmatmul.mubr.f32.gmra.mxu0 %v1238
    %v1658 = vpop.f32.mrf.mxu0
    %v1659 = vadd.f32 %v1582, %v1658
    %v1660 = vpop.f32.mrf.mxu0
    %v1661 = vadd.f32 %v1584, %v1660
    %1662 = vdwg.mxu0
    %s1663 = scalar_lea.vmem %s2, 1536
    %v1664 = vld [vmem:[%s1663] sm:$0xff]
    %v1665 = vld [vmem:[%s1663 + $0x8] sm:$0xff]
    %v1666 = vld [vmem:[%s1663 + $0x10] sm:$0xff]
    %v1667 = vld [vmem:[%s1663 + $0x18] sm:$0xff]
    %v1668 = vld [vmem:[%s1663 + $0x20] sm:$0xff]
    %v1669 = vld [vmem:[%s1663 + $0x28] sm:$0xff]
    %v1670 = vld [vmem:[%s1663 + $0x30] sm:$0xff]
    %v1671 = vld [vmem:[%s1663 + $0x38] sm:$0xff]
    %v1672 = vld [vmem:[%s1663 + $0x40] sm:$0xff]
    %v1673 = vld [vmem:[%s1663 + $0x48] sm:$0xff]
    %v1674 = vld [vmem:[%s1663 + $0x50] sm:$0xff]
    %v1675 = vld [vmem:[%s1663 + $0x58] sm:$0xff]
    %v1676 = vld [vmem:[%s1663 + $0x60] sm:$0xff]
    %v1677 = vld [vmem:[%s1663 + $0x68] sm:$0xff]
    %v1678 = vld [vmem:[%s1663 + $0x70] sm:$0xff]
    %v1679 = vld [vmem:[%s1663 + $0x78] sm:$0xff]
    %v1680 = vld [vmem:[%s1663 + $0x80] sm:$0xff]
    %v1681 = vld [vmem:[%s1663 + $0x88] sm:$0xff]
    %v1682 = vld [vmem:[%s1663 + $0x90] sm:$0xff]
    %v1683 = vld [vmem:[%s1663 + $0x98] sm:$0xff]
    %v1684 = vld [vmem:[%s1663 + $0xa0] sm:$0xff]
    %v1685 = vld [vmem:[%s1663 + $0xa8] sm:$0xff]
    %v1686 = vld [vmem:[%s1663 + $0xb0] sm:$0xff]
    %v1687 = vld [vmem:[%s1663 + $0xb8] sm:$0xff]
    %v1688 = vld [vmem:[%s1663 + $0xc0] sm:$0xff]
    %v1689 = vld [vmem:[%s1663 + $0xc8] sm:$0xff]
    %v1690 = vld [vmem:[%s1663 + $0xd0] sm:$0xff]
    %v1691 = vld [vmem:[%s1663 + $0xd8] sm:$0xff]
    %v1692 = vld [vmem:[%s1663 + $0xe0] sm:$0xff]
    %v1693 = vld [vmem:[%s1663 + $0xe8] sm:$0xff]
    %v1694 = vld [vmem:[%s1663 + $0xf0] sm:$0xff]
    %v1695 = vld [vmem:[%s1663 + $0xf8] sm:$0xff]
    %v1696 = vld [vmem:[%s1663 + $0x100] sm:$0xff]
    %v1697 = vld [vmem:[%s1663 + $0x108] sm:$0xff]
    %v1698 = vld [vmem:[%s1663 + $0x110] sm:$0xff]
    %v1699 = vld [vmem:[%s1663 + $0x118] sm:$0xff]
    %v1700 = vld [vmem:[%s1663 + $0x120] sm:$0xff]
    %v1701 = vld [vmem:[%s1663 + $0x128] sm:$0xff]
    %v1702 = vld [vmem:[%s1663 + $0x130] sm:$0xff]
    %v1703 = vld [vmem:[%s1663 + $0x138] sm:$0xff]
    %v1704 = vld [vmem:[%s1663 + $0x140] sm:$0xff]
    %v1705 = vld [vmem:[%s1663 + $0x148] sm:$0xff]
    %v1706 = vld [vmem:[%s1663 + $0x150] sm:$0xff]
    %v1707 = vld [vmem:[%s1663 + $0x158] sm:$0xff]
    %v1708 = vld [vmem:[%s1663 + $0x160] sm:$0xff]
    %v1709 = vld [vmem:[%s1663 + $0x168] sm:$0xff]
    %v1710 = vld [vmem:[%s1663 + $0x170] sm:$0xff]
    %v1711 = vld [vmem:[%s1663 + $0x178] sm:$0xff]
    %v1712 = vld [vmem:[%s1663 + $0x180] sm:$0xff]
    %v1713 = vld [vmem:[%s1663 + $0x188] sm:$0xff]
    %v1714 = vld [vmem:[%s1663 + $0x190] sm:$0xff]
    %v1715 = vld [vmem:[%s1663 + $0x198] sm:$0xff]
    %v1716 = vld [vmem:[%s1663 + $0x1a0] sm:$0xff]
    %v1717 = vld [vmem:[%s1663 + $0x1a8] sm:$0xff]
    %v1718 = vld [vmem:[%s1663 + $0x1b0] sm:$0xff]
    %v1719 = vld [vmem:[%s1663 + $0x1b8] sm:$0xff]
    %v1720 = vld [vmem:[%s1663 + $0x1c0] sm:$0xff]
    %v1721 = vld [vmem:[%s1663 + $0x1c8] sm:$0xff]
    %v1722 = vld [vmem:[%s1663 + $0x1d0] sm:$0xff]
    %v1723 = vld [vmem:[%s1663 + $0x1d8] sm:$0xff]
    %v1724 = vld [vmem:[%s1663 + $0x1e0] sm:$0xff]
    %v1725 = vld [vmem:[%s1663 + $0x1e8] sm:$0xff]
    %v1726 = vld [vmem:[%s1663 + $0x1f0] sm:$0xff]
    %v1727 = vld [vmem:[%s1663 + $0x1f8] sm:$0xff]
    %v1728 = vld [vmem:[%s1663 + $0x200] sm:$0xff]
    %v1729 = vld [vmem:[%s1663 + $0x208] sm:$0xff]
    %v1730 = vld [vmem:[%s1663 + $0x210] sm:$0xff]
    %v1731 = vld [vmem:[%s1663 + $0x218] sm:$0xff]
    %v1732 = vld [vmem:[%s1663 + $0x220] sm:$0xff]
    %v1733 = vld [vmem:[%s1663 + $0x228] sm:$0xff]
    %v1734 = vld [vmem:[%s1663 + $0x230] sm:$0xff]
    %v1735 = vld [vmem:[%s1663 + $0x238] sm:$0xff]
    %v1736 = vld [vmem:[%s1663 + $0x240] sm:$0xff]
    %v1737 = vld [vmem:[%s1663 + $0x248] sm:$0xff]
    %v1738 = vld [vmem:[%s1663 + $0x250] sm:$0xff]
    %v1739 = vld [vmem:[%s1663 + $0x258] sm:$0xff]
    %v1740 = vld [vmem:[%s1663 + $0x260] sm:$0xff]
    %v1741 = vld [vmem:[%s1663 + $0x268] sm:$0xff]
    %v1742 = vld [vmem:[%s1663 + $0x270] sm:$0xff]
    %v1743 = vld [vmem:[%s1663 + $0x278] sm:$0xff]
    %v1744 = vld [vmem:[%s1663 + $0x280] sm:$0xff]
    %v1745 = vld [vmem:[%s1663 + $0x288] sm:$0xff]
    %v1746 = vld [vmem:[%s1663 + $0x290] sm:$0xff]
    %v1747 = vld [vmem:[%s1663 + $0x298] sm:$0xff]
    %v1748 = vld [vmem:[%s1663 + $0x2a0] sm:$0xff]
    %v1749 = vld [vmem:[%s1663 + $0x2a8] sm:$0xff]
    %v1750 = vld [vmem:[%s1663 + $0x2b0] sm:$0xff]
    %v1751 = vld [vmem:[%s1663 + $0x2b8] sm:$0xff]
    %v1752 = vld [vmem:[%s1663 + $0x2c0] sm:$0xff]
    %v1753 = vld [vmem:[%s1663 + $0x2c8] sm:$0xff]
    %v1754 = vld [vmem:[%s1663 + $0x2d0] sm:$0xff]
    %v1755 = vld [vmem:[%s1663 + $0x2d8] sm:$0xff]
    %v1756 = vld [vmem:[%s1663 + $0x2e0] sm:$0xff]
    %v1757 = vld [vmem:[%s1663 + $0x2e8] sm:$0xff]
    %v1758 = vld [vmem:[%s1663 + $0x2f0] sm:$0xff]
    %v1759 = vld [vmem:[%s1663 + $0x2f8] sm:$0xff]
    %v1760 = vld [vmem:[%s1663 + $0x300] sm:$0xff]
    %v1761 = vld [vmem:[%s1663 + $0x308] sm:$0xff]
    %v1762 = vld [vmem:[%s1663 + $0x310] sm:$0xff]
    %v1763 = vld [vmem:[%s1663 + $0x318] sm:$0xff]
    %v1764 = vld [vmem:[%s1663 + $0x320] sm:$0xff]
    %v1765 = vld [vmem:[%s1663 + $0x328] sm:$0xff]
    %v1766 = vld [vmem:[%s1663 + $0x330] sm:$0xff]
    %v1767 = vld [vmem:[%s1663 + $0x338] sm:$0xff]
    %v1768 = vld [vmem:[%s1663 + $0x340] sm:$0xff]
    %v1769 = vld [vmem:[%s1663 + $0x348] sm:$0xff]
    %v1770 = vld [vmem:[%s1663 + $0x350] sm:$0xff]
    %v1771 = vld [vmem:[%s1663 + $0x358] sm:$0xff]
    %v1772 = vld [vmem:[%s1663 + $0x360] sm:$0xff]
    %v1773 = vld [vmem:[%s1663 + $0x368] sm:$0xff]
    %v1774 = vld [vmem:[%s1663 + $0x370] sm:$0xff]
    %v1775 = vld [vmem:[%s1663 + $0x378] sm:$0xff]
    %v1776 = vld [vmem:[%s1663 + $0x380] sm:$0xff]
    %v1777 = vld [vmem:[%s1663 + $0x388] sm:$0xff]
    %v1778 = vld [vmem:[%s1663 + $0x390] sm:$0xff]
    %v1779 = vld [vmem:[%s1663 + $0x398] sm:$0xff]
    %v1780 = vld [vmem:[%s1663 + $0x3a0] sm:$0xff]
    %v1781 = vld [vmem:[%s1663 + $0x3a8] sm:$0xff]
    %v1782 = vld [vmem:[%s1663 + $0x3b0] sm:$0xff]
    %v1783 = vld [vmem:[%s1663 + $0x3b8] sm:$0xff]
    %v1784 = vld [vmem:[%s1663 + $0x3c0] sm:$0xff]
    %v1785 = vld [vmem:[%s1663 + $0x3c8] sm:$0xff]
    %v1786 = vld [vmem:[%s1663 + $0x3d0] sm:$0xff]
    %v1787 = vld [vmem:[%s1663 + $0x3d8] sm:$0xff]
    %v1788 = vld [vmem:[%s1663 + $0x3e0] sm:$0xff]
    %v1789 = vld [vmem:[%s1663 + $0x3e8] sm:$0xff]
    %v1790 = vld [vmem:[%s1663 + $0x3f0] sm:$0xff]
    %v1791 = vld [vmem:[%s1663 + $0x3f8] sm:$0xff]
    %v1792 = vld [vmem:[%s1663 + $0x400] sm:$0xff]
    %v1793 = vld [vmem:[%s1663 + $0x408] sm:$0xff]
    %v1794 = vld [vmem:[%s1663 + $0x410] sm:$0xff]
    %v1795 = vld [vmem:[%s1663 + $0x418] sm:$0xff]
    %v1796 = vld [vmem:[%s1663 + $0x420] sm:$0xff]
    %v1797 = vld [vmem:[%s1663 + $0x428] sm:$0xff]
    %v1798 = vld [vmem:[%s1663 + $0x430] sm:$0xff]
    %v1799 = vld [vmem:[%s1663 + $0x438] sm:$0xff]
    %v1800 = vld [vmem:[%s1663 + $0x440] sm:$0xff]
    %v1801 = vld [vmem:[%s1663 + $0x448] sm:$0xff]
    %v1802 = vld [vmem:[%s1663 + $0x450] sm:$0xff]
    %v1803 = vld [vmem:[%s1663 + $0x458] sm:$0xff]
    %v1804 = vld [vmem:[%s1663 + $0x460] sm:$0xff]
    %v1805 = vld [vmem:[%s1663 + $0x468] sm:$0xff]
    %v1806 = vld [vmem:[%s1663 + $0x470] sm:$0xff]
    %v1807 = vld [vmem:[%s1663 + $0x478] sm:$0xff]
    %v1808 = vld [vmem:[%s1663 + $0x480] sm:$0xff]
    %v1809 = vld [vmem:[%s1663 + $0x488] sm:$0xff]
    %v1810 = vld [vmem:[%s1663 + $0x490] sm:$0xff]
    %v1811 = vld [vmem:[%s1663 + $0x498] sm:$0xff]
    %v1812 = vld [vmem:[%s1663 + $0x4a0] sm:$0xff]
    %v1813 = vld [vmem:[%s1663 + $0x4a8] sm:$0xff]
    %v1814 = vld [vmem:[%s1663 + $0x4b0] sm:$0xff]
    %v1815 = vld [vmem:[%s1663 + $0x4b8] sm:$0xff]
    %v1816 = vld [vmem:[%s1663 + $0x4c0] sm:$0xff]
    %v1817 = vld [vmem:[%s1663 + $0x4c8] sm:$0xff]
    %v1818 = vld [vmem:[%s1663 + $0x4d0] sm:$0xff]
    %v1819 = vld [vmem:[%s1663 + $0x4d8] sm:$0xff]
    %v1820 = vld [vmem:[%s1663 + $0x4e0] sm:$0xff]
    %v1821 = vld [vmem:[%s1663 + $0x4e8] sm:$0xff]
    %v1822 = vld [vmem:[%s1663 + $0x4f0] sm:$0xff]
    %v1823 = vld [vmem:[%s1663 + $0x4f8] sm:$0xff]
    %v1824 = vld [vmem:[%s1663 + $0x500] sm:$0xff]
    %v1825 = vld [vmem:[%s1663 + $0x508] sm:$0xff]
    %v1826 = vld [vmem:[%s1663 + $0x510] sm:$0xff]
    %v1827 = vld [vmem:[%s1663 + $0x518] sm:$0xff]
    %v1828 = vld [vmem:[%s1663 + $0x520] sm:$0xff]
    %v1829 = vld [vmem:[%s1663 + $0x528] sm:$0xff]
    %v1830 = vld [vmem:[%s1663 + $0x530] sm:$0xff]
    %v1831 = vld [vmem:[%s1663 + $0x538] sm:$0xff]
    %v1832 = vld [vmem:[%s1663 + $0x540] sm:$0xff]
    %v1833 = vld [vmem:[%s1663 + $0x548] sm:$0xff]
    %v1834 = vld [vmem:[%s1663 + $0x550] sm:$0xff]
    %v1835 = vld [vmem:[%s1663 + $0x558] sm:$0xff]
    %v1836 = vld [vmem:[%s1663 + $0x560] sm:$0xff]
    %v1837 = vld [vmem:[%s1663 + $0x568] sm:$0xff]
    %v1838 = vld [vmem:[%s1663 + $0x570] sm:$0xff]
    %v1839 = vld [vmem:[%s1663 + $0x578] sm:$0xff]
    %v1840 = vld [vmem:[%s1663 + $0x580] sm:$0xff]
    %v1841 = vld [vmem:[%s1663 + $0x588] sm:$0xff]
    %v1842 = vld [vmem:[%s1663 + $0x590] sm:$0xff]
    %v1843 = vld [vmem:[%s1663 + $0x598] sm:$0xff]
    %v1844 = vld [vmem:[%s1663 + $0x5a0] sm:$0xff]
    %v1845 = vld [vmem:[%s1663 + $0x5a8] sm:$0xff]
    %v1846 = vld [vmem:[%s1663 + $0x5b0] sm:$0xff]
    %v1847 = vld [vmem:[%s1663 + $0x5b8] sm:$0xff]
    %v1848 = vld [vmem:[%s1663 + $0x5c0] sm:$0xff]
    %v1849 = vld [vmem:[%s1663 + $0x5c8] sm:$0xff]
    %v1850 = vld [vmem:[%s1663 + $0x5d0] sm:$0xff]
    %v1851 = vld [vmem:[%s1663 + $0x5d8] sm:$0xff]
    %v1852 = vld [vmem:[%s1663 + $0x5e0] sm:$0xff]
    %v1853 = vld [vmem:[%s1663 + $0x5e8] sm:$0xff]
    %v1854 = vld [vmem:[%s1663 + $0x5f0] sm:$0xff]
    %v1855 = vld [vmem:[%s1663 + $0x5f8] sm:$0xff]
    %1856 = vmatprep.subr.mxu0 %v1695
    %1857 = vmatpush1.msra.mxu0 %v1694
    %1858 = vmatprep.subr.mxu0 %v1693
    %1859 = vmatpush1.msra.mxu0 %v1692
    %1860 = vmatprep.subr.mxu0 %v1691
    %1861 = vmatpush1.msra.mxu0 %v1690
    %1862 = vmatprep.subr.mxu0 %v1689
    %1863 = vmatpush1.msra.mxu0 %v1688
    %1864 = vmatprep.subr.mxu0 %v1687
    %1865 = vmatpush1.msra.mxu0 %v1686
    %1866 = vmatprep.subr.mxu0 %v1685
    %1867 = vmatpush1.msra.mxu0 %v1684
    %1868 = vmatprep.subr.mxu0 %v1683
    %1869 = vmatpush1.msra.mxu0 %v1682
    %1870 = vmatprep.subr.mxu0 %v1681
    %1871 = vmatpush1.msra.mxu0 %v1680
    %1872 = vmatprep.subr.mxu0 %v1679
    %1873 = vmatpush1.msra.mxu0 %v1678
    %1874 = vmatprep.subr.mxu0 %v1677
    %1875 = vmatpush1.msra.mxu0 %v1676
    %1876 = vmatprep.subr.mxu0 %v1675
    %1877 = vmatpush1.msra.mxu0 %v1674
    %1878 = vmatprep.subr.mxu0 %v1673
    %1879 = vmatpush1.msra.mxu0 %v1672
    %1880 = vmatprep.subr.mxu0 %v1671
    %1881 = vmatpush1.msra.mxu0 %v1670
    %1882 = vmatprep.subr.mxu0 %v1669
    %1883 = vmatpush1.msra.mxu0 %v1668
    %1884 = vmatprep.subr.mxu0 %v1667
    %1885 = vmatpush1.msra.mxu0 %v1666
    %1886 = vmatprep.subr.mxu0 %v1665
    %1887 = vmatpush1.msra.mxu0 %v1664
    %1888 = vmatprep.subr.mxu0 %v1727
    %1889 = vmatpush2.msra.mxu0 %v1726
    %1890 = vmatprep.subr.mxu0 %v1725
    %1891 = vmatpush2.msra.mxu0 %v1724
    %1892 = vmatprep.subr.mxu0 %v1723
    %1893 = vmatpush2.msra.mxu0 %v1722
    %1894 = vmatprep.subr.mxu0 %v1721
    %1895 = vmatpush2.msra.mxu0 %v1720
    %1896 = vmatprep.subr.mxu0 %v1719
    %1897 = vmatpush2.msra.mxu0 %v1718
    %1898 = vmatprep.subr.mxu0 %v1717
    %1899 = vmatpush2.msra.mxu0 %v1716
    %1900 = vmatprep.subr.mxu0 %v1715
    %1901 = vmatpush2.msra.mxu0 %v1714
    %1902 = vmatprep.subr.mxu0 %v1713
    %1903 = vmatpush2.msra.mxu0 %v1712
    %1904 = vmatprep.subr.mxu0 %v1711
    %1905 = vmatpush2.msra.mxu0 %v1710
    %1906 = vmatprep.subr.mxu0 %v1709
    %1907 = vmatpush2.msra.mxu0 %v1708
    %1908 = vmatprep.subr.mxu0 %v1707
    %1909 = vmatpush2.msra.mxu0 %v1706
    %1910 = vmatprep.subr.mxu0 %v1705
    %1911 = vmatpush2.msra.mxu0 %v1704
    %1912 = vmatprep.subr.mxu0 %v1703
    %1913 = vmatpush2.msra.mxu0 %v1702
    %1914 = vmatprep.subr.mxu0 %v1701
    %1915 = vmatpush2.msra.mxu0 %v1700
    %1916 = vmatprep.subr.mxu0 %v1699
    %1917 = vmatpush2.msra.mxu0 %v1698
    %1918 = vmatprep.subr.mxu0 %v1697
    %1919 = vmatpush2.msra.mxu0 %v1696
    %1920 = vmatprep.mubr.f32.mxu0 %v1229
    %1921 = vmatmul.mubr.f32.gmra.mxu0 %v1228
    %v1922 = vpop.f32.mrf.mxu0
    %v1923 = vadd.f32 0.0, %v1922
    %v1924 = vpop.f32.mrf.mxu0
    %v1925 = vadd.f32 0.0, %v1924
    %1926 = vmatprep.mubr.f32.mxu0 %v1235
    %1927 = vmatmul.mubr.f32.gmra.mxu0 %v1234
    %v1928 = vpop.f32.mrf.mxu0
    %v1929 = vadd.f32 0.0, %v1928
    %v1930 = vpop.f32.mrf.mxu0
    %v1931 = vadd.f32 0.0, %v1930
    %1932 = vdwg.mxu0
    %1933 = vmatprep.subr.mxu0 %v1759
    %1934 = vmatpush1.msra.mxu0 %v1758
    %1935 = vmatprep.subr.mxu0 %v1757
    %1936 = vmatpush1.msra.mxu0 %v1756
    %1937 = vmatprep.subr.mxu0 %v1755
    %1938 = vmatpush1.msra.mxu0 %v1754
    %1939 = vmatprep.subr.mxu0 %v1753
    %1940 = vmatpush1.msra.mxu0 %v1752
    %1941 = vmatprep.subr.mxu0 %v1751
    %1942 = vmatpush1.msra.mxu0 %v1750
    %1943 = vmatprep.subr.mxu0 %v1749
    %1944 = vmatpush1.msra.mxu0 %v1748
    %1945 = vmatprep.subr.mxu0 %v1747
    %1946 = vmatpush1.msra.mxu0 %v1746
    %1947 = vmatprep.subr.mxu0 %v1745
    %1948 = vmatpush1.msra.mxu0 %v1744
    %1949 = vmatprep.subr.mxu0 %v1743
    %1950 = vmatpush1.msra.mxu0 %v1742
    %1951 = vmatprep.subr.mxu0 %v1741
    %1952 = vmatpush1.msra.mxu0 %v1740
    %1953 = vmatprep.subr.mxu0 %v1739
    %1954 = vmatpush1.msra.mxu0 %v1738
    %1955 = vmatprep.subr.mxu0 %v1737
    %1956 = vmatpush1.msra.mxu0 %v1736
    %1957 = vmatprep.subr.mxu0 %v1735
    %1958 = vmatpush1.msra.mxu0 %v1734
    %1959 = vmatprep.subr.mxu0 %v1733
    %1960 = vmatpush1.msra.mxu0 %v1732
    %1961 = vmatprep.subr.mxu0 %v1731
    %1962 = vmatpush1.msra.mxu0 %v1730
    %1963 = vmatprep.subr.mxu0 %v1729
    %1964 = vmatpush1.msra.mxu0 %v1728
    %1965 = vmatprep.subr.mxu0 %v1791
    %1966 = vmatpush2.msra.mxu0 %v1790
    %1967 = vmatprep.subr.mxu0 %v1789
    %1968 = vmatpush2.msra.mxu0 %v1788
    %1969 = vmatprep.subr.mxu0 %v1787
    %1970 = vmatpush2.msra.mxu0 %v1786
    %1971 = vmatprep.subr.mxu0 %v1785
    %1972 = vmatpush2.msra.mxu0 %v1784
    %1973 = vmatprep.subr.mxu0 %v1783
    %1974 = vmatpush2.msra.mxu0 %v1782
    %1975 = vmatprep.subr.mxu0 %v1781
    %1976 = vmatpush2.msra.mxu0 %v1780
    %1977 = vmatprep.subr.mxu0 %v1779
    %1978 = vmatpush2.msra.mxu0 %v1778
    %1979 = vmatprep.subr.mxu0 %v1777
    %1980 = vmatpush2.msra.mxu0 %v1776
    %1981 = vmatprep.subr.mxu0 %v1775
    %1982 = vmatpush2.msra.mxu0 %v1774
    %1983 = vmatprep.subr.mxu0 %v1773
    %1984 = vmatpush2.msra.mxu0 %v1772
    %1985 = vmatprep.subr.mxu0 %v1771
    %1986 = vmatpush2.msra.mxu0 %v1770
    %1987 = vmatprep.subr.mxu0 %v1769
    %1988 = vmatpush2.msra.mxu0 %v1768
    %1989 = vmatprep.subr.mxu0 %v1767
    %1990 = vmatpush2.msra.mxu0 %v1766
    %1991 = vmatprep.subr.mxu0 %v1765
    %1992 = vmatpush2.msra.mxu0 %v1764
    %1993 = vmatprep.subr.mxu0 %v1763
    %1994 = vmatpush2.msra.mxu0 %v1762
    %1995 = vmatprep.subr.mxu0 %v1761
    %1996 = vmatpush2.msra.mxu0 %v1760
    %1997 = vmatprep.mubr.f32.mxu0 %v1231
    %1998 = vmatmul.mubr.f32.gmra.mxu0 %v1230
    %v1999 = vpop.f32.mrf.mxu0
    %v2000 = vadd.f32 %v1923, %v1999
    %v2001 = vpop.f32.mrf.mxu0
    %v2002 = vadd.f32 %v1925, %v2001
    %2003 = vmatprep.mubr.f32.mxu0 %v1237
    %2004 = vmatmul.mubr.f32.gmra.mxu0 %v1236
    %v2005 = vpop.f32.mrf.mxu0
    %v2006 = vadd.f32 %v1929, %v2005
    %v2007 = vpop.f32.mrf.mxu0
    %v2008 = vadd.f32 %v1931, %v2007
    %2009 = vdwg.mxu0
    %2010 = vmatprep.subr.mxu0 %v1823
    %2011 = vmatpush1.msra.mxu0 %v1822
    %2012 = vmatprep.subr.mxu0 %v1821
    %2013 = vmatpush1.msra.mxu0 %v1820
    %2014 = vmatprep.subr.mxu0 %v1819
    %2015 = vmatpush1.msra.mxu0 %v1818
    %2016 = vmatprep.subr.mxu0 %v1817
    %2017 = vmatpush1.msra.mxu0 %v1816
    %2018 = vmatprep.subr.mxu0 %v1815
    %2019 = vmatpush1.msra.mxu0 %v1814
    %2020 = vmatprep.subr.mxu0 %v1813
    %2021 = vmatpush1.msra.mxu0 %v1812
    %2022 = vmatprep.subr.mxu0 %v1811
    %2023 = vmatpush1.msra.mxu0 %v1810
    %2024 = vmatprep.subr.mxu0 %v1809
    %2025 = vmatpush1.msra.mxu0 %v1808
    %2026 = vmatprep.subr.mxu0 %v1807
    %2027 = vmatpush1.msra.mxu0 %v1806
    %2028 = vmatprep.subr.mxu0 %v1805
    %2029 = vmatpush1.msra.mxu0 %v1804
    %2030 = vmatprep.subr.mxu0 %v1803
    %2031 = vmatpush1.msra.mxu0 %v1802
    %2032 = vmatprep.subr.mxu0 %v1801
    %2033 = vmatpush1.msra.mxu0 %v1800
    %2034 = vmatprep.subr.mxu0 %v1799
    %2035 = vmatpush1.msra.mxu0 %v1798
    %2036 = vmatprep.subr.mxu0 %v1797
    %2037 = vmatpush1.msra.mxu0 %v1796
    %2038 = vmatprep.subr.mxu0 %v1795
    %2039 = vmatpush1.msra.mxu0 %v1794
    %2040 = vmatprep.subr.mxu0 %v1793
    %2041 = vmatpush1.msra.mxu0 %v1792
    %2042 = vmatprep.subr.mxu0 %v1855
    %2043 = vmatpush2.msra.mxu0 %v1854
    %2044 = vmatprep.subr.mxu0 %v1853
    %2045 = vmatpush2.msra.mxu0 %v1852
    %2046 = vmatprep.subr.mxu0 %v1851
    %2047 = vmatpush2.msra.mxu0 %v1850
    %2048 = vmatprep.subr.mxu0 %v1849
    %2049 = vmatpush2.msra.mxu0 %v1848
    %2050 = vmatprep.subr.mxu0 %v1847
    %2051 = vmatpush2.msra.mxu0 %v1846
    %2052 = vmatprep.subr.mxu0 %v1845
    %2053 = vmatpush2.msra.mxu0 %v1844
    %2054 = vmatprep.subr.mxu0 %v1843
    %2055 = vmatpush2.msra.mxu0 %v1842
    %2056 = vmatprep.subr.mxu0 %v1841
    %2057 = vmatpush2.msra.mxu0 %v1840
    %2058 = vmatprep.subr.mxu0 %v1839
    %2059 = vmatpush2.msra.mxu0 %v1838
    %2060 = vmatprep.subr.mxu0 %v1837
    %2061 = vmatpush2.msra.mxu0 %v1836
    %2062 = vmatprep.subr.mxu0 %v1835
    %2063 = vmatpush2.msra.mxu0 %v1834
    %2064 = vmatprep.subr.mxu0 %v1833
    %2065 = vmatpush2.msra.mxu0 %v1832
    %2066 = vmatprep.subr.mxu0 %v1831
    %2067 = vmatpush2.msra.mxu0 %v1830
    %2068 = vmatprep.subr.mxu0 %v1829
    %2069 = vmatpush2.msra.mxu0 %v1828
    %2070 = vmatprep.subr.mxu0 %v1827
    %2071 = vmatpush2.msra.mxu0 %v1826
    %2072 = vmatprep.subr.mxu0 %v1825
    %2073 = vmatpush2.msra.mxu0 %v1824
    %2074 = vmatprep.mubr.f32.mxu0 %v1233
    %2075 = vmatmul.mubr.f32.gmra.mxu0 %v1232
    %v2076 = vpop.f32.mrf.mxu0
    %v2077 = vadd.f32 %v2000, %v2076
    %v2078 = vpop.f32.mrf.mxu0
    %v2079 = vadd.f32 %v2002, %v2078
    %2080 = vmatprep.mubr.f32.mxu0 %v1239
    %2081 = vmatmul.mubr.f32.gmra.mxu0 %v1238
    %v2082 = vpop.f32.mrf.mxu0
    %v2083 = vadd.f32 %v2006, %v2082
    %v2084 = vpop.f32.mrf.mxu0
    %v2085 = vadd.f32 %v2008, %v2084
    %2086 = vdwg.mxu0
    %s2087 = scalar_lea.vmem %s2, 3072
    %v2088 = vld [vmem:[%s2087] sm:$0xff]
    %v2089 = vld [vmem:[%s2087 + $0x8] sm:$0xff]
    %v2090 = vld [vmem:[%s2087 + $0x10] sm:$0xff]
    %v2091 = vld [vmem:[%s2087 + $0x18] sm:$0xff]
    %v2092 = vld [vmem:[%s2087 + $0x20] sm:$0xff]
    %v2093 = vld [vmem:[%s2087 + $0x28] sm:$0xff]
    %v2094 = vld [vmem:[%s2087 + $0x30] sm:$0xff]
    %v2095 = vld [vmem:[%s2087 + $0x38] sm:$0xff]
    %v2096 = vld [vmem:[%s2087 + $0x40] sm:$0xff]
    %v2097 = vld [vmem:[%s2087 + $0x48] sm:$0xff]
    %v2098 = vld [vmem:[%s2087 + $0x50] sm:$0xff]
    %v2099 = vld [vmem:[%s2087 + $0x58] sm:$0xff]
    %v2100 = vld [vmem:[%s2087 + $0x60] sm:$0xff]
    %v2101 = vld [vmem:[%s2087 + $0x68] sm:$0xff]
    %v2102 = vld [vmem:[%s2087 + $0x70] sm:$0xff]
    %v2103 = vld [vmem:[%s2087 + $0x78] sm:$0xff]
    %v2104 = vld [vmem:[%s2087 + $0x80] sm:$0xff]
    %v2105 = vld [vmem:[%s2087 + $0x88] sm:$0xff]
    %v2106 = vld [vmem:[%s2087 + $0x90] sm:$0xff]
    %v2107 = vld [vmem:[%s2087 + $0x98] sm:$0xff]
    %v2108 = vld [vmem:[%s2087 + $0xa0] sm:$0xff]
    %v2109 = vld [vmem:[%s2087 + $0xa8] sm:$0xff]
    %v2110 = vld [vmem:[%s2087 + $0xb0] sm:$0xff]
    %v2111 = vld [vmem:[%s2087 + $0xb8] sm:$0xff]
    %v2112 = vld [vmem:[%s2087 + $0xc0] sm:$0xff]
    %v2113 = vld [vmem:[%s2087 + $0xc8] sm:$0xff]
    %v2114 = vld [vmem:[%s2087 + $0xd0] sm:$0xff]
    %v2115 = vld [vmem:[%s2087 + $0xd8] sm:$0xff]
    %v2116 = vld [vmem:[%s2087 + $0xe0] sm:$0xff]
    %v2117 = vld [vmem:[%s2087 + $0xe8] sm:$0xff]
    %v2118 = vld [vmem:[%s2087 + $0xf0] sm:$0xff]
    %v2119 = vld [vmem:[%s2087 + $0xf8] sm:$0xff]
    %v2120 = vld [vmem:[%s2087 + $0x100] sm:$0xff]
    %v2121 = vld [vmem:[%s2087 + $0x108] sm:$0xff]
    %v2122 = vld [vmem:[%s2087 + $0x110] sm:$0xff]
    %v2123 = vld [vmem:[%s2087 + $0x118] sm:$0xff]
    %v2124 = vld [vmem:[%s2087 + $0x120] sm:$0xff]
    %v2125 = vld [vmem:[%s2087 + $0x128] sm:$0xff]
    %v2126 = vld [vmem:[%s2087 + $0x130] sm:$0xff]
    %v2127 = vld [vmem:[%s2087 + $0x138] sm:$0xff]
    %v2128 = vld [vmem:[%s2087 + $0x140] sm:$0xff]
    %v2129 = vld [vmem:[%s2087 + $0x148] sm:$0xff]
    %v2130 = vld [vmem:[%s2087 + $0x150] sm:$0xff]
    %v2131 = vld [vmem:[%s2087 + $0x158] sm:$0xff]
    %v2132 = vld [vmem:[%s2087 + $0x160] sm:$0xff]
    %v2133 = vld [vmem:[%s2087 + $0x168] sm:$0xff]
    %v2134 = vld [vmem:[%s2087 + $0x170] sm:$0xff]
    %v2135 = vld [vmem:[%s2087 + $0x178] sm:$0xff]
    %v2136 = vld [vmem:[%s2087 + $0x180] sm:$0xff]
    %v2137 = vld [vmem:[%s2087 + $0x188] sm:$0xff]
    %v2138 = vld [vmem:[%s2087 + $0x190] sm:$0xff]
    %v2139 = vld [vmem:[%s2087 + $0x198] sm:$0xff]
    %v2140 = vld [vmem:[%s2087 + $0x1a0] sm:$0xff]
    %v2141 = vld [vmem:[%s2087 + $0x1a8] sm:$0xff]
    %v2142 = vld [vmem:[%s2087 + $0x1b0] sm:$0xff]
    %v2143 = vld [vmem:[%s2087 + $0x1b8] sm:$0xff]
    %v2144 = vld [vmem:[%s2087 + $0x1c0] sm:$0xff]
    %v2145 = vld [vmem:[%s2087 + $0x1c8] sm:$0xff]
    %v2146 = vld [vmem:[%s2087 + $0x1d0] sm:$0xff]
    %v2147 = vld [vmem:[%s2087 + $0x1d8] sm:$0xff]
    %v2148 = vld [vmem:[%s2087 + $0x1e0] sm:$0xff]
    %v2149 = vld [vmem:[%s2087 + $0x1e8] sm:$0xff]
    %v2150 = vld [vmem:[%s2087 + $0x1f0] sm:$0xff]
    %v2151 = vld [vmem:[%s2087 + $0x1f8] sm:$0xff]
    %v2152 = vld [vmem:[%s2087 + $0x200] sm:$0xff]
    %v2153 = vld [vmem:[%s2087 + $0x208] sm:$0xff]
    %v2154 = vld [vmem:[%s2087 + $0x210] sm:$0xff]
    %v2155 = vld [vmem:[%s2087 + $0x218] sm:$0xff]
    %v2156 = vld [vmem:[%s2087 + $0x220] sm:$0xff]
    %v2157 = vld [vmem:[%s2087 + $0x228] sm:$0xff]
    %v2158 = vld [vmem:[%s2087 + $0x230] sm:$0xff]
    %v2159 = vld [vmem:[%s2087 + $0x238] sm:$0xff]
    %v2160 = vld [vmem:[%s2087 + $0x240] sm:$0xff]
    %v2161 = vld [vmem:[%s2087 + $0x248] sm:$0xff]
    %v2162 = vld [vmem:[%s2087 + $0x250] sm:$0xff]
    %v2163 = vld [vmem:[%s2087 + $0x258] sm:$0xff]
    %v2164 = vld [vmem:[%s2087 + $0x260] sm:$0xff]
    %v2165 = vld [vmem:[%s2087 + $0x268] sm:$0xff]
    %v2166 = vld [vmem:[%s2087 + $0x270] sm:$0xff]
    %v2167 = vld [vmem:[%s2087 + $0x278] sm:$0xff]
    %v2168 = vld [vmem:[%s2087 + $0x280] sm:$0xff]
    %v2169 = vld [vmem:[%s2087 + $0x288] sm:$0xff]
    %v2170 = vld [vmem:[%s2087 + $0x290] sm:$0xff]
    %v2171 = vld [vmem:[%s2087 + $0x298] sm:$0xff]
    %v2172 = vld [vmem:[%s2087 + $0x2a0] sm:$0xff]
    %v2173 = vld [vmem:[%s2087 + $0x2a8] sm:$0xff]
    %v2174 = vld [vmem:[%s2087 + $0x2b0] sm:$0xff]
    %v2175 = vld [vmem:[%s2087 + $0x2b8] sm:$0xff]
    %v2176 = vld [vmem:[%s2087 + $0x2c0] sm:$0xff]
    %v2177 = vld [vmem:[%s2087 + $0x2c8] sm:$0xff]
    %v2178 = vld [vmem:[%s2087 + $0x2d0] sm:$0xff]
    %v2179 = vld [vmem:[%s2087 + $0x2d8] sm:$0xff]
    %v2180 = vld [vmem:[%s2087 + $0x2e0] sm:$0xff]
    %v2181 = vld [vmem:[%s2087 + $0x2e8] sm:$0xff]
    %v2182 = vld [vmem:[%s2087 + $0x2f0] sm:$0xff]
    %v2183 = vld [vmem:[%s2087 + $0x2f8] sm:$0xff]
    %v2184 = vld [vmem:[%s2087 + $0x300] sm:$0xff]
    %v2185 = vld [vmem:[%s2087 + $0x308] sm:$0xff]
    %v2186 = vld [vmem:[%s2087 + $0x310] sm:$0xff]
    %v2187 = vld [vmem:[%s2087 + $0x318] sm:$0xff]
    %v2188 = vld [vmem:[%s2087 + $0x320] sm:$0xff]
    %v2189 = vld [vmem:[%s2087 + $0x328] sm:$0xff]
    %v2190 = vld [vmem:[%s2087 + $0x330] sm:$0xff]
    %v2191 = vld [vmem:[%s2087 + $0x338] sm:$0xff]
    %v2192 = vld [vmem:[%s2087 + $0x340] sm:$0xff]
    %v2193 = vld [vmem:[%s2087 + $0x348] sm:$0xff]
    %v2194 = vld [vmem:[%s2087 + $0x350] sm:$0xff]
    %v2195 = vld [vmem:[%s2087 + $0x358] sm:$0xff]
    %v2196 = vld [vmem:[%s2087 + $0x360] sm:$0xff]
    %v2197 = vld [vmem:[%s2087 + $0x368] sm:$0xff]
    %v2198 = vld [vmem:[%s2087 + $0x370] sm:$0xff]
    %v2199 = vld [vmem:[%s2087 + $0x378] sm:$0xff]
    %v2200 = vld [vmem:[%s2087 + $0x380] sm:$0xff]
    %v2201 = vld [vmem:[%s2087 + $0x388] sm:$0xff]
    %v2202 = vld [vmem:[%s2087 + $0x390] sm:$0xff]
    %v2203 = vld [vmem:[%s2087 + $0x398] sm:$0xff]
    %v2204 = vld [vmem:[%s2087 + $0x3a0] sm:$0xff]
    %v2205 = vld [vmem:[%s2087 + $0x3a8] sm:$0xff]
    %v2206 = vld [vmem:[%s2087 + $0x3b0] sm:$0xff]
    %v2207 = vld [vmem:[%s2087 + $0x3b8] sm:$0xff]
    %v2208 = vld [vmem:[%s2087 + $0x3c0] sm:$0xff]
    %v2209 = vld [vmem:[%s2087 + $0x3c8] sm:$0xff]
    %v2210 = vld [vmem:[%s2087 + $0x3d0] sm:$0xff]
    %v2211 = vld [vmem:[%s2087 + $0x3d8] sm:$0xff]
    %v2212 = vld [vmem:[%s2087 + $0x3e0] sm:$0xff]
    %v2213 = vld [vmem:[%s2087 + $0x3e8] sm:$0xff]
    %v2214 = vld [vmem:[%s2087 + $0x3f0] sm:$0xff]
    %v2215 = vld [vmem:[%s2087 + $0x3f8] sm:$0xff]
    %v2216 = vld [vmem:[%s2087 + $0x400] sm:$0xff]
    %v2217 = vld [vmem:[%s2087 + $0x408] sm:$0xff]
    %v2218 = vld [vmem:[%s2087 + $0x410] sm:$0xff]
    %v2219 = vld [vmem:[%s2087 + $0x418] sm:$0xff]
    %v2220 = vld [vmem:[%s2087 + $0x420] sm:$0xff]
    %v2221 = vld [vmem:[%s2087 + $0x428] sm:$0xff]
    %v2222 = vld [vmem:[%s2087 + $0x430] sm:$0xff]
    %v2223 = vld [vmem:[%s2087 + $0x438] sm:$0xff]
    %v2224 = vld [vmem:[%s2087 + $0x440] sm:$0xff]
    %v2225 = vld [vmem:[%s2087 + $0x448] sm:$0xff]
    %v2226 = vld [vmem:[%s2087 + $0x450] sm:$0xff]
    %v2227 = vld [vmem:[%s2087 + $0x458] sm:$0xff]
    %v2228 = vld [vmem:[%s2087 + $0x460] sm:$0xff]
    %v2229 = vld [vmem:[%s2087 + $0x468] sm:$0xff]
    %v2230 = vld [vmem:[%s2087 + $0x470] sm:$0xff]
    %v2231 = vld [vmem:[%s2087 + $0x478] sm:$0xff]
    %v2232 = vld [vmem:[%s2087 + $0x480] sm:$0xff]
    %v2233 = vld [vmem:[%s2087 + $0x488] sm:$0xff]
    %v2234 = vld [vmem:[%s2087 + $0x490] sm:$0xff]
    %v2235 = vld [vmem:[%s2087 + $0x498] sm:$0xff]
    %v2236 = vld [vmem:[%s2087 + $0x4a0] sm:$0xff]
    %v2237 = vld [vmem:[%s2087 + $0x4a8] sm:$0xff]
    %v2238 = vld [vmem:[%s2087 + $0x4b0] sm:$0xff]
    %v2239 = vld [vmem:[%s2087 + $0x4b8] sm:$0xff]
    %v2240 = vld [vmem:[%s2087 + $0x4c0] sm:$0xff]
    %v2241 = vld [vmem:[%s2087 + $0x4c8] sm:$0xff]
    %v2242 = vld [vmem:[%s2087 + $0x4d0] sm:$0xff]
    %v2243 = vld [vmem:[%s2087 + $0x4d8] sm:$0xff]
    %v2244 = vld [vmem:[%s2087 + $0x4e0] sm:$0xff]
    %v2245 = vld [vmem:[%s2087 + $0x4e8] sm:$0xff]
    %v2246 = vld [vmem:[%s2087 + $0x4f0] sm:$0xff]
    %v2247 = vld [vmem:[%s2087 + $0x4f8] sm:$0xff]
    %v2248 = vld [vmem:[%s2087 + $0x500] sm:$0xff]
    %v2249 = vld [vmem:[%s2087 + $0x508] sm:$0xff]
    %v2250 = vld [vmem:[%s2087 + $0x510] sm:$0xff]
    %v2251 = vld [vmem:[%s2087 + $0x518] sm:$0xff]
    %v2252 = vld [vmem:[%s2087 + $0x520] sm:$0xff]
    %v2253 = vld [vmem:[%s2087 + $0x528] sm:$0xff]
    %v2254 = vld [vmem:[%s2087 + $0x530] sm:$0xff]
    %v2255 = vld [vmem:[%s2087 + $0x538] sm:$0xff]
    %v2256 = vld [vmem:[%s2087 + $0x540] sm:$0xff]
    %v2257 = vld [vmem:[%s2087 + $0x548] sm:$0xff]
    %v2258 = vld [vmem:[%s2087 + $0x550] sm:$0xff]
    %v2259 = vld [vmem:[%s2087 + $0x558] sm:$0xff]
    %v2260 = vld [vmem:[%s2087 + $0x560] sm:$0xff]
    %v2261 = vld [vmem:[%s2087 + $0x568] sm:$0xff]
    %v2262 = vld [vmem:[%s2087 + $0x570] sm:$0xff]
    %v2263 = vld [vmem:[%s2087 + $0x578] sm:$0xff]
    %v2264 = vld [vmem:[%s2087 + $0x580] sm:$0xff]
    %v2265 = vld [vmem:[%s2087 + $0x588] sm:$0xff]
    %v2266 = vld [vmem:[%s2087 + $0x590] sm:$0xff]
    %v2267 = vld [vmem:[%s2087 + $0x598] sm:$0xff]
    %v2268 = vld [vmem:[%s2087 + $0x5a0] sm:$0xff]
    %v2269 = vld [vmem:[%s2087 + $0x5a8] sm:$0xff]
    %v2270 = vld [vmem:[%s2087 + $0x5b0] sm:$0xff]
    %v2271 = vld [vmem:[%s2087 + $0x5b8] sm:$0xff]
    %v2272 = vld [vmem:[%s2087 + $0x5c0] sm:$0xff]
    %v2273 = vld [vmem:[%s2087 + $0x5c8] sm:$0xff]
    %v2274 = vld [vmem:[%s2087 + $0x5d0] sm:$0xff]
    %v2275 = vld [vmem:[%s2087 + $0x5d8] sm:$0xff]
    %v2276 = vld [vmem:[%s2087 + $0x5e0] sm:$0xff]
    %v2277 = vld [vmem:[%s2087 + $0x5e8] sm:$0xff]
    %v2278 = vld [vmem:[%s2087 + $0x5f0] sm:$0xff]
    %v2279 = vld [vmem:[%s2087 + $0x5f8] sm:$0xff]
    %2280 = vmatprep.subr.mxu0 %v2119
    %2281 = vmatpush1.msra.mxu0 %v2118
    %2282 = vmatprep.subr.mxu0 %v2117
    %2283 = vmatpush1.msra.mxu0 %v2116
    %2284 = vmatprep.subr.mxu0 %v2115
    %2285 = vmatpush1.msra.mxu0 %v2114
    %2286 = vmatprep.subr.mxu0 %v2113
    %2287 = vmatpush1.msra.mxu0 %v2112
    %2288 = vmatprep.subr.mxu0 %v2111
    %2289 = vmatpush1.msra.mxu0 %v2110
    %2290 = vmatprep.subr.mxu0 %v2109
    %2291 = vmatpush1.msra.mxu0 %v2108
    %2292 = vmatprep.subr.mxu0 %v2107
    %2293 = vmatpush1.msra.mxu0 %v2106
    %2294 = vmatprep.subr.mxu0 %v2105
    %2295 = vmatpush1.msra.mxu0 %v2104
    %2296 = vmatprep.subr.mxu0 %v2103
    %2297 = vmatpush1.msra.mxu0 %v2102
    %2298 = vmatprep.subr.mxu0 %v2101
    %2299 = vmatpush1.msra.mxu0 %v2100
    %2300 = vmatprep.subr.mxu0 %v2099
    %2301 = vmatpush1.msra.mxu0 %v2098
    %2302 = vmatprep.subr.mxu0 %v2097
    %2303 = vmatpush1.msra.mxu0 %v2096
    %2304 = vmatprep.subr.mxu0 %v2095
    %2305 = vmatpush1.msra.mxu0 %v2094
    %2306 = vmatprep.subr.mxu0 %v2093
    %2307 = vmatpush1.msra.mxu0 %v2092
    %2308 = vmatprep.subr.mxu0 %v2091
    %2309 = vmatpush1.msra.mxu0 %v2090
    %2310 = vmatprep.subr.mxu0 %v2089
    %2311 = vmatpush1.msra.mxu0 %v2088
    %2312 = vmatprep.subr.mxu0 %v2151
    %2313 = vmatpush2.msra.mxu0 %v2150
    %2314 = vmatprep.subr.mxu0 %v2149
    %2315 = vmatpush2.msra.mxu0 %v2148
    %2316 = vmatprep.subr.mxu0 %v2147
    %2317 = vmatpush2.msra.mxu0 %v2146
    %2318 = vmatprep.subr.mxu0 %v2145
    %2319 = vmatpush2.msra.mxu0 %v2144
    %2320 = vmatprep.subr.mxu0 %v2143
    %2321 = vmatpush2.msra.mxu0 %v2142
    %2322 = vmatprep.subr.mxu0 %v2141
    %2323 = vmatpush2.msra.mxu0 %v2140
    %2324 = vmatprep.subr.mxu0 %v2139
    %2325 = vmatpush2.msra.mxu0 %v2138
    %2326 = vmatprep.subr.mxu0 %v2137
    %2327 = vmatpush2.msra.mxu0 %v2136
    %2328 = vmatprep.subr.mxu0 %v2135
    %2329 = vmatpush2.msra.mxu0 %v2134
    %2330 = vmatprep.subr.mxu0 %v2133
    %2331 = vmatpush2.msra.mxu0 %v2132
    %2332 = vmatprep.subr.mxu0 %v2131
    %2333 = vmatpush2.msra.mxu0 %v2130
    %2334 = vmatprep.subr.mxu0 %v2129
    %2335 = vmatpush2.msra.mxu0 %v2128
    %2336 = vmatprep.subr.mxu0 %v2127
    %2337 = vmatpush2.msra.mxu0 %v2126
    %2338 = vmatprep.subr.mxu0 %v2125
    %2339 = vmatpush2.msra.mxu0 %v2124
    %2340 = vmatprep.subr.mxu0 %v2123
    %2341 = vmatpush2.msra.mxu0 %v2122
    %2342 = vmatprep.subr.mxu0 %v2121
    %2343 = vmatpush2.msra.mxu0 %v2120
    %2344 = vmatprep.mubr.f32.mxu0 %v1229
    %2345 = vmatmul.mubr.f32.gmra.mxu0 %v1228
    %v2346 = vpop.f32.mrf.mxu0
    %v2347 = vadd.f32 0.0, %v2346
    %v2348 = vpop.f32.mrf.mxu0
    %v2349 = vadd.f32 0.0, %v2348
    %2350 = vmatprep.mubr.f32.mxu0 %v1235
    %2351 = vmatmul.mubr.f32.gmra.mxu0 %v1234
    %v2352 = vpop.f32.mrf.mxu0
    %v2353 = vadd.f32 0.0, %v2352
    %v2354 = vpop.f32.mrf.mxu0
    %v2355 = vadd.f32 0.0, %v2354
    %2356 = vdwg.mxu0
    %2357 = vmatprep.subr.mxu0 %v2183
    %2358 = vmatpush1.msra.mxu0 %v2182
    %2359 = vmatprep.subr.mxu0 %v2181
    %2360 = vmatpush1.msra.mxu0 %v2180
    %2361 = vmatprep.subr.mxu0 %v2179
    %2362 = vmatpush1.msra.mxu0 %v2178
    %2363 = vmatprep.subr.mxu0 %v2177
    %2364 = vmatpush1.msra.mxu0 %v2176
    %2365 = vmatprep.subr.mxu0 %v2175
    %2366 = vmatpush1.msra.mxu0 %v2174
    %2367 = vmatprep.subr.mxu0 %v2173
    %2368 = vmatpush1.msra.mxu0 %v2172
    %2369 = vmatprep.subr.mxu0 %v2171
    %2370 = vmatpush1.msra.mxu0 %v2170
    %2371 = vmatprep.subr.mxu0 %v2169
    %2372 = vmatpush1.msra.mxu0 %v2168
    %2373 = vmatprep.subr.mxu0 %v2167
    %2374 = vmatpush1.msra.mxu0 %v2166
    %2375 = vmatprep.subr.mxu0 %v2165
    %2376 = vmatpush1.msra.mxu0 %v2164
    %2377 = vmatprep.subr.mxu0 %v2163
    %2378 = vmatpush1.msra.mxu0 %v2162
    %2379 = vmatprep.subr.mxu0 %v2161
    %2380 = vmatpush1.msra.mxu0 %v2160
    %2381 = vmatprep.subr.mxu0 %v2159
    %2382 = vmatpush1.msra.mxu0 %v2158
    %2383 = vmatprep.subr.mxu0 %v2157
    %2384 = vmatpush1.msra.mxu0 %v2156
    %2385 = vmatprep.subr.mxu0 %v2155
    %2386 = vmatpush1.msra.mxu0 %v2154
    %2387 = vmatprep.subr.mxu0 %v2153
    %2388 = vmatpush1.msra.mxu0 %v2152
    %2389 = vmatprep.subr.mxu0 %v2215
    %2390 = vmatpush2.msra.mxu0 %v2214
    %2391 = vmatprep.subr.mxu0 %v2213
    %2392 = vmatpush2.msra.mxu0 %v2212
    %2393 = vmatprep.subr.mxu0 %v2211
    %2394 = vmatpush2.msra.mxu0 %v2210
    %2395 = vmatprep.subr.mxu0 %v2209
    %2396 = vmatpush2.msra.mxu0 %v2208
    %2397 = vmatprep.subr.mxu0 %v2207
    %2398 = vmatpush2.msra.mxu0 %v2206
    %2399 = vmatprep.subr.mxu0 %v2205
    %2400 = vmatpush2.msra.mxu0 %v2204
    %2401 = vmatprep.subr.mxu0 %v2203
    %2402 = vmatpush2.msra.mxu0 %v2202
    %2403 = vmatprep.subr.mxu0 %v2201
    %2404 = vmatpush2.msra.mxu0 %v2200
    %2405 = vmatprep.subr.mxu0 %v2199
    %2406 = vmatpush2.msra.mxu0 %v2198
    %2407 = vmatprep.subr.mxu0 %v2197
    %2408 = vmatpush2.msra.mxu0 %v2196
    %2409 = vmatprep.subr.mxu0 %v2195
    %2410 = vmatpush2.msra.mxu0 %v2194
    %2411 = vmatprep.subr.mxu0 %v2193
    %2412 = vmatpush2.msra.mxu0 %v2192
    %2413 = vmatprep.subr.mxu0 %v2191
    %2414 = vmatpush2.msra.mxu0 %v2190
    %2415 = vmatprep.subr.mxu0 %v2189
    %2416 = vmatpush2.msra.mxu0 %v2188
    %2417 = vmatprep.subr.mxu0 %v2187
    %2418 = vmatpush2.msra.mxu0 %v2186
    %2419 = vmatprep.subr.mxu0 %v2185
    %2420 = vmatpush2.msra.mxu0 %v2184
    %2421 = vmatprep.mubr.f32.mxu0 %v1231
    %2422 = vmatmul.mubr.f32.gmra.mxu0 %v1230
    %v2423 = vpop.f32.mrf.mxu0
    %v2424 = vadd.f32 %v2347, %v2423
    %v2425 = vpop.f32.mrf.mxu0
    %v2426 = vadd.f32 %v2349, %v2425
    %2427 = vmatprep.mubr.f32.mxu0 %v1237
    %2428 = vmatmul.mubr.f32.gmra.mxu0 %v1236
    %v2429 = vpop.f32.mrf.mxu0
    %v2430 = vadd.f32 %v2353, %v2429
    %v2431 = vpop.f32.mrf.mxu0
    %v2432 = vadd.f32 %v2355, %v2431
    %2433 = vdwg.mxu0
    %2434 = vmatprep.subr.mxu0 %v2247
    %2435 = vmatpush1.msra.mxu0 %v2246
    %2436 = vmatprep.subr.mxu0 %v2245
    %2437 = vmatpush1.msra.mxu0 %v2244
    %2438 = vmatprep.subr.mxu0 %v2243
    %2439 = vmatpush1.msra.mxu0 %v2242
    %2440 = vmatprep.subr.mxu0 %v2241
    %2441 = vmatpush1.msra.mxu0 %v2240
    %2442 = vmatprep.subr.mxu0 %v2239
    %2443 = vmatpush1.msra.mxu0 %v2238
    %2444 = vmatprep.subr.mxu0 %v2237
    %2445 = vmatpush1.msra.mxu0 %v2236
    %2446 = vmatprep.subr.mxu0 %v2235
    %2447 = vmatpush1.msra.mxu0 %v2234
    %2448 = vmatprep.subr.mxu0 %v2233
    %2449 = vmatpush1.msra.mxu0 %v2232
    %2450 = vmatprep.subr.mxu0 %v2231
    %2451 = vmatpush1.msra.mxu0 %v2230
    %2452 = vmatprep.subr.mxu0 %v2229
    %2453 = vmatpush1.msra.mxu0 %v2228
    %2454 = vmatprep.subr.mxu0 %v2227
    %2455 = vmatpush1.msra.mxu0 %v2226
    %2456 = vmatprep.subr.mxu0 %v2225
    %2457 = vmatpush1.msra.mxu0 %v2224
    %2458 = vmatprep.subr.mxu0 %v2223
    %2459 = vmatpush1.msra.mxu0 %v2222
    %2460 = vmatprep.subr.mxu0 %v2221
    %2461 = vmatpush1.msra.mxu0 %v2220
    %2462 = vmatprep.subr.mxu0 %v2219
    %2463 = vmatpush1.msra.mxu0 %v2218
    %2464 = vmatprep.subr.mxu0 %v2217
    %2465 = vmatpush1.msra.mxu0 %v2216
    %2466 = vmatprep.subr.mxu0 %v2279
    %2467 = vmatpush2.msra.mxu0 %v2278
    %2468 = vmatprep.subr.mxu0 %v2277
    %2469 = vmatpush2.msra.mxu0 %v2276
    %2470 = vmatprep.subr.mxu0 %v2275
    %2471 = vmatpush2.msra.mxu0 %v2274
    %2472 = vmatprep.subr.mxu0 %v2273
    %2473 = vmatpush2.msra.mxu0 %v2272
    %2474 = vmatprep.subr.mxu0 %v2271
    %2475 = vmatpush2.msra.mxu0 %v2270
    %2476 = vmatprep.subr.mxu0 %v2269
    %2477 = vmatpush2.msra.mxu0 %v2268
    %2478 = vmatprep.subr.mxu0 %v2267
    %2479 = vmatpush2.msra.mxu0 %v2266
    %2480 = vmatprep.subr.mxu0 %v2265
    %2481 = vmatpush2.msra.mxu0 %v2264
    %2482 = vmatprep.subr.mxu0 %v2263
    %2483 = vmatpush2.msra.mxu0 %v2262
    %2484 = vmatprep.subr.mxu0 %v2261
    %2485 = vmatpush2.msra.mxu0 %v2260
    %2486 = vmatprep.subr.mxu0 %v2259
    %2487 = vmatpush2.msra.mxu0 %v2258
    %2488 = vmatprep.subr.mxu0 %v2257
    %2489 = vmatpush2.msra.mxu0 %v2256
    %2490 = vmatprep.subr.mxu0 %v2255
    %2491 = vmatpush2.msra.mxu0 %v2254
    %2492 = vmatprep.subr.mxu0 %v2253
    %2493 = vmatpush2.msra.mxu0 %v2252
    %2494 = vmatprep.subr.mxu0 %v2251
    %2495 = vmatpush2.msra.mxu0 %v2250
    %2496 = vmatprep.subr.mxu0 %v2249
    %2497 = vmatpush2.msra.mxu0 %v2248
    %2498 = vmatprep.mubr.f32.mxu0 %v1233
    %2499 = vmatmul.mubr.f32.gmra.mxu0 %v1232
    %v2500 = vpop.f32.mrf.mxu0
    %v2501 = vadd.f32 %v2424, %v2500
    %v2502 = vpop.f32.mrf.mxu0
    %v2503 = vadd.f32 %v2426, %v2502
    %2504 = vmatprep.mubr.f32.mxu0 %v1239
    %2505 = vmatmul.mubr.f32.gmra.mxu0 %v1238
    %v2506 = vpop.f32.mrf.mxu0
    %v2507 = vadd.f32 %v2430, %v2506
    %v2508 = vpop.f32.mrf.mxu0
    %v2509 = vadd.f32 %v2432, %v2508
    %2510 = vdwg.mxu0
    %s2511 = scalar_lea.vmem %s2, 4608
    %v2512 = vld [vmem:[%s2511] sm:$0xff]
    %v2513 = vld [vmem:[%s2511 + $0x8] sm:$0xff]
    %v2514 = vld [vmem:[%s2511 + $0x10] sm:$0xff]
    %v2515 = vld [vmem:[%s2511 + $0x18] sm:$0xff]
    %v2516 = vld [vmem:[%s2511 + $0x20] sm:$0xff]
    %v2517 = vld [vmem:[%s2511 + $0x28] sm:$0xff]
    %v2518 = vld [vmem:[%s2511 + $0x30] sm:$0xff]
    %v2519 = vld [vmem:[%s2511 + $0x38] sm:$0xff]
    %v2520 = vld [vmem:[%s2511 + $0x40] sm:$0xff]
    %v2521 = vld [vmem:[%s2511 + $0x48] sm:$0xff]
    %v2522 = vld [vmem:[%s2511 + $0x50] sm:$0xff]
    %v2523 = vld [vmem:[%s2511 + $0x58] sm:$0xff]
    %v2524 = vld [vmem:[%s2511 + $0x60] sm:$0xff]
    %v2525 = vld [vmem:[%s2511 + $0x68] sm:$0xff]
    %v2526 = vld [vmem:[%s2511 + $0x70] sm:$0xff]
    %v2527 = vld [vmem:[%s2511 + $0x78] sm:$0xff]
    %v2528 = vld [vmem:[%s2511 + $0x80] sm:$0xff]
    %v2529 = vld [vmem:[%s2511 + $0x88] sm:$0xff]
    %v2530 = vld [vmem:[%s2511 + $0x90] sm:$0xff]
    %v2531 = vld [vmem:[%s2511 + $0x98] sm:$0xff]
    %v2532 = vld [vmem:[%s2511 + $0xa0] sm:$0xff]
    %v2533 = vld [vmem:[%s2511 + $0xa8] sm:$0xff]
    %v2534 = vld [vmem:[%s2511 + $0xb0] sm:$0xff]
    %v2535 = vld [vmem:[%s2511 + $0xb8] sm:$0xff]
    %v2536 = vld [vmem:[%s2511 + $0xc0] sm:$0xff]
    %v2537 = vld [vmem:[%s2511 + $0xc8] sm:$0xff]
    %v2538 = vld [vmem:[%s2511 + $0xd0] sm:$0xff]
    %v2539 = vld [vmem:[%s2511 + $0xd8] sm:$0xff]
    %v2540 = vld [vmem:[%s2511 + $0xe0] sm:$0xff]
    %v2541 = vld [vmem:[%s2511 + $0xe8] sm:$0xff]
    %v2542 = vld [vmem:[%s2511 + $0xf0] sm:$0xff]
    %v2543 = vld [vmem:[%s2511 + $0xf8] sm:$0xff]
    %v2544 = vld [vmem:[%s2511 + $0x100] sm:$0xff]
    %v2545 = vld [vmem:[%s2511 + $0x108] sm:$0xff]
    %v2546 = vld [vmem:[%s2511 + $0x110] sm:$0xff]
    %v2547 = vld [vmem:[%s2511 + $0x118] sm:$0xff]
    %v2548 = vld [vmem:[%s2511 + $0x120] sm:$0xff]
    %v2549 = vld [vmem:[%s2511 + $0x128] sm:$0xff]
    %v2550 = vld [vmem:[%s2511 + $0x130] sm:$0xff]
    %v2551 = vld [vmem:[%s2511 + $0x138] sm:$0xff]
    %v2552 = vld [vmem:[%s2511 + $0x140] sm:$0xff]
    %v2553 = vld [vmem:[%s2511 + $0x148] sm:$0xff]
    %v2554 = vld [vmem:[%s2511 + $0x150] sm:$0xff]
    %v2555 = vld [vmem:[%s2511 + $0x158] sm:$0xff]
    %v2556 = vld [vmem:[%s2511 + $0x160] sm:$0xff]
    %v2557 = vld [vmem:[%s2511 + $0x168] sm:$0xff]
    %v2558 = vld [vmem:[%s2511 + $0x170] sm:$0xff]
    %v2559 = vld [vmem:[%s2511 + $0x178] sm:$0xff]
    %v2560 = vld [vmem:[%s2511 + $0x180] sm:$0xff]
    %v2561 = vld [vmem:[%s2511 + $0x188] sm:$0xff]
    %v2562 = vld [vmem:[%s2511 + $0x190] sm:$0xff]
    %v2563 = vld [vmem:[%s2511 + $0x198] sm:$0xff]
    %v2564 = vld [vmem:[%s2511 + $0x1a0] sm:$0xff]
    %v2565 = vld [vmem:[%s2511 + $0x1a8] sm:$0xff]
    %v2566 = vld [vmem:[%s2511 + $0x1b0] sm:$0xff]
    %v2567 = vld [vmem:[%s2511 + $0x1b8] sm:$0xff]
    %v2568 = vld [vmem:[%s2511 + $0x1c0] sm:$0xff]
    %v2569 = vld [vmem:[%s2511 + $0x1c8] sm:$0xff]
    %v2570 = vld [vmem:[%s2511 + $0x1d0] sm:$0xff]
    %v2571 = vld [vmem:[%s2511 + $0x1d8] sm:$0xff]
    %v2572 = vld [vmem:[%s2511 + $0x1e0] sm:$0xff]
    %v2573 = vld [vmem:[%s2511 + $0x1e8] sm:$0xff]
    %v2574 = vld [vmem:[%s2511 + $0x1f0] sm:$0xff]
    %v2575 = vld [vmem:[%s2511 + $0x1f8] sm:$0xff]
    %v2576 = vld [vmem:[%s2511 + $0x200] sm:$0xff]
    %v2577 = vld [vmem:[%s2511 + $0x208] sm:$0xff]
    %v2578 = vld [vmem:[%s2511 + $0x210] sm:$0xff]
    %v2579 = vld [vmem:[%s2511 + $0x218] sm:$0xff]
    %v2580 = vld [vmem:[%s2511 + $0x220] sm:$0xff]
    %v2581 = vld [vmem:[%s2511 + $0x228] sm:$0xff]
    %v2582 = vld [vmem:[%s2511 + $0x230] sm:$0xff]
    %v2583 = vld [vmem:[%s2511 + $0x238] sm:$0xff]
    %v2584 = vld [vmem:[%s2511 + $0x240] sm:$0xff]
    %v2585 = vld [vmem:[%s2511 + $0x248] sm:$0xff]
    %v2586 = vld [vmem:[%s2511 + $0x250] sm:$0xff]
    %v2587 = vld [vmem:[%s2511 + $0x258] sm:$0xff]
    %v2588 = vld [vmem:[%s2511 + $0x260] sm:$0xff]
    %v2589 = vld [vmem:[%s2511 + $0x268] sm:$0xff]
    %v2590 = vld [vmem:[%s2511 + $0x270] sm:$0xff]
    %v2591 = vld [vmem:[%s2511 + $0x278] sm:$0xff]
    %v2592 = vld [vmem:[%s2511 + $0x280] sm:$0xff]
    %v2593 = vld [vmem:[%s2511 + $0x288] sm:$0xff]
    %v2594 = vld [vmem:[%s2511 + $0x290] sm:$0xff]
    %v2595 = vld [vmem:[%s2511 + $0x298] sm:$0xff]
    %v2596 = vld [vmem:[%s2511 + $0x2a0] sm:$0xff]
    %v2597 = vld [vmem:[%s2511 + $0x2a8] sm:$0xff]
    %v2598 = vld [vmem:[%s2511 + $0x2b0] sm:$0xff]
    %v2599 = vld [vmem:[%s2511 + $0x2b8] sm:$0xff]
    %v2600 = vld [vmem:[%s2511 + $0x2c0] sm:$0xff]
    %v2601 = vld [vmem:[%s2511 + $0x2c8] sm:$0xff]
    %v2602 = vld [vmem:[%s2511 + $0x2d0] sm:$0xff]
    %v2603 = vld [vmem:[%s2511 + $0x2d8] sm:$0xff]
    %v2604 = vld [vmem:[%s2511 + $0x2e0] sm:$0xff]
    %v2605 = vld [vmem:[%s2511 + $0x2e8] sm:$0xff]
    %v2606 = vld [vmem:[%s2511 + $0x2f0] sm:$0xff]
    %v2607 = vld [vmem:[%s2511 + $0x2f8] sm:$0xff]
    %v2608 = vld [vmem:[%s2511 + $0x300] sm:$0xff]
    %v2609 = vld [vmem:[%s2511 + $0x308] sm:$0xff]
    %v2610 = vld [vmem:[%s2511 + $0x310] sm:$0xff]
    %v2611 = vld [vmem:[%s2511 + $0x318] sm:$0xff]
    %v2612 = vld [vmem:[%s2511 + $0x320] sm:$0xff]
    %v2613 = vld [vmem:[%s2511 + $0x328] sm:$0xff]
    %v2614 = vld [vmem:[%s2511 + $0x330] sm:$0xff]
    %v2615 = vld [vmem:[%s2511 + $0x338] sm:$0xff]
    %v2616 = vld [vmem:[%s2511 + $0x340] sm:$0xff]
    %v2617 = vld [vmem:[%s2511 + $0x348] sm:$0xff]
    %v2618 = vld [vmem:[%s2511 + $0x350] sm:$0xff]
    %v2619 = vld [vmem:[%s2511 + $0x358] sm:$0xff]
    %v2620 = vld [vmem:[%s2511 + $0x360] sm:$0xff]
    %v2621 = vld [vmem:[%s2511 + $0x368] sm:$0xff]
    %v2622 = vld [vmem:[%s2511 + $0x370] sm:$0xff]
    %v2623 = vld [vmem:[%s2511 + $0x378] sm:$0xff]
    %v2624 = vld [vmem:[%s2511 + $0x380] sm:$0xff]
    %v2625 = vld [vmem:[%s2511 + $0x388] sm:$0xff]
    %v2626 = vld [vmem:[%s2511 + $0x390] sm:$0xff]
    %v2627 = vld [vmem:[%s2511 + $0x398] sm:$0xff]
    %v2628 = vld [vmem:[%s2511 + $0x3a0] sm:$0xff]
    %v2629 = vld [vmem:[%s2511 + $0x3a8] sm:$0xff]
    %v2630 = vld [vmem:[%s2511 + $0x3b0] sm:$0xff]
    %v2631 = vld [vmem:[%s2511 + $0x3b8] sm:$0xff]
    %v2632 = vld [vmem:[%s2511 + $0x3c0] sm:$0xff]
    %v2633 = vld [vmem:[%s2511 + $0x3c8] sm:$0xff]
    %v2634 = vld [vmem:[%s2511 + $0x3d0] sm:$0xff]
    %v2635 = vld [vmem:[%s2511 + $0x3d8] sm:$0xff]
    %v2636 = vld [vmem:[%s2511 + $0x3e0] sm:$0xff]
    %v2637 = vld [vmem:[%s2511 + $0x3e8] sm:$0xff]
    %v2638 = vld [vmem:[%s2511 + $0x3f0] sm:$0xff]
    %v2639 = vld [vmem:[%s2511 + $0x3f8] sm:$0xff]
    %v2640 = vld [vmem:[%s2511 + $0x400] sm:$0xff]
    %v2641 = vld [vmem:[%s2511 + $0x408] sm:$0xff]
    %v2642 = vld [vmem:[%s2511 + $0x410] sm:$0xff]
    %v2643 = vld [vmem:[%s2511 + $0x418] sm:$0xff]
    %v2644 = vld [vmem:[%s2511 + $0x420] sm:$0xff]
    %v2645 = vld [vmem:[%s2511 + $0x428] sm:$0xff]
    %v2646 = vld [vmem:[%s2511 + $0x430] sm:$0xff]
    %v2647 = vld [vmem:[%s2511 + $0x438] sm:$0xff]
    %v2648 = vld [vmem:[%s2511 + $0x440] sm:$0xff]
    %v2649 = vld [vmem:[%s2511 + $0x448] sm:$0xff]
    %v2650 = vld [vmem:[%s2511 + $0x450] sm:$0xff]
    %v2651 = vld [vmem:[%s2511 + $0x458] sm:$0xff]
    %v2652 = vld [vmem:[%s2511 + $0x460] sm:$0xff]
    %v2653 = vld [vmem:[%s2511 + $0x468] sm:$0xff]
    %v2654 = vld [vmem:[%s2511 + $0x470] sm:$0xff]
    %v2655 = vld [vmem:[%s2511 + $0x478] sm:$0xff]
    %v2656 = vld [vmem:[%s2511 + $0x480] sm:$0xff]
    %v2657 = vld [vmem:[%s2511 + $0x488] sm:$0xff]
    %v2658 = vld [vmem:[%s2511 + $0x490] sm:$0xff]
    %v2659 = vld [vmem:[%s2511 + $0x498] sm:$0xff]
    %v2660 = vld [vmem:[%s2511 + $0x4a0] sm:$0xff]
    %v2661 = vld [vmem:[%s2511 + $0x4a8] sm:$0xff]
    %v2662 = vld [vmem:[%s2511 + $0x4b0] sm:$0xff]
    %v2663 = vld [vmem:[%s2511 + $0x4b8] sm:$0xff]
    %v2664 = vld [vmem:[%s2511 + $0x4c0] sm:$0xff]
    %v2665 = vld [vmem:[%s2511 + $0x4c8] sm:$0xff]
    %v2666 = vld [vmem:[%s2511 + $0x4d0] sm:$0xff]
    %v2667 = vld [vmem:[%s2511 + $0x4d8] sm:$0xff]
    %v2668 = vld [vmem:[%s2511 + $0x4e0] sm:$0xff]
    %v2669 = vld [vmem:[%s2511 + $0x4e8] sm:$0xff]
    %v2670 = vld [vmem:[%s2511 + $0x4f0] sm:$0xff]
    %v2671 = vld [vmem:[%s2511 + $0x4f8] sm:$0xff]
    %v2672 = vld [vmem:[%s2511 + $0x500] sm:$0xff]
    %v2673 = vld [vmem:[%s2511 + $0x508] sm:$0xff]
    %v2674 = vld [vmem:[%s2511 + $0x510] sm:$0xff]
    %v2675 = vld [vmem:[%s2511 + $0x518] sm:$0xff]
    %v2676 = vld [vmem:[%s2511 + $0x520] sm:$0xff]
    %v2677 = vld [vmem:[%s2511 + $0x528] sm:$0xff]
    %v2678 = vld [vmem:[%s2511 + $0x530] sm:$0xff]
    %v2679 = vld [vmem:[%s2511 + $0x538] sm:$0xff]
    %v2680 = vld [vmem:[%s2511 + $0x540] sm:$0xff]
    %v2681 = vld [vmem:[%s2511 + $0x548] sm:$0xff]
    %v2682 = vld [vmem:[%s2511 + $0x550] sm:$0xff]
    %v2683 = vld [vmem:[%s2511 + $0x558] sm:$0xff]
    %v2684 = vld [vmem:[%s2511 + $0x560] sm:$0xff]
    %v2685 = vld [vmem:[%s2511 + $0x568] sm:$0xff]
    %v2686 = vld [vmem:[%s2511 + $0x570] sm:$0xff]
    %v2687 = vld [vmem:[%s2511 + $0x578] sm:$0xff]
    %v2688 = vld [vmem:[%s2511 + $0x580] sm:$0xff]
    %v2689 = vld [vmem:[%s2511 + $0x588] sm:$0xff]
    %v2690 = vld [vmem:[%s2511 + $0x590] sm:$0xff]
    %v2691 = vld [vmem:[%s2511 + $0x598] sm:$0xff]
    %v2692 = vld [vmem:[%s2511 + $0x5a0] sm:$0xff]
    %v2693 = vld [vmem:[%s2511 + $0x5a8] sm:$0xff]
    %v2694 = vld [vmem:[%s2511 + $0x5b0] sm:$0xff]
    %v2695 = vld [vmem:[%s2511 + $0x5b8] sm:$0xff]
    %v2696 = vld [vmem:[%s2511 + $0x5c0] sm:$0xff]
    %v2697 = vld [vmem:[%s2511 + $0x5c8] sm:$0xff]
    %v2698 = vld [vmem:[%s2511 + $0x5d0] sm:$0xff]
    %v2699 = vld [vmem:[%s2511 + $0x5d8] sm:$0xff]
    %v2700 = vld [vmem:[%s2511 + $0x5e0] sm:$0xff]
    %v2701 = vld [vmem:[%s2511 + $0x5e8] sm:$0xff]
    %v2702 = vld [vmem:[%s2511 + $0x5f0] sm:$0xff]
    %v2703 = vld [vmem:[%s2511 + $0x5f8] sm:$0xff]
    %2704 = vmatprep.subr.mxu0 %v2543
    %2705 = vmatpush1.msra.mxu0 %v2542
    %2706 = vmatprep.subr.mxu0 %v2541
    %2707 = vmatpush1.msra.mxu0 %v2540
    %2708 = vmatprep.subr.mxu0 %v2539
    %2709 = vmatpush1.msra.mxu0 %v2538
    %2710 = vmatprep.subr.mxu0 %v2537
    %2711 = vmatpush1.msra.mxu0 %v2536
    %2712 = vmatprep.subr.mxu0 %v2535
    %2713 = vmatpush1.msra.mxu0 %v2534
    %2714 = vmatprep.subr.mxu0 %v2533
    %2715 = vmatpush1.msra.mxu0 %v2532
    %2716 = vmatprep.subr.mxu0 %v2531
    %2717 = vmatpush1.msra.mxu0 %v2530
    %2718 = vmatprep.subr.mxu0 %v2529
    %2719 = vmatpush1.msra.mxu0 %v2528
    %2720 = vmatprep.subr.mxu0 %v2527
    %2721 = vmatpush1.msra.mxu0 %v2526
    %2722 = vmatprep.subr.mxu0 %v2525
    %2723 = vmatpush1.msra.mxu0 %v2524
    %2724 = vmatprep.subr.mxu0 %v2523
    %2725 = vmatpush1.msra.mxu0 %v2522
    %2726 = vmatprep.subr.mxu0 %v2521
    %2727 = vmatpush1.msra.mxu0 %v2520
    %2728 = vmatprep.subr.mxu0 %v2519
    %2729 = vmatpush1.msra.mxu0 %v2518
    %2730 = vmatprep.subr.mxu0 %v2517
    %2731 = vmatpush1.msra.mxu0 %v2516
    %2732 = vmatprep.subr.mxu0 %v2515
    %2733 = vmatpush1.msra.mxu0 %v2514
    %2734 = vmatprep.subr.mxu0 %v2513
    %2735 = vmatpush1.msra.mxu0 %v2512
    %2736 = vmatprep.subr.mxu0 %v2575
    %2737 = vmatpush2.msra.mxu0 %v2574
    %2738 = vmatprep.subr.mxu0 %v2573
    %2739 = vmatpush2.msra.mxu0 %v2572
    %2740 = vmatprep.subr.mxu0 %v2571
    %2741 = vmatpush2.msra.mxu0 %v2570
    %2742 = vmatprep.subr.mxu0 %v2569
    %2743 = vmatpush2.msra.mxu0 %v2568
    %2744 = vmatprep.subr.mxu0 %v2567
    %2745 = vmatpush2.msra.mxu0 %v2566
    %2746 = vmatprep.subr.mxu0 %v2565
    %2747 = vmatpush2.msra.mxu0 %v2564
    %2748 = vmatprep.subr.mxu0 %v2563
    %2749 = vmatpush2.msra.mxu0 %v2562
    %2750 = vmatprep.subr.mxu0 %v2561
    %2751 = vmatpush2.msra.mxu0 %v2560
    %2752 = vmatprep.subr.mxu0 %v2559
    %2753 = vmatpush2.msra.mxu0 %v2558
    %2754 = vmatprep.subr.mxu0 %v2557
    %2755 = vmatpush2.msra.mxu0 %v2556
    %2756 = vmatprep.subr.mxu0 %v2555
    %2757 = vmatpush2.msra.mxu0 %v2554
    %2758 = vmatprep.subr.mxu0 %v2553
    %2759 = vmatpush2.msra.mxu0 %v2552
    %2760 = vmatprep.subr.mxu0 %v2551
    %2761 = vmatpush2.msra.mxu0 %v2550
    %2762 = vmatprep.subr.mxu0 %v2549
    %2763 = vmatpush2.msra.mxu0 %v2548
    %2764 = vmatprep.subr.mxu0 %v2547
    %2765 = vmatpush2.msra.mxu0 %v2546
    %2766 = vmatprep.subr.mxu0 %v2545
    %2767 = vmatpush2.msra.mxu0 %v2544
    %2768 = vmatprep.mubr.f32.mxu0 %v1229
    %2769 = vmatmul.mubr.f32.gmra.mxu0 %v1228
    %v2770 = vpop.f32.mrf.mxu0
    %v2771 = vadd.f32 0.0, %v2770
    %v2772 = vpop.f32.mrf.mxu0
    %v2773 = vadd.f32 0.0, %v2772
    %2774 = vmatprep.mubr.f32.mxu0 %v1235
    %2775 = vmatmul.mubr.f32.gmra.mxu0 %v1234
    %v2776 = vpop.f32.mrf.mxu0
    %v2777 = vadd.f32 0.0, %v2776
    %v2778 = vpop.f32.mrf.mxu0
    %v2779 = vadd.f32 0.0, %v2778
    %2780 = vdwg.mxu0
    %2781 = vmatprep.subr.mxu0 %v2607
    %2782 = vmatpush1.msra.mxu0 %v2606
    %2783 = vmatprep.subr.mxu0 %v2605
    %2784 = vmatpush1.msra.mxu0 %v2604
    %2785 = vmatprep.subr.mxu0 %v2603
    %2786 = vmatpush1.msra.mxu0 %v2602
    %2787 = vmatprep.subr.mxu0 %v2601
    %2788 = vmatpush1.msra.mxu0 %v2600
    %2789 = vmatprep.subr.mxu0 %v2599
    %2790 = vmatpush1.msra.mxu0 %v2598
    %2791 = vmatprep.subr.mxu0 %v2597
    %2792 = vmatpush1.msra.mxu0 %v2596
    %2793 = vmatprep.subr.mxu0 %v2595
    %2794 = vmatpush1.msra.mxu0 %v2594
    %2795 = vmatprep.subr.mxu0 %v2593
    %2796 = vmatpush1.msra.mxu0 %v2592
    %2797 = vmatprep.subr.mxu0 %v2591
    %2798 = vmatpush1.msra.mxu0 %v2590
    %2799 = vmatprep.subr.mxu0 %v2589
    %2800 = vmatpush1.msra.mxu0 %v2588
    %2801 = vmatprep.subr.mxu0 %v2587
    %2802 = vmatpush1.msra.mxu0 %v2586
    %2803 = vmatprep.subr.mxu0 %v2585
    %2804 = vmatpush1.msra.mxu0 %v2584
    %2805 = vmatprep.subr.mxu0 %v2583
    %2806 = vmatpush1.msra.mxu0 %v2582
    %2807 = vmatprep.subr.mxu0 %v2581
    %2808 = vmatpush1.msra.mxu0 %v2580
    %2809 = vmatprep.subr.mxu0 %v2579
    %2810 = vmatpush1.msra.mxu0 %v2578
    %2811 = vmatprep.subr.mxu0 %v2577
    %2812 = vmatpush1.msra.mxu0 %v2576
    %2813 = vmatprep.subr.mxu0 %v2639
    %2814 = vmatpush2.msra.mxu0 %v2638
    %2815 = vmatprep.subr.mxu0 %v2637
    %2816 = vmatpush2.msra.mxu0 %v2636
    %2817 = vmatprep.subr.mxu0 %v2635
    %2818 = vmatpush2.msra.mxu0 %v2634
    %2819 = vmatprep.subr.mxu0 %v2633
    %2820 = vmatpush2.msra.mxu0 %v2632
    %2821 = vmatprep.subr.mxu0 %v2631
    %2822 = vmatpush2.msra.mxu0 %v2630
    %2823 = vmatprep.subr.mxu0 %v2629
    %2824 = vmatpush2.msra.mxu0 %v2628
    %2825 = vmatprep.subr.mxu0 %v2627
    %2826 = vmatpush2.msra.mxu0 %v2626
    %2827 = vmatprep.subr.mxu0 %v2625
    %2828 = vmatpush2.msra.mxu0 %v2624
    %2829 = vmatprep.subr.mxu0 %v2623
    %2830 = vmatpush2.msra.mxu0 %v2622
    %2831 = vmatprep.subr.mxu0 %v2621
    %2832 = vmatpush2.msra.mxu0 %v2620
    %2833 = vmatprep.subr.mxu0 %v2619
    %2834 = vmatpush2.msra.mxu0 %v2618
    %2835 = vmatprep.subr.mxu0 %v2617
    %2836 = vmatpush2.msra.mxu0 %v2616
    %2837 = vmatprep.subr.mxu0 %v2615
    %2838 = vmatpush2.msra.mxu0 %v2614
    %2839 = vmatprep.subr.mxu0 %v2613
    %2840 = vmatpush2.msra.mxu0 %v2612
    %2841 = vmatprep.subr.mxu0 %v2611
    %2842 = vmatpush2.msra.mxu0 %v2610
    %2843 = vmatprep.subr.mxu0 %v2609
    %2844 = vmatpush2.msra.mxu0 %v2608
    %2845 = vmatprep.mubr.f32.mxu0 %v1231
    %2846 = vmatmul.mubr.f32.gmra.mxu0 %v1230
    %v2847 = vpop.f32.mrf.mxu0
    %v2848 = vadd.f32 %v2771, %v2847
    %v2849 = vpop.f32.mrf.mxu0
    %v2850 = vadd.f32 %v2773, %v2849
    %2851 = vmatprep.mubr.f32.mxu0 %v1237
    %2852 = vmatmul.mubr.f32.gmra.mxu0 %v1236
    %v2853 = vpop.f32.mrf.mxu0
    %v2854 = vadd.f32 %v2777, %v2853
    %v2855 = vpop.f32.mrf.mxu0
    %v2856 = vadd.f32 %v2779, %v2855
    %2857 = vdwg.mxu0
    %2858 = vmatprep.subr.mxu0 %v2671
    %2859 = vmatpush1.msra.mxu0 %v2670
    %2860 = vmatprep.subr.mxu0 %v2669
    %2861 = vmatpush1.msra.mxu0 %v2668
    %2862 = vmatprep.subr.mxu0 %v2667
    %2863 = vmatpush1.msra.mxu0 %v2666
    %2864 = vmatprep.subr.mxu0 %v2665
    %2865 = vmatpush1.msra.mxu0 %v2664
    %2866 = vmatprep.subr.mxu0 %v2663
    %2867 = vmatpush1.msra.mxu0 %v2662
    %2868 = vmatprep.subr.mxu0 %v2661
    %2869 = vmatpush1.msra.mxu0 %v2660
    %2870 = vmatprep.subr.mxu0 %v2659
    %2871 = vmatpush1.msra.mxu0 %v2658
    %2872 = vmatprep.subr.mxu0 %v2657
    %2873 = vmatpush1.msra.mxu0 %v2656
    %2874 = vmatprep.subr.mxu0 %v2655
    %2875 = vmatpush1.msra.mxu0 %v2654
    %2876 = vmatprep.subr.mxu0 %v2653
    %2877 = vmatpush1.msra.mxu0 %v2652
    %2878 = vmatprep.subr.mxu0 %v2651
    %2879 = vmatpush1.msra.mxu0 %v2650
    %2880 = vmatprep.subr.mxu0 %v2649
    %2881 = vmatpush1.msra.mxu0 %v2648
    %2882 = vmatprep.subr.mxu0 %v2647
    %2883 = vmatpush1.msra.mxu0 %v2646
    %2884 = vmatprep.subr.mxu0 %v2645
    %2885 = vmatpush1.msra.mxu0 %v2644
    %2886 = vmatprep.subr.mxu0 %v2643
    %2887 = vmatpush1.msra.mxu0 %v2642
    %2888 = vmatprep.subr.mxu0 %v2641
    %2889 = vmatpush1.msra.mxu0 %v2640
    %2890 = vmatprep.subr.mxu0 %v2703
    %2891 = vmatpush2.msra.mxu0 %v2702
    %2892 = vmatprep.subr.mxu0 %v2701
    %2893 = vmatpush2.msra.mxu0 %v2700
    %2894 = vmatprep.subr.mxu0 %v2699
    %2895 = vmatpush2.msra.mxu0 %v2698
    %2896 = vmatprep.subr.mxu0 %v2697
    %2897 = vmatpush2.msra.mxu0 %v2696
    %2898 = vmatprep.subr.mxu0 %v2695
    %2899 = vmatpush2.msra.mxu0 %v2694
    %2900 = vmatprep.subr.mxu0 %v2693
    %2901 = vmatpush2.msra.mxu0 %v2692
    %2902 = vmatprep.subr.mxu0 %v2691
    %2903 = vmatpush2.msra.mxu0 %v2690
    %2904 = vmatprep.subr.mxu0 %v2689
    %2905 = vmatpush2.msra.mxu0 %v2688
    %2906 = vmatprep.subr.mxu0 %v2687
    %2907 = vmatpush2.msra.mxu0 %v2686
    %2908 = vmatprep.subr.mxu0 %v2685
    %2909 = vmatpush2.msra.mxu0 %v2684
    %2910 = vmatprep.subr.mxu0 %v2683
    %2911 = vmatpush2.msra.mxu0 %v2682
    %2912 = vmatprep.subr.mxu0 %v2681
    %2913 = vmatpush2.msra.mxu0 %v2680
    %2914 = vmatprep.subr.mxu0 %v2679
    %2915 = vmatpush2.msra.mxu0 %v2678
    %2916 = vmatprep.subr.mxu0 %v2677
    %2917 = vmatpush2.msra.mxu0 %v2676
    %2918 = vmatprep.subr.mxu0 %v2675
    %2919 = vmatpush2.msra.mxu0 %v2674
    %2920 = vmatprep.subr.mxu0 %v2673
    %2921 = vmatpush2.msra.mxu0 %v2672
    %2922 = vmatprep.mubr.f32.mxu0 %v1233
    %2923 = vmatmul.mubr.f32.gmra.mxu0 %v1232
    %v2924 = vpop.f32.mrf.mxu0
    %v2925 = vadd.f32 %v2848, %v2924
    %v2926 = vpop.f32.mrf.mxu0
    %v2927 = vadd.f32 %v2850, %v2926
    %2928 = vmatprep.mubr.f32.mxu0 %v1239
    %2929 = vmatmul.mubr.f32.gmra.mxu0 %v1238
    %v2930 = vpop.f32.mrf.mxu0
    %v2931 = vadd.f32 %v2854, %v2930
    %v2932 = vpop.f32.mrf.mxu0
    %v2933 = vadd.f32 %v2856, %v2932
    %2934 = vdwg.mxu0
    %v2935 = vmax.f32 %v1653, %v2077
    %v2936 = vmax.f32 %v1655, %v2079
    %v2937 = vmax.f32 %v1659, %v2083
    %v2938 = vmax.f32 %v1661, %v2085
    %v2939 = vmax.f32 %v2501, %v2925
    %v2940 = vmax.f32 %v2503, %v2927
    %v2941 = vmax.f32 %v2507, %v2931
    %v2942 = vmax.f32 %v2509, %v2933
    %v2943 = vmax.f32 %v2935, %v2939
    %v2944 = vmax.f32 %v2936, %v2940
    %v2945 = vmax.f32 %v2937, %v2941
    %v2946 = vmax.f32 %v2938, %v2942
    %v2947 = vld [vmem:[%s3] sm:$0xff]
    %v2948 = vld [vmem:[%s3 + $0x8] sm:$0xff]
    %v2949 = vld [vmem:[%s3 + $0x10] sm:$0xff]
    %v2950 = vld [vmem:[%s3 + $0x18] sm:$0xff]
    %v2951 = vld [vmem:[%s3 + $0x20] sm:$0xff]
    %v2952 = vld [vmem:[%s3 + $0x28] sm:$0xff]
    %v2953 = vld [vmem:[%s3 + $0x30] sm:$0xff]
    %v2954 = vld [vmem:[%s3 + $0x38] sm:$0xff]
    %v2955 = vld [vmem:[%s3 + $0x40] sm:$0xff]
    %v2956 = vld [vmem:[%s3 + $0x48] sm:$0xff]
    %v2957 = vld [vmem:[%s3 + $0x50] sm:$0xff]
    %v2958 = vld [vmem:[%s3 + $0x58] sm:$0xff]
    %v2959 = vld [vmem:[%s3 + $0x60] sm:$0xff]
    %v2960 = vld [vmem:[%s3 + $0x68] sm:$0xff]
    %v2961 = vld [vmem:[%s3 + $0x70] sm:$0xff]
    %v2962 = vld [vmem:[%s3 + $0x78] sm:$0xff]
    %v2963 = vld [vmem:[%s3 + $0x80] sm:$0xff]
    %v2964 = vld [vmem:[%s3 + $0x88] sm:$0xff]
    %v2965 = vld [vmem:[%s3 + $0x90] sm:$0xff]
    %v2966 = vld [vmem:[%s3 + $0x98] sm:$0xff]
    %v2967 = vld [vmem:[%s3 + $0xa0] sm:$0xff]
    %v2968 = vld [vmem:[%s3 + $0xa8] sm:$0xff]
    %v2969 = vld [vmem:[%s3 + $0xb0] sm:$0xff]
    %v2970 = vld [vmem:[%s3 + $0xb8] sm:$0xff]
    %v2971 = vld [vmem:[%s3 + $0xc0] sm:$0xff]
    %v2972 = vld [vmem:[%s3 + $0xc8] sm:$0xff]
    %v2973 = vld [vmem:[%s3 + $0xd0] sm:$0xff]
    %v2974 = vld [vmem:[%s3 + $0xd8] sm:$0xff]
    %v2975 = vld [vmem:[%s3 + $0xe0] sm:$0xff]
    %v2976 = vld [vmem:[%s3 + $0xe8] sm:$0xff]
    %v2977 = vld [vmem:[%s3 + $0xf0] sm:$0xff]
    %v2978 = vld [vmem:[%s3 + $0xf8] sm:$0xff]
    %v2979 = vld [vmem:[%s3 + $0x100] sm:$0xff]
    %v2980 = vld [vmem:[%s3 + $0x108] sm:$0xff]
    %v2981 = vld [vmem:[%s3 + $0x110] sm:$0xff]
    %v2982 = vld [vmem:[%s3 + $0x118] sm:$0xff]
    %v2983 = vld [vmem:[%s3 + $0x120] sm:$0xff]
    %v2984 = vld [vmem:[%s3 + $0x128] sm:$0xff]
    %v2985 = vld [vmem:[%s3 + $0x130] sm:$0xff]
    %v2986 = vld [vmem:[%s3 + $0x138] sm:$0xff]
    %v2987 = vld [vmem:[%s3 + $0x140] sm:$0xff]
    %v2988 = vld [vmem:[%s3 + $0x148] sm:$0xff]
    %v2989 = vld [vmem:[%s3 + $0x150] sm:$0xff]
    %v2990 = vld [vmem:[%s3 + $0x158] sm:$0xff]
    %v2991 = vld [vmem:[%s3 + $0x160] sm:$0xff]
    %v2992 = vld [vmem:[%s3 + $0x168] sm:$0xff]
    %v2993 = vld [vmem:[%s3 + $0x170] sm:$0xff]
    %v2994 = vld [vmem:[%s3 + $0x178] sm:$0xff]
    %v2995 = vld [vmem:[%s3 + $0x180] sm:$0xff]
    %v2996 = vld [vmem:[%s3 + $0x188] sm:$0xff]
    %v2997 = vld [vmem:[%s3 + $0x190] sm:$0xff]
    %v2998 = vld [vmem:[%s3 + $0x198] sm:$0xff]
    %v2999 = vld [vmem:[%s3 + $0x1a0] sm:$0xff]
    %v3000 = vld [vmem:[%s3 + $0x1a8] sm:$0xff]
    %v3001 = vld [vmem:[%s3 + $0x1b0] sm:$0xff]
    %v3002 = vld [vmem:[%s3 + $0x1b8] sm:$0xff]
    %v3003 = vld [vmem:[%s3 + $0x1c0] sm:$0xff]
    %v3004 = vld [vmem:[%s3 + $0x1c8] sm:$0xff]
    %v3005 = vld [vmem:[%s3 + $0x1d0] sm:$0xff]
    %v3006 = vld [vmem:[%s3 + $0x1d8] sm:$0xff]
    %v3007 = vld [vmem:[%s3 + $0x1e0] sm:$0xff]
    %v3008 = vld [vmem:[%s3 + $0x1e8] sm:$0xff]
    %v3009 = vld [vmem:[%s3 + $0x1f0] sm:$0xff]
    %v3010 = vld [vmem:[%s3 + $0x1f8] sm:$0xff]
    %v3011 = vstv %s43
    %3012 = vmatprep.subr.mxu0 %v2978
    %3013 = vmatpush1.msra.mxu0 %v2977
    %3014 = vmatprep.subr.mxu0 %v2976
    %3015 = vmatpush1.msra.mxu0 %v2975
    %3016 = vmatprep.subr.mxu0 %v2974
    %3017 = vmatpush1.msra.mxu0 %v2973
    %3018 = vmatprep.subr.mxu0 %v2972
    %3019 = vmatpush1.msra.mxu0 %v2971
    %3020 = vmatprep.subr.mxu0 %v2970
    %3021 = vmatpush1.msra.mxu0 %v2969
    %3022 = vmatprep.subr.mxu0 %v2968
    %3023 = vmatpush1.msra.mxu0 %v2967
    %3024 = vmatprep.subr.mxu0 %v2966
    %3025 = vmatpush1.msra.mxu0 %v2965
    %3026 = vmatprep.subr.mxu0 %v2964
    %3027 = vmatpush1.msra.mxu0 %v2963
    %3028 = vmatprep.subr.mxu0 %v2962
    %3029 = vmatpush1.msra.mxu0 %v2961
    %3030 = vmatprep.subr.mxu0 %v2960
    %3031 = vmatpush1.msra.mxu0 %v2959
    %3032 = vmatprep.subr.mxu0 %v2958
    %3033 = vmatpush1.msra.mxu0 %v2957
    %3034 = vmatprep.subr.mxu0 %v2956
    %3035 = vmatpush1.msra.mxu0 %v2955
    %3036 = vmatprep.subr.mxu0 %v2954
    %3037 = vmatpush1.msra.mxu0 %v2953
    %3038 = vmatprep.subr.mxu0 %v2952
    %3039 = vmatpush1.msra.mxu0 %v2951
    %3040 = vmatprep.subr.mxu0 %v2950
    %3041 = vmatpush1.msra.mxu0 %v2949
    %3042 = vmatprep.subr.mxu0 %v2948
    %3043 = vmatpush1.msra.mxu0 %v2947
    %3044 = vmatprep.subr.mxu0 %v3010
    %3045 = vmatpush2.msra.mxu0 %v3009
    %3046 = vmatprep.subr.mxu0 %v3008
    %3047 = vmatpush2.msra.mxu0 %v3007
    %3048 = vmatprep.subr.mxu0 %v3006
    %3049 = vmatpush2.msra.mxu0 %v3005
    %3050 = vmatprep.subr.mxu0 %v3004
    %3051 = vmatpush2.msra.mxu0 %v3003
    %3052 = vmatprep.subr.mxu0 %v3002
    %3053 = vmatpush2.msra.mxu0 %v3001
    %3054 = vmatprep.subr.mxu0 %v3000
    %3055 = vmatpush2.msra.mxu0 %v2999
    %3056 = vmatprep.subr.mxu0 %v2998
    %3057 = vmatpush2.msra.mxu0 %v2997
    %3058 = vmatprep.subr.mxu0 %v2996
    %3059 = vmatpush2.msra.mxu0 %v2995
    %3060 = vmatprep.subr.mxu0 %v2994
    %3061 = vmatpush2.msra.mxu0 %v2993
    %3062 = vmatprep.subr.mxu0 %v2992
    %3063 = vmatpush2.msra.mxu0 %v2991
    %3064 = vmatprep.subr.mxu0 %v2990
    %3065 = vmatpush2.msra.mxu0 %v2989
    %3066 = vmatprep.subr.mxu0 %v2988
    %3067 = vmatpush2.msra.mxu0 %v2987
    %3068 = vmatprep.subr.mxu0 %v2986
    %3069 = vmatpush2.msra.mxu0 %v2985
    %3070 = vmatprep.subr.mxu0 %v2984
    %3071 = vmatpush2.msra.mxu0 %v2983
    %3072 = vmatprep.subr.mxu0 %v2982
    %3073 = vmatpush2.msra.mxu0 %v2981
    %3074 = vmatprep.subr.mxu0 %v2980
    %3075 = vmatpush2.msra.mxu0 %v2979
    %3076 = vmatprep.mubr.f32.mxu0 %v2944
    %3077 = vmatmul.mubr.f32.gmra.mxu0 %v2943
    %v3078 = vpop.f32.mrf.mxu0
    %v3079 = vadd.f32 %v3011, %v3078
    %v3080 = vpop.f32.mrf.mxu0
    %v3081 = vadd.f32 %v3011, %v3080
    %3082 = vmatprep.mubr.f32.mxu0 %v2946
    %3083 = vmatmul.mubr.f32.gmra.mxu0 %v2945
    %v3084 = vpop.f32.mrf.mxu0
    %v3085 = vadd.f32 %v3011, %v3084
    %v3086 = vpop.f32.mrf.mxu0
    %v3087 = vadd.f32 %v3011, %v3086
    %3088 = vdwg.mxu0
    %v3089 = vmax.f32 %v3079, 0.0
    %v3090 = vmax.f32 %v3081, 0.0
    %v3091 = vmax.f32 %v3085, 0.0
    %v3092 = vmax.f32 %v3087, 0.0
    %v3093 = vld [vmem:[%s4] sm:$0xff]
    %v3094 = vld [vmem:[%s4 + $0x8] sm:$0xff]
    %v3095 = vld [vmem:[%s4 + $0x10] sm:$0xff]
    %v3096 = vld [vmem:[%s4 + $0x18] sm:$0xff]
    %v3097 = vld [vmem:[%s4 + $0x20] sm:$0xff]
    %v3098 = vld [vmem:[%s4 + $0x28] sm:$0xff]
    %v3099 = vld [vmem:[%s4 + $0x30] sm:$0xff]
    %v3100 = vld [vmem:[%s4 + $0x38] sm:$0xff]
    %v3101 = vld [vmem:[%s4 + $0x40] sm:$0xff]
    %v3102 = vld [vmem:[%s4 + $0x48] sm:$0xff]
    %v3103 = vld [vmem:[%s4 + $0x50] sm:$0xff]
    %v3104 = vld [vmem:[%s4 + $0x58] sm:$0xff]
    %v3105 = vld [vmem:[%s4 + $0x60] sm:$0xff]
    %v3106 = vld [vmem:[%s4 + $0x68] sm:$0xff]
    %v3107 = vld [vmem:[%s4 + $0x70] sm:$0xff]
    %v3108 = vld [vmem:[%s4 + $0x78] sm:$0xff]
    %v3109 = vld [vmem:[%s4 + $0x80] sm:$0xff]
    %v3110 = vld [vmem:[%s4 + $0x88] sm:$0xff]
    %v3111 = vld [vmem:[%s4 + $0x90] sm:$0xff]
    %v3112 = vld [vmem:[%s4 + $0x98] sm:$0xff]
    %v3113 = vld [vmem:[%s4 + $0xa0] sm:$0xff]
    %v3114 = vld [vmem:[%s4 + $0xa8] sm:$0xff]
    %v3115 = vld [vmem:[%s4 + $0xb0] sm:$0xff]
    %v3116 = vld [vmem:[%s4 + $0xb8] sm:$0xff]
    %v3117 = vld [vmem:[%s4 + $0xc0] sm:$0xff]
    %v3118 = vld [vmem:[%s4 + $0xc8] sm:$0xff]
    %v3119 = vld [vmem:[%s4 + $0xd0] sm:$0xff]
    %v3120 = vld [vmem:[%s4 + $0xd8] sm:$0xff]
    %v3121 = vld [vmem:[%s4 + $0xe0] sm:$0xff]
    %v3122 = vld [vmem:[%s4 + $0xe8] sm:$0xff]
    %v3123 = vld [vmem:[%s4 + $0xf0] sm:$0xff]
    %v3124 = vld [vmem:[%s4 + $0xf8] sm:$0xff]
    %3125 = vmatprep.subr.mxu0 0.0
    %3126 = vmatpush1.msra.mxu0 %v3108
    %3127 = vmatprep.subr.mxu0 0.0
    %3128 = vmatpush1.msra.mxu0 %v3107
    %3129 = vmatprep.subr.mxu0 0.0
    %3130 = vmatpush1.msra.mxu0 %v3106
    %3131 = vmatprep.subr.mxu0 0.0
    %3132 = vmatpush1.msra.mxu0 %v3105
    %3133 = vmatprep.subr.mxu0 0.0
    %3134 = vmatpush1.msra.mxu0 %v3104
    %3135 = vmatprep.subr.mxu0 0.0
    %3136 = vmatpush1.msra.mxu0 %v3103
    %3137 = vmatprep.subr.mxu0 0.0
    %3138 = vmatpush1.msra.mxu0 %v3102
    %3139 = vmatprep.subr.mxu0 0.0
    %3140 = vmatpush1.msra.mxu0 %v3101
    %3141 = vmatprep.subr.mxu0 0.0
    %3142 = vmatpush1.msra.mxu0 %v3100
    %3143 = vmatprep.subr.mxu0 0.0
    %3144 = vmatpush1.msra.mxu0 %v3099
    %3145 = vmatprep.subr.mxu0 0.0
    %3146 = vmatpush1.msra.mxu0 %v3098
    %3147 = vmatprep.subr.mxu0 0.0
    %3148 = vmatpush1.msra.mxu0 %v3097
    %3149 = vmatprep.subr.mxu0 0.0
    %3150 = vmatpush1.msra.mxu0 %v3096
    %3151 = vmatprep.subr.mxu0 0.0
    %3152 = vmatpush1.msra.mxu0 %v3095
    %3153 = vmatprep.subr.mxu0 0.0
    %3154 = vmatpush1.msra.mxu0 %v3094
    %3155 = vmatprep.subr.mxu0 0.0
    %3156 = vmatpush1.msra.mxu0 %v3093
    %3157 = vmatprep.subr.mxu0 0.0
    %3158 = vmatpush2.msra.mxu0 %v3124
    %3159 = vmatprep.subr.mxu0 0.0
    %3160 = vmatpush2.msra.mxu0 %v3123
    %3161 = vmatprep.subr.mxu0 0.0
    %3162 = vmatpush2.msra.mxu0 %v3122
    %3163 = vmatprep.subr.mxu0 0.0
    %3164 = vmatpush2.msra.mxu0 %v3121
    %3165 = vmatprep.subr.mxu0 0.0
    %3166 = vmatpush2.msra.mxu0 %v3120
    %3167 = vmatprep.subr.mxu0 0.0
    %3168 = vmatpush2.msra.mxu0 %v3119
    %3169 = vmatprep.subr.mxu0 0.0
    %3170 = vmatpush2.msra.mxu0 %v3118
    %3171 = vmatprep.subr.mxu0 0.0
    %3172 = vmatpush2.msra.mxu0 %v3117
    %3173 = vmatprep.subr.mxu0 0.0
    %3174 = vmatpush2.msra.mxu0 %v3116
    %3175 = vmatprep.subr.mxu0 0.0
    %3176 = vmatpush2.msra.mxu0 %v3115
    %3177 = vmatprep.subr.mxu0 0.0
    %3178 = vmatpush2.msra.mxu0 %v3114
    %3179 = vmatprep.subr.mxu0 0.0
    %3180 = vmatpush2.msra.mxu0 %v3113
    %3181 = vmatprep.subr.mxu0 0.0
    %3182 = vmatpush2.msra.mxu0 %v3112
    %3183 = vmatprep.subr.mxu0 0.0
    %3184 = vmatpush2.msra.mxu0 %v3111
    %3185 = vmatprep.subr.mxu0 0.0
    %3186 = vmatpush2.msra.mxu0 %v3110
    %3187 = vmatprep.subr.mxu0 0.0
    %3188 = vmatpush2.msra.mxu0 %v3109
    %3189 = vmatprep.mubr.f32.mxu0 %v3090
    %3190 = vmatmul.mubr.f32.gmra.mxu0 %v3089
    %v3191 = vpop.f32.mrf.mxu0
    %v3192 = vadd.f32 0.0, %v3191
    %v3193 = vpop.f32.mrf.mxu0
    %3194 = vmatprep.mubr.f32.mxu0 %v3092
    %3195 = vmatmul.mubr.f32.gmra.mxu0 %v3091
    %v3196 = vpop.f32.mrf.mxu0
    %v3197 = vadd.f32 0.0, %v3196
    %v3198 = vpop.f32.mrf.mxu0
    %3199 = vdwg.mxu0
    %s3200 = scalar_lea.vmem %s4, 256
    %v3201 = vld [vmem:[%s3200] sm:$0xff]
    %v3202 = vld [vmem:[%s3200 + $0x8] sm:$0xff]
    %v3203 = vld [vmem:[%s3200 + $0x10] sm:$0xff]
    %v3204 = vld [vmem:[%s3200 + $0x18] sm:$0xff]
    %v3205 = vld [vmem:[%s3200 + $0x20] sm:$0xff]
    %v3206 = vld [vmem:[%s3200 + $0x28] sm:$0xff]
    %v3207 = vld [vmem:[%s3200 + $0x30] sm:$0xff]
    %v3208 = vld [vmem:[%s3200 + $0x38] sm:$0xff]
    %v3209 = vld [vmem:[%s3200 + $0x40] sm:$0xff]
    %v3210 = vld [vmem:[%s3200 + $0x48] sm:$0xff]
    %v3211 = vld [vmem:[%s3200 + $0x50] sm:$0xff]
    %v3212 = vld [vmem:[%s3200 + $0x58] sm:$0xff]
    %v3213 = vld [vmem:[%s3200 + $0x60] sm:$0xff]
    %v3214 = vld [vmem:[%s3200 + $0x68] sm:$0xff]
    %v3215 = vld [vmem:[%s3200 + $0x70] sm:$0xff]
    %v3216 = vld [vmem:[%s3200 + $0x78] sm:$0xff]
    %v3217 = vld [vmem:[%s3200 + $0x80] sm:$0xff]
    %v3218 = vld [vmem:[%s3200 + $0x88] sm:$0xff]
    %v3219 = vld [vmem:[%s3200 + $0x90] sm:$0xff]
    %v3220 = vld [vmem:[%s3200 + $0x98] sm:$0xff]
    %v3221 = vld [vmem:[%s3200 + $0xa0] sm:$0xff]
    %v3222 = vld [vmem:[%s3200 + $0xa8] sm:$0xff]
    %v3223 = vld [vmem:[%s3200 + $0xb0] sm:$0xff]
    %v3224 = vld [vmem:[%s3200 + $0xb8] sm:$0xff]
    %v3225 = vld [vmem:[%s3200 + $0xc0] sm:$0xff]
    %v3226 = vld [vmem:[%s3200 + $0xc8] sm:$0xff]
    %v3227 = vld [vmem:[%s3200 + $0xd0] sm:$0xff]
    %v3228 = vld [vmem:[%s3200 + $0xd8] sm:$0xff]
    %v3229 = vld [vmem:[%s3200 + $0xe0] sm:$0xff]
    %v3230 = vld [vmem:[%s3200 + $0xe8] sm:$0xff]
    %v3231 = vld [vmem:[%s3200 + $0xf0] sm:$0xff]
    %v3232 = vld [vmem:[%s3200 + $0xf8] sm:$0xff]
    %3233 = vmatprep.subr.mxu0 0.0
    %3234 = vmatpush1.msra.mxu0 %v3216
    %3235 = vmatprep.subr.mxu0 0.0
    %3236 = vmatpush1.msra.mxu0 %v3215
    %3237 = vmatprep.subr.mxu0 0.0
    %3238 = vmatpush1.msra.mxu0 %v3214
    %3239 = vmatprep.subr.mxu0 0.0
    %3240 = vmatpush1.msra.mxu0 %v3213
    %3241 = vmatprep.subr.mxu0 0.0
    %3242 = vmatpush1.msra.mxu0 %v3212
    %3243 = vmatprep.subr.mxu0 0.0
    %3244 = vmatpush1.msra.mxu0 %v3211
    %3245 = vmatprep.subr.mxu0 0.0
    %3246 = vmatpush1.msra.mxu0 %v3210
    %3247 = vmatprep.subr.mxu0 0.0
    %3248 = vmatpush1.msra.mxu0 %v3209
    %3249 = vmatprep.subr.mxu0 0.0
    %3250 = vmatpush1.msra.mxu0 %v3208
    %3251 = vmatprep.subr.mxu0 0.0
    %3252 = vmatpush1.msra.mxu0 %v3207
    %3253 = vmatprep.subr.mxu0 0.0
    %3254 = vmatpush1.msra.mxu0 %v3206
    %3255 = vmatprep.subr.mxu0 0.0
    %3256 = vmatpush1.msra.mxu0 %v3205
    %3257 = vmatprep.subr.mxu0 0.0
    %3258 = vmatpush1.msra.mxu0 %v3204
    %3259 = vmatprep.subr.mxu0 0.0
    %3260 = vmatpush1.msra.mxu0 %v3203
    %3261 = vmatprep.subr.mxu0 0.0
    %3262 = vmatpush1.msra.mxu0 %v3202
    %3263 = vmatprep.subr.mxu0 0.0
    %3264 = vmatpush1.msra.mxu0 %v3201
    %3265 = vmatprep.subr.mxu0 0.0
    %3266 = vmatpush2.msra.mxu0 %v3232
    %3267 = vmatprep.subr.mxu0 0.0
    %3268 = vmatpush2.msra.mxu0 %v3231
    %3269 = vmatprep.subr.mxu0 0.0
    %3270 = vmatpush2.msra.mxu0 %v3230
    %3271 = vmatprep.subr.mxu0 0.0
    %3272 = vmatpush2.msra.mxu0 %v3229
    %3273 = vmatprep.subr.mxu0 0.0
    %3274 = vmatpush2.msra.mxu0 %v3228
    %3275 = vmatprep.subr.mxu0 0.0
    %3276 = vmatpush2.msra.mxu0 %v3227
    %3277 = vmatprep.subr.mxu0 0.0
    %3278 = vmatpush2.msra.mxu0 %v3226
    %3279 = vmatprep.subr.mxu0 0.0
    %3280 = vmatpush2.msra.mxu0 %v3225
    %3281 = vmatprep.subr.mxu0 0.0
    %3282 = vmatpush2.msra.mxu0 %v3224
    %3283 = vmatprep.subr.mxu0 0.0
    %3284 = vmatpush2.msra.mxu0 %v3223
    %3285 = vmatprep.subr.mxu0 0.0
    %3286 = vmatpush2.msra.mxu0 %v3222
    %3287 = vmatprep.subr.mxu0 0.0
    %3288 = vmatpush2.msra.mxu0 %v3221
    %3289 = vmatprep.subr.mxu0 0.0
    %3290 = vmatpush2.msra.mxu0 %v3220
    %3291 = vmatprep.subr.mxu0 0.0
    %3292 = vmatpush2.msra.mxu0 %v3219
    %3293 = vmatprep.subr.mxu0 0.0
    %3294 = vmatpush2.msra.mxu0 %v3218
    %3295 = vmatprep.subr.mxu0 0.0
    %3296 = vmatpush2.msra.mxu0 %v3217
    %3297 = vmatprep.mubr.f32.mxu0 %v3090
    %3298 = vmatmul.mubr.f32.gmra.mxu0 %v3089
    %v3299 = vpop.f32.mrf.mxu0
    %v3300 = vadd.f32 0.0, %v3299
    %v3301 = vpop.f32.mrf.mxu0
    %3302 = vmatprep.mubr.f32.mxu0 %v3092
    %3303 = vmatmul.mubr.f32.gmra.mxu0 %v3091
    %v3304 = vpop.f32.mrf.mxu0
    %v3305 = vadd.f32 0.0, %v3304
    %v3306 = vpop.f32.mrf.mxu0
    %3307 = vdwg.mxu0
    %s3308 = scalar_lea.vmem %s4, 512
    %v3309 = vld [vmem:[%s3308] sm:$0xff]
    %v3310 = vld [vmem:[%s3308 + $0x8] sm:$0xff]
    %v3311 = vld [vmem:[%s3308 + $0x10] sm:$0xff]
    %v3312 = vld [vmem:[%s3308 + $0x18] sm:$0xff]
    %v3313 = vld [vmem:[%s3308 + $0x20] sm:$0xff]
    %v3314 = vld [vmem:[%s3308 + $0x28] sm:$0xff]
    %v3315 = vld [vmem:[%s3308 + $0x30] sm:$0xff]
    %v3316 = vld [vmem:[%s3308 + $0x38] sm:$0xff]
    %v3317 = vld [vmem:[%s3308 + $0x40] sm:$0xff]
    %v3318 = vld [vmem:[%s3308 + $0x48] sm:$0xff]
    %v3319 = vld [vmem:[%s3308 + $0x50] sm:$0xff]
    %v3320 = vld [vmem:[%s3308 + $0x58] sm:$0xff]
    %v3321 = vld [vmem:[%s3308 + $0x60] sm:$0xff]
    %v3322 = vld [vmem:[%s3308 + $0x68] sm:$0xff]
    %v3323 = vld [vmem:[%s3308 + $0x70] sm:$0xff]
    %v3324 = vld [vmem:[%s3308 + $0x78] sm:$0xff]
    %v3325 = vld [vmem:[%s3308 + $0x80] sm:$0xff]
    %v3326 = vld [vmem:[%s3308 + $0x88] sm:$0xff]
    %v3327 = vld [vmem:[%s3308 + $0x90] sm:$0xff]
    %v3328 = vld [vmem:[%s3308 + $0x98] sm:$0xff]
    %v3329 = vld [vmem:[%s3308 + $0xa0] sm:$0xff]
    %v3330 = vld [vmem:[%s3308 + $0xa8] sm:$0xff]
    %v3331 = vld [vmem:[%s3308 + $0xb0] sm:$0xff]
    %v3332 = vld [vmem:[%s3308 + $0xb8] sm:$0xff]
    %v3333 = vld [vmem:[%s3308 + $0xc0] sm:$0xff]
    %v3334 = vld [vmem:[%s3308 + $0xc8] sm:$0xff]
    %v3335 = vld [vmem:[%s3308 + $0xd0] sm:$0xff]
    %v3336 = vld [vmem:[%s3308 + $0xd8] sm:$0xff]
    %v3337 = vld [vmem:[%s3308 + $0xe0] sm:$0xff]
    %v3338 = vld [vmem:[%s3308 + $0xe8] sm:$0xff]
    %v3339 = vld [vmem:[%s3308 + $0xf0] sm:$0xff]
    %v3340 = vld [vmem:[%s3308 + $0xf8] sm:$0xff]
    %3341 = vmatprep.subr.mxu0 0.0
    %3342 = vmatpush1.msra.mxu0 %v3324
    %3343 = vmatprep.subr.mxu0 0.0
    %3344 = vmatpush1.msra.mxu0 %v3323
    %3345 = vmatprep.subr.mxu0 0.0
    %3346 = vmatpush1.msra.mxu0 %v3322
    %3347 = vmatprep.subr.mxu0 0.0
    %3348 = vmatpush1.msra.mxu0 %v3321
    %3349 = vmatprep.subr.mxu0 0.0
    %3350 = vmatpush1.msra.mxu0 %v3320
    %3351 = vmatprep.subr.mxu0 0.0
    %3352 = vmatpush1.msra.mxu0 %v3319
    %3353 = vmatprep.subr.mxu0 0.0
    %3354 = vmatpush1.msra.mxu0 %v3318
    %3355 = vmatprep.subr.mxu0 0.0
    %3356 = vmatpush1.msra.mxu0 %v3317
    %3357 = vmatprep.subr.mxu0 0.0
    %3358 = vmatpush1.msra.mxu0 %v3316
    %3359 = vmatprep.subr.mxu0 0.0
    %3360 = vmatpush1.msra.mxu0 %v3315
    %3361 = vmatprep.subr.mxu0 0.0
    %3362 = vmatpush1.msra.mxu0 %v3314
    %3363 = vmatprep.subr.mxu0 0.0
    %3364 = vmatpush1.msra.mxu0 %v3313
    %3365 = vmatprep.subr.mxu0 0.0
    %3366 = vmatpush1.msra.mxu0 %v3312
    %3367 = vmatprep.subr.mxu0 0.0
    %3368 = vmatpush1.msra.mxu0 %v3311
    %3369 = vmatprep.subr.mxu0 0.0
    %3370 = vmatpush1.msra.mxu0 %v3310
    %3371 = vmatprep.subr.mxu0 0.0
    %3372 = vmatpush1.msra.mxu0 %v3309
    %3373 = vmatprep.subr.mxu0 0.0
    %3374 = vmatpush2.msra.mxu0 %v3340
    %3375 = vmatprep.subr.mxu0 0.0
    %3376 = vmatpush2.msra.mxu0 %v3339
    %3377 = vmatprep.subr.mxu0 0.0
    %3378 = vmatpush2.msra.mxu0 %v3338
    %3379 = vmatprep.subr.mxu0 0.0
    %3380 = vmatpush2.msra.mxu0 %v3337
    %3381 = vmatprep.subr.mxu0 0.0
    %3382 = vmatpush2.msra.mxu0 %v3336
    %3383 = vmatprep.subr.mxu0 0.0
    %3384 = vmatpush2.msra.mxu0 %v3335
    %3385 = vmatprep.subr.mxu0 0.0
    %3386 = vmatpush2.msra.mxu0 %v3334
    %3387 = vmatprep.subr.mxu0 0.0
    %3388 = vmatpush2.msra.mxu0 %v3333
    %3389 = vmatprep.subr.mxu0 0.0
    %3390 = vmatpush2.msra.mxu0 %v3332
    %3391 = vmatprep.subr.mxu0 0.0
    %3392 = vmatpush2.msra.mxu0 %v3331
    %3393 = vmatprep.subr.mxu0 0.0
    %3394 = vmatpush2.msra.mxu0 %v3330
    %3395 = vmatprep.subr.mxu0 0.0
    %3396 = vmatpush2.msra.mxu0 %v3329
    %3397 = vmatprep.subr.mxu0 0.0
    %3398 = vmatpush2.msra.mxu0 %v3328
    %3399 = vmatprep.subr.mxu0 0.0
    %3400 = vmatpush2.msra.mxu0 %v3327
    %3401 = vmatprep.subr.mxu0 0.0
    %3402 = vmatpush2.msra.mxu0 %v3326
    %3403 = vmatprep.subr.mxu0 0.0
    %3404 = vmatpush2.msra.mxu0 %v3325
    %3405 = vmatprep.mubr.f32.mxu0 %v3090
    %3406 = vmatmul.mubr.f32.gmra.mxu0 %v3089
    %v3407 = vpop.f32.mrf.mxu0
    %v3408 = vadd.f32 0.0, %v3407
    %v3409 = vpop.f32.mrf.mxu0
    %3410 = vmatprep.mubr.f32.mxu0 %v3092
    %3411 = vmatmul.mubr.f32.gmra.mxu0 %v3091
    %v3412 = vpop.f32.mrf.mxu0
    %v3413 = vadd.f32 0.0, %v3412
    %v3414 = vpop.f32.mrf.mxu0
    %3415 = vdwg.mxu0
    %s3416 = scalar_lea.vmem %s4, 768
    %v3417 = vld [vmem:[%s3416] sm:$0xff]
    %v3418 = vld [vmem:[%s3416 + $0x8] sm:$0xff]
    %v3419 = vld [vmem:[%s3416 + $0x10] sm:$0xff]
    %v3420 = vld [vmem:[%s3416 + $0x18] sm:$0xff]
    %v3421 = vld [vmem:[%s3416 + $0x20] sm:$0xff]
    %v3422 = vld [vmem:[%s3416 + $0x28] sm:$0xff]
    %v3423 = vld [vmem:[%s3416 + $0x30] sm:$0xff]
    %v3424 = vld [vmem:[%s3416 + $0x38] sm:$0xff]
    %v3425 = vld [vmem:[%s3416 + $0x40] sm:$0xff]
    %v3426 = vld [vmem:[%s3416 + $0x48] sm:$0xff]
    %v3427 = vld [vmem:[%s3416 + $0x50] sm:$0xff]
    %v3428 = vld [vmem:[%s3416 + $0x58] sm:$0xff]
    %v3429 = vld [vmem:[%s3416 + $0x60] sm:$0xff]
    %v3430 = vld [vmem:[%s3416 + $0x68] sm:$0xff]
    %v3431 = vld [vmem:[%s3416 + $0x70] sm:$0xff]
    %v3432 = vld [vmem:[%s3416 + $0x78] sm:$0xff]
    %v3433 = vld [vmem:[%s3416 + $0x80] sm:$0xff]
    %v3434 = vld [vmem:[%s3416 + $0x88] sm:$0xff]
    %v3435 = vld [vmem:[%s3416 + $0x90] sm:$0xff]
    %v3436 = vld [vmem:[%s3416 + $0x98] sm:$0xff]
    %v3437 = vld [vmem:[%s3416 + $0xa0] sm:$0xff]
    %v3438 = vld [vmem:[%s3416 + $0xa8] sm:$0xff]
    %v3439 = vld [vmem:[%s3416 + $0xb0] sm:$0xff]
    %v3440 = vld [vmem:[%s3416 + $0xb8] sm:$0xff]
    %v3441 = vld [vmem:[%s3416 + $0xc0] sm:$0xff]
    %v3442 = vld [vmem:[%s3416 + $0xc8] sm:$0xff]
    %v3443 = vld [vmem:[%s3416 + $0xd0] sm:$0xff]
    %v3444 = vld [vmem:[%s3416 + $0xd8] sm:$0xff]
    %v3445 = vld [vmem:[%s3416 + $0xe0] sm:$0xff]
    %v3446 = vld [vmem:[%s3416 + $0xe8] sm:$0xff]
    %v3447 = vld [vmem:[%s3416 + $0xf0] sm:$0xff]
    %v3448 = vld [vmem:[%s3416 + $0xf8] sm:$0xff]
    %3449 = vmatprep.subr.mxu0 0.0
    %3450 = vmatpush1.msra.mxu0 %v3432
    %3451 = vmatprep.subr.mxu0 0.0
    %3452 = vmatpush1.msra.mxu0 %v3431
    %3453 = vmatprep.subr.mxu0 0.0
    %3454 = vmatpush1.msra.mxu0 %v3430
    %3455 = vmatprep.subr.mxu0 0.0
    %3456 = vmatpush1.msra.mxu0 %v3429
    %3457 = vmatprep.subr.mxu0 0.0
    %3458 = vmatpush1.msra.mxu0 %v3428
    %3459 = vmatprep.subr.mxu0 0.0
    %3460 = vmatpush1.msra.mxu0 %v3427
    %3461 = vmatprep.subr.mxu0 0.0
    %3462 = vmatpush1.msra.mxu0 %v3426
    %3463 = vmatprep.subr.mxu0 0.0
    %3464 = vmatpush1.msra.mxu0 %v3425
    %3465 = vmatprep.subr.mxu0 0.0
    %3466 = vmatpush1.msra.mxu0 %v3424
    %3467 = vmatprep.subr.mxu0 0.0
    %3468 = vmatpush1.msra.mxu0 %v3423
    %3469 = vmatprep.subr.mxu0 0.0
    %3470 = vmatpush1.msra.mxu0 %v3422
    %3471 = vmatprep.subr.mxu0 0.0
    %3472 = vmatpush1.msra.mxu0 %v3421
    %3473 = vmatprep.subr.mxu0 0.0
    %3474 = vmatpush1.msra.mxu0 %v3420
    %3475 = vmatprep.subr.mxu0 0.0
    %3476 = vmatpush1.msra.mxu0 %v3419
    %3477 = vmatprep.subr.mxu0 0.0
    %3478 = vmatpush1.msra.mxu0 %v3418
    %3479 = vmatprep.subr.mxu0 0.0
    %3480 = vmatpush1.msra.mxu0 %v3417
    %3481 = vmatprep.subr.mxu0 0.0
    %3482 = vmatpush2.msra.mxu0 %v3448
    %3483 = vmatprep.subr.mxu0 0.0
    %3484 = vmatpush2.msra.mxu0 %v3447
    %3485 = vmatprep.subr.mxu0 0.0
    %3486 = vmatpush2.msra.mxu0 %v3446
    %3487 = vmatprep.subr.mxu0 0.0
    %3488 = vmatpush2.msra.mxu0 %v3445
    %3489 = vmatprep.subr.mxu0 0.0
    %3490 = vmatpush2.msra.mxu0 %v3444
    %3491 = vmatprep.subr.mxu0 0.0
    %3492 = vmatpush2.msra.mxu0 %v3443
    %3493 = vmatprep.subr.mxu0 0.0
    %3494 = vmatpush2.msra.mxu0 %v3442
    %3495 = vmatprep.subr.mxu0 0.0
    %3496 = vmatpush2.msra.mxu0 %v3441
    %3497 = vmatprep.subr.mxu0 0.0
    %3498 = vmatpush2.msra.mxu0 %v3440
    %3499 = vmatprep.subr.mxu0 0.0
    %3500 = vmatpush2.msra.mxu0 %v3439
    %3501 = vmatprep.subr.mxu0 0.0
    %3502 = vmatpush2.msra.mxu0 %v3438
    %3503 = vmatprep.subr.mxu0 0.0
    %3504 = vmatpush2.msra.mxu0 %v3437
    %3505 = vmatprep.subr.mxu0 0.0
    %3506 = vmatpush2.msra.mxu0 %v3436
    %3507 = vmatprep.subr.mxu0 0.0
    %3508 = vmatpush2.msra.mxu0 %v3435
    %3509 = vmatprep.subr.mxu0 0.0
    %3510 = vmatpush2.msra.mxu0 %v3434
    %3511 = vmatprep.subr.mxu0 0.0
    %3512 = vmatpush2.msra.mxu0 %v3433
    %3513 = vmatprep.mubr.f32.mxu0 %v3090
    %3514 = vmatmul.mubr.f32.gmra.mxu0 %v3089
    %v3515 = vpop.f32.mrf.mxu0
    %v3516 = vadd.f32 0.0, %v3515
    %v3517 = vpop.f32.mrf.mxu0
    %3518 = vmatprep.mubr.f32.mxu0 %v3092
    %3519 = vmatmul.mubr.f32.gmra.mxu0 %v3091
    %v3520 = vpop.f32.mrf.mxu0
    %v3521 = vadd.f32 0.0, %v3520
    %v3522 = vpop.f32.mrf.mxu0
    %3523 = vdwg.mxu0
    %v3524 = vmax.f32 %v3192, %v3300
    %v3525 = vmax.f32 %v3197, %v3305
    %v3526 = vmax.f32 %v3408, %v3516
    %v3527 = vmax.f32 %v3413, %v3521
    %v3528 = vmax.f32 %v3524, %v3526
    %v3529 = vmax.f32 %v3525, %v3527
    %v3530 = vld [vmem:[%s5] sm:$0xff]
    %v3531 = vld [vmem:[%s5 + $0x8] sm:$0xff]
    %v3532 = vld [vmem:[%s5 + $0x10] sm:$0xff]
    %v3533 = vld [vmem:[%s5 + $0x18] sm:$0xff]
    %v3534 = vld [vmem:[%s5 + $0x20] sm:$0xff]
    %v3535 = vld [vmem:[%s5 + $0x28] sm:$0xff]
    %v3536 = vld [vmem:[%s5 + $0x30] sm:$0xff]
    %v3537 = vld [vmem:[%s5 + $0x38] sm:$0xff]
    %v3538 = vld [vmem:[%s5 + $0x40] sm:$0xff]
    %v3539 = vld [vmem:[%s5 + $0x48] sm:$0xff]
    %v3540 = vld [vmem:[%s5 + $0x50] sm:$0xff]
    %v3541 = vld [vmem:[%s5 + $0x58] sm:$0xff]
    %v3542 = vld [vmem:[%s5 + $0x60] sm:$0xff]
    %v3543 = vld [vmem:[%s5 + $0x68] sm:$0xff]
    %v3544 = vld [vmem:[%s5 + $0x70] sm:$0xff]
    %v3545 = vld [vmem:[%s5 + $0x78] sm:$0xff]
    %v3546 = vld [vmem:[%s6] sm:$0x1]
    %v3548 = vlaneseq
    %v3549 = vshrl.u32 %v3548, 7
    %v3550 = vsub.s32 0, %v3549
    %v3551 = vrot.slane %v3546, %v3550
    %3553 = vmatprep.subr.mxu0 0.0
    %3554 = vmatpush1.msra.mxu0 %v3545
    %3555 = vmatprep.subr.mxu0 0.0
    %3556 = vmatpush1.msra.mxu0 %v3544
    %3557 = vmatprep.subr.mxu0 0.0
    %3558 = vmatpush1.msra.mxu0 %v3543
    %3559 = vmatprep.subr.mxu0 0.0
    %3560 = vmatpush1.msra.mxu0 %v3542
    %3561 = vmatprep.subr.mxu0 0.0
    %3562 = vmatpush1.msra.mxu0 %v3541
    %3563 = vmatprep.subr.mxu0 0.0
    %3564 = vmatpush1.msra.mxu0 %v3540
    %3565 = vmatprep.subr.mxu0 0.0
    %3566 = vmatpush1.msra.mxu0 %v3539
    %3567 = vmatprep.subr.mxu0 0.0
    %3568 = vmatpush1.msra.mxu0 %v3538
    %3569 = vmatprep.subr.mxu0 0.0
    %3570 = vmatpush1.msra.mxu0 %v3537
    %3571 = vmatprep.subr.mxu0 0.0
    %3572 = vmatpush1.msra.mxu0 %v3536
    %3573 = vmatprep.subr.mxu0 0.0
    %3574 = vmatpush1.msra.mxu0 %v3535
    %3575 = vmatprep.subr.mxu0 0.0
    %3576 = vmatpush1.msra.mxu0 %v3534
    %3577 = vmatprep.subr.mxu0 0.0
    %3578 = vmatpush1.msra.mxu0 %v3533
    %3579 = vmatprep.subr.mxu0 0.0
    %3580 = vmatpush1.msra.mxu0 %v3532
    %3581 = vmatprep.subr.mxu0 0.0
    %3582 = vmatpush1.msra.mxu0 %v3531
    %3583 = vmatprep.subr.mxu0 0.0
    %3584 = vmatpush1.msra.mxu0 %v3530
    %3585 = vmatprep.subr.mxu0 0.0
    %3586 = vmatpush2.msra.mxu0 0.0
    %3587 = vmatprep.subr.mxu0 0.0
    %3588 = vmatpush2.msra.mxu0 0.0
    %3589 = vmatprep.subr.mxu0 0.0
    %3590 = vmatpush2.msra.mxu0 0.0
    %3591 = vmatprep.subr.mxu0 0.0
    %3592 = vmatpush2.msra.mxu0 0.0
    %3593 = vmatprep.subr.mxu0 0.0
    %3594 = vmatpush2.msra.mxu0 0.0
    %3595 = vmatprep.subr.mxu0 0.0
    %3596 = vmatpush2.msra.mxu0 0.0
    %3597 = vmatprep.subr.mxu0 0.0
    %3598 = vmatpush2.msra.mxu0 0.0
    %3599 = vmatprep.subr.mxu0 0.0
    %3600 = vmatpush2.msra.mxu0 0.0
    %3601 = vmatprep.subr.mxu0 0.0
    %3602 = vmatpush2.msra.mxu0 0.0
    %3603 = vmatprep.subr.mxu0 0.0
    %3604 = vmatpush2.msra.mxu0 0.0
    %3605 = vmatprep.subr.mxu0 0.0
    %3606 = vmatpush2.msra.mxu0 0.0
    %3607 = vmatprep.subr.mxu0 0.0
    %3608 = vmatpush2.msra.mxu0 0.0
    %3609 = vmatprep.subr.mxu0 0.0
    %3610 = vmatpush2.msra.mxu0 0.0
    %3611 = vmatprep.subr.mxu0 0.0
    %3612 = vmatpush2.msra.mxu0 0.0
    %3613 = vmatprep.subr.mxu0 0.0
    %3614 = vmatpush2.msra.mxu0 0.0
    %3615 = vmatprep.subr.mxu0 0.0
    %3616 = vmatpush2.msra.mxu0 0.0
    %3617 = vmatprep.mubr.f32.mxu0 0.0
    %3618 = vmatmul.mubr.f32.gmra.mxu0 %v3528
    %v3619 = vpop.f32.mrf.mxu0
    %v3620 = vadd.f32 %v3551, %v3619
    %v3621 = vpop.f32.mrf.mxu0
    %3622 = vmatprep.mubr.f32.mxu0 0.0
    %3623 = vmatmul.mubr.f32.gmra.mxu0 %v3529
    %v3624 = vpop.f32.mrf.mxu0
    %v3625 = vadd.f32 %v3551, %v3624
    %v3626 = vpop.f32.mrf.mxu0
    %3627 = vdwg.mxu0
    %3628 = vst [vmem:[%s8] sm:$0xff] %v3620
    %3629 = vst [vmem:[%s8 + $0x8] sm:$0xff] %v3625
    // Predicated region
    $region38: #{net_forward.1} parent=1 // pred_check
      _
    $region39: #{net_forward.1} parent=1 // pred_check_branch
      %3631 = sbr.rel (0) target = $region41
    $region40: #{net_forward.1} parent=1 // pred_region
      _
    $region41: #{net_forward.1} parent=1 // pred_fallthru
      _
    // Predicated region
    $region42: #{net_forward.1} parent=1 // pred_check
      _
    $region43: #{net_forward.1} parent=1 // pred_check_branch
      %3633 = sbr.rel (0) target = $region45
    $region44: #{net_forward.1} parent=1 // pred_region
      _
    $region45: #{net_forward.1} parent=1 // pred_fallthru
      _
    %3634 = vsyncpa [#allocation3], 1

</llo_original>
